<compile_context>
chip_gen: v6e
topology: v6e:2x2x1
jax: 0.10.0
libtpu: 0.0.40
codegen_flags: <defaults>
</compile_context>

<pallas_src>
from functools import partial

import jax
import jax.numpy as jnp
from jax.experimental import pallas as pl
from jax.experimental.pallas import tpu as pltpu


# --------------------------------------------------------------------------- #
# Helpers
# --------------------------------------------------------------------------- #
def _pick_tile(size, candidates):
    for c in candidates:
        if c <= size and size % c == 0:
            return c
    return size


def _pick_groups_per_block(segment_size, seg_len, c, num_heads,
                           max_block_bytes=2 * 1024 * 1024, max_unroll=32):
    """Largest divisor of segment_size whose (bf16 qkv in + f32 out) block stays
    small: amortizes ~0.35us/step pipeline overhead without pressuring VMEM."""
    for g in range(segment_size, 0, -1):
        if segment_size % g:
            continue
        block_bytes = seg_len * g * 3 * c * 2 + g * seg_len * c * 4
        if block_bytes <= max_block_bytes and g * num_heads <= max_unroll:
            return g
    return 1


# --------------------------------------------------------------------------- #
# Linear: x @ w + b, tiled over (M, N); f32 MXU accumulation, any output dtype
# --------------------------------------------------------------------------- #
def _linear_kernel(x_ref, w_ref, b_ref, o_ref):
    acc = jnp.dot(x_ref[...], w_ref[...], preferred_element_type=jnp.float32)
    o_ref[...] = (acc + b_ref[...]).astype(o_ref.dtype)


def linear(x2d, w, b, *, out_dtype=jnp.float32):
    M, K = x2d.shape
    Kw, N = w.shape
    assert K == Kw
    tm = _pick_tile(M, (512, 256, 128, 64, 32, 16, 8))
    tn = _pick_tile(N, (1024, 768, 512, 384, 256, 128))
    out_itemsize = jnp.dtype(out_dtype).itemsize
    return pl.pallas_call(
        _linear_kernel,
        out_shape=jax.ShapeDtypeStruct((M, N), out_dtype),
        grid_spec=pltpu.PrefetchScalarGridSpec(
            num_scalar_prefetch=0,
            grid=(M // tm, N // tn),
            in_specs=[
                pl.BlockSpec((tm, K), lambda i, j: (i, 0)),
                pl.BlockSpec((K, tn), lambda i, j: (0, j)),
                pl.BlockSpec((1, tn), lambda i, j: (0, j)),
            ],
            out_specs=pl.BlockSpec((tm, tn), lambda i, j: (i, j)),
        ),
        compiler_params=pltpu.CompilerParams(
            dimension_semantics=("parallel", "parallel")),
        cost_estimate=pl.CostEstimate(
            flops=2 * M * K * N,
            transcendentals=0,
            bytes_accessed=M * K * 4 + K * N * 4 + N * 4 + M * N * out_itemsize),
    )(x2d, w, b.reshape(1, N))


# --------------------------------------------------------------------------- #
# Segment attention kernel
#   qkv_ref: (seg_len, groups * 3 * C) bf16   -- per-group column layout (3, nh, hd)
#   o_ref  : (groups, seg_len, C)      f32    -- lane-dense output (C >= 128)
# --------------------------------------------------------------------------- #
def _attn_kernel(qkv_ref, o_ref, *, num_heads, head_dim, groups, scale):
    C = num_heads * head_dim
    for g in range(groups):                       # static unroll over segments in block
        base = g * 3 * C
        for h in range(num_heads):                # static unroll over heads
            q = qkv_ref[:, base + h * head_dim: base + (h + 1) * head_dim]
            k = qkv_ref[:, base + C + h * head_dim: base + C + (h + 1) * head_dim]
            v = qkv_ref[:, base + 2 * C + h * head_dim: base + 2 * C + (h + 1) * head_dim]
            q = q * scale                         # fold softmax scale into q (stays bf16)
            # bf16 MXU matmul, f32 accumulation
            s = jnp.einsum("qd,kd->qk", q, k, preferred_element_type=jnp.float32)
            m = jnp.max(s, axis=-1, keepdims=True)
            p = jnp.exp(s - m)
            denom = jnp.sum(p, axis=-1, keepdims=True)
            o = jnp.dot(p.astype(jnp.bfloat16), v, preferred_element_type=jnp.float32)
            o = o * pl.reciprocal(denom, approx=True)      # EUP reciprocal, not VALU divide
            o_ref[g, :, h * head_dim:(h + 1) * head_dim] = o.astype(o_ref.dtype)


def segment_attention(qkv_view, *, num_heads, head_dim, segment_size, seg_len,
                      groups_per_block):
    # qkv_view: (B, seg_len, segment_size * 3 * C) bf16, zero-copy view of the qkv linear.
    B = qkv_view.shape[0]
    C = num_heads * head_dim
    n_j = segment_size // groups_per_block
    L = seg_len
    flops = 4 * B * segment_size * num_heads * L * L * head_dim   # QK^T + PV
    return pl.pallas_call(
        partial(_attn_kernel, num_heads=num_heads, head_dim=head_dim,
                groups=groups_per_block, scale=head_dim ** -0.5),
        out_shape=jax.ShapeDtypeStruct((B, segment_size, L, C), jnp.float32),
        grid_spec=pltpu.PrefetchScalarGridSpec(
            num_scalar_prefetch=0,
            grid=(B, n_j),
            in_specs=[pl.BlockSpec((pl.Squeezed(), L, groups_per_block * 3 * C),
                                   lambda b, j: (b, 0, j))],
            out_specs=pl.BlockSpec((pl.Squeezed(), groups_per_block, L, C),
                                   lambda b, j: (b, j, 0, 0)),
        ),
        compiler_params=pltpu.CompilerParams(
            dimension_semantics=("parallel", "parallel"),
            vmem_limit_bytes=32 * 1024 * 1024),
        cost_estimate=pl.CostEstimate(
            flops=flops,
            transcendentals=B * segment_size * num_heads * L * L,
            bytes_accessed=B * segment_size * L * 3 * C * 2 + B * segment_size * L * C * 4),
    )(qkv_view)


# --------------------------------------------------------------------------- #
# Full forward
# --------------------------------------------------------------------------- #
def attention_forward(x, params, *, num_heads, segment_size, groups_per_block=None):
    B, D, H, W, C = x.shape
    seqlen = D * H * W
    assert C % num_heads == 0
    head_dim = C // num_heads
    assert seqlen % segment_size == 0
    seg_len = seqlen // segment_size
    # TODO(synk): pad C / seg_len at the wrapper for configs that are not lane/sublane aligned.
    assert C % 128 == 0, "lane-dense path requires C to be a multiple of 128"

    # qkv projection, emitted directly as bf16 (mirrors flash-attn's .half(), saves a cast pass).
    qkv = linear(x.reshape(B * seqlen, C), params["w_qkv"], params["b_qkv"],
                 out_dtype=jnp.bfloat16)                       # (B*S, 3C) bf16

    # Zero-copy view exposing the strided segment split:
    #   element (b, l, i*3C + c) == qkv[b*seqlen + l*segment_size + i, c]
    # so lane-block i of width 3C is exactly segments[:, i::segment_size].
    qkv_view = qkv.reshape(B, seg_len, segment_size * 3 * C)

    gb = groups_per_block or _pick_groups_per_block(segment_size, seg_len, C, num_heads)
    assert segment_size % gb == 0

    # (B, segment_size, seg_len, C) f32, already in torch.cat(dim=1) segment-major order.
    o = segment_attention(qkv_view, num_heads=num_heads, head_dim=head_dim,
                          segment_size=segment_size, seg_len=seg_len,
                          groups_per_block=gb)

    out = linear(o.reshape(B * seqlen, C), params["w_proj"], params["b_proj"],
                 out_dtype=jnp.float32)
    return out.reshape(B, D, H, W, C)


# --------------------------------------------------------------------------- #
# Pure-JAX reference (mirrors the PyTorch module: f32 linears, half-precision attention)
# --------------------------------------------------------------------------- #
def reference_forward(x, params, *, num_heads, segment_size):
    B, D, H, W, C = x.shape
    seqlen = D * H * W
    hd = C // num_heads
    scale = hd ** -0.5
    qkv = x.reshape(B * seqlen, C) @ params["w_qkv"] + params["b_qkv"]
    qkv = qkv.reshape(B, seqlen, 3, num_heads, hd)
    outs = []
    for i in range(segment_size):
        seg = qkv[:, i::segment_size].astype(jnp.bfloat16).astype(jnp.float32)
        q, k, v = seg[:, :, 0], seg[:, :, 1], seg[:, :, 2]      # (B, L, nh, hd)
        s = jnp.einsum("blhd,bmhd->bhlm", q, k) * scale
        p = jax.nn.softmax(s, axis=-1)
        o = jnp.einsum("bhlm,bmhd->blhd", p, v)
        outs.append(o)
    o = jnp.concatenate(outs, axis=1).reshape(B * seqlen, C)    # segment-major cat
    out = o @ params["w_proj"] + params["b_proj"]
    return out.reshape(B, D, H, W, C)


if __name__ == "__main__":
    # Small but TPU-friendly shapes: seqlen = 512, seg_len = 64, C = 256, head_dim = 128.
    B, D, H, W = 2, 8, 8, 8
    dim, num_heads, segment_size = 256, 2, 8

    key = jax.random.PRNGKey(0)
    k1, k2, k3, k4, k5 = jax.random.split(key, 5)
    x = jax.random.normal(k1, (B, D, H, W, dim), dtype=jnp.float32)
    params = {
        "w_qkv": 0.05 * jax.random.normal(k2, (dim, 3 * dim), dtype=jnp.float32),
        "b_qkv": 0.01 * jax.random.normal(k3, (3 * dim,), dtype=jnp.float32),
        "w_proj": 0.05 * jax.random.normal(k4, (dim, dim), dtype=jnp.float32),
        "b_proj": 0.01 * jax.random.normal(k5, (dim,), dtype=jnp.float32),
    }

    out = attention_forward(x, params, num_heads=num_heads, segment_size=segment_size)
    out = jax.block_until_ready(out)

    ref = reference_forward(x, params, num_heads=num_heads, segment_size=segment_size)
    assert out.shape == (B, D, H, W, dim), out.shape
    max_err = float(jnp.max(jnp.abs(out - ref)))
    assert jnp.allclose(out, ref, atol=2e-2, rtol=2e-2), max_err
    print("KERNEL_OK")
</pallas_src>

<mosaic_0001>
module attributes {stable_mosaic.version = 11 : i64} {
  func.func @_linear_kernel(%arg0: i32, %arg1: i32, %arg2: memref<512x256xf32, #tpu.memory_space<vmem>>, %arg3: memref<256x768xf32, #tpu.memory_space<vmem>>, %arg4: memref<1x768xf32, #tpu.memory_space<vmem>>, %arg5: memref<512x768xbf16, #tpu.memory_space<vmem>>) attributes {dimension_semantics = [#tpu.dimension_semantics<parallel>, #tpu.dimension_semantics<parallel>], iteration_bounds = array<i64: 2, 1>, scalar_prefetch = 0 : i64, scratch_operands = 0 : i64, tpu.core_type = #tpu.core_type<tc>, window_params = [{transform_indices = @transform_0, window_bounds = array<i64: 512, 256>}, {transform_indices = @transform_1, window_bounds = array<i64: 256, 768>}, {transform_indices = @transform_2, window_bounds = array<i64: 1, 768>}, {transform_indices = @transform_3, window_bounds = array<i64: 512, 768>}]} {
    %c0 = arith.constant 0 : index
    %c0_0 = arith.constant 0 : index
    %0 = vector.load %arg2[%c0, %c0_0] : memref<512x256xf32, #tpu.memory_space<vmem>>, vector<512x256xf32>
    %c0_1 = arith.constant 0 : index
    %c0_2 = arith.constant 0 : index
    %1 = vector.load %arg3[%c0_1, %c0_2] : memref<256x768xf32, #tpu.memory_space<vmem>>, vector<256x768xf32>
    %cst = arith.constant dense<0.000000e+00> : vector<512x768xf32>
    %2 = tpu.matmul %0, %1, %cst {dimension_numbers = #tpu.dot_dimension_numbers<[1], [0], [0], [1], [0, 0, 1, 1], [], []>} : vector<512x256xf32>, vector<256x768xf32>, vector<512x768xf32> -> vector<512x768xf32>
    %c0_3 = arith.constant 0 : index
    %c0_4 = arith.constant 0 : index
    %3 = vector.load %arg4[%c0_3, %c0_4] : memref<1x768xf32, #tpu.memory_space<vmem>>, vector<1x768xf32>
    %4 = vector.broadcast %3 : vector<1x768xf32> to vector<512x768xf32>
    %5 = arith.addf %2, %4 : vector<512x768xf32>
    %6 = arith.truncf %5 : vector<512x768xf32> to vector<512x768xbf16>
    %c0_5 = arith.constant 0 : index
    %c0_6 = arith.constant 0 : index
    %7 = vector.load %arg5[%c0_5, %c0_6] : memref<512x768xbf16, #tpu.memory_space<vmem>>, vector<512x768xbf16>
    tpu.vector_store %arg5[%c0_5, %c0_6], %6 {strides = array<i32>} : memref<512x768xbf16, #tpu.memory_space<vmem>>, vector<512x768xbf16>,
    return
  }
  func.func @transform_0(%arg0: i32, %arg1: i32) -> (i32, i32) {
    %c0_i32 = arith.constant 0 : i32
    %c0_i32_0 = arith.constant 0 : i32
    return %arg0, %c0_i32 : i32, i32
  }
  func.func @transform_1(%arg0: i32, %arg1: i32) -> (i32, i32) {
    %c0_i32 = arith.constant 0 : i32
    %c0_i32_0 = arith.constant 0 : i32
    return %c0_i32, %arg1 : i32, i32
  }
  func.func @transform_2(%arg0: i32, %arg1: i32) -> (i32, i32) {
    %c0_i32 = arith.constant 0 : i32
    %c0_i32_0 = arith.constant 0 : i32
    return %c0_i32, %arg1 : i32, i32
  }
  func.func @transform_3(%arg0: i32, %arg1: i32) -> (i32, i32) {
    %c0_i32 = arith.constant 0 : i32
    return %arg0, %arg1 : i32, i32
  }
}

</mosaic_0001>

<llo_original>
// kernel: tpu_custom_call.1
$region0: #{tpu_custom_call.1}
  #allocation0 [shape = 'u32[]', space=smem, size = 0x4, offset = 0x4, fixed_abs, tag = 'smem constant byte address 0x4 - core index']
  #allocation1 [shape = 'u32[144,128]{1,0:T(1,128)}', space=vmem, size = 0x12000, scoped, tag = 'internal scratch']
  %s0 = inlined_call_operand.hbm [shape: f32[1024,256], index: 0, kind: input, shape index: {}]
  %s1 = inlined_call_operand.hbm [shape: f32[256,768], index: 1, kind: input, shape index: {}]
  %s2 = inlined_call_operand.hbm [shape: f32[1,768], index: 2, kind: input, shape index: {}]
  %s3 = inlined_call_operand.hbm [shape: bf16[1024,768], index: 3, kind: output, shape index: {}]
  %s4 = sld [smem:[#allocation0]]
  $region57: #{tpu_custom_call.1} parent=0
    _
  %s6 = ssub.s32 1, %s4
  %s7 = scalar_select 0, %s6, %s4
  $region1: #{tpu_custom_call.1} parent=0
    #allocation2 [shape = 'u8[1048576]{0}', space=vmem, size = 0x100000, scoped, tag = 'input window, operand 0']
    #allocation3 [shape = 's32[2]{0}', space=sflag, size = 0x8, scoped, tag = 'scoped memory for tpu_custom_call.1']
    #allocation4 [shape = 's32[2]{0}', space=sflag, size = 0x8, scoped, tag = 'scoped memory for tpu_custom_call.1']
    #allocation5 [shape = 'u8[786432]{0}', space=vmem, size = 0xc0000, scoped, tag = 'input window, operand 1, single buffered']
    #allocation6 [shape = 's32[1]{0}', space=sflag, size = 0x4, scoped, tag = 'scoped memory for tpu_custom_call.1']
    #allocation7 [shape = 'u8[3072]{0}', space=vmem, size = 0xc00, scoped, tag = 'input window, operand 2, single buffered']
    #allocation8 [shape = 'u8[1572864]{0}', space=vmem, size = 0x180000, scoped, tag = 'output window, operand 0']
    %8 = vsyncpa [#allocation3], 0
    %s9 = scalar_lea.sflag [#allocation3], 1
    %10 = vsyncpa %s9, 0
    %11 = vsyncpa [#allocation6], 0
    %12 = vsyncpa [#allocation4], 0
    %s13 = scalar_lea.sflag [#allocation4], 1
    %14 = vsyncpa %s13, 0
    loop: start=0, step=1, limit=4
    $region2: #{tpu_custom_call.1} parent=1 // loop_pre_header
      _
    $region3: #{tpu_custom_call.1} parent=1 // loop_header
      %s16 = sphi 0, %s20
      %p17 = scmp.ge.s32.totalorder %s16, 4
      %s23 = sphi 0, %s35
      %s24 = sphi 0, %s31
      %s25 = sphi 0, %s23
      %s26 = sphi 0, %s24
      %s27 = sphi 0, %s25
      %s28 = sphi 0, %s26
      %s38 = sphi 0, %s40
      %s41 = sphi 0, %s38
      %s42 = sphi 0, %s41
      %s58 = sphi 0, %s42
      %s64 = sphi 0, %s66
      %s67 = sphi 0, %s64
      %s68 = sphi 0, %s67
      %s84 = sphi 0, %s68
      %s90 = sphi 0, %s92
      %s93 = sphi 0, %s90
      %s94 = sphi 0, %s93
      %s110 = sphi 0, %s94
      %s118 = sphi 0, %s120
      %s121 = sphi 0, %s118
      %s122 = sphi 0, %s121
      %s138 = sphi 0, %s122
    $region4: #{tpu_custom_call.1} parent=1 // loop_header_branch
      %19 = sbr.rel (%p17) target = $region8
    $region5: #{tpu_custom_call.1} parent=1 // loop_body
      %s21 = ssub.s32 %s16, 1
      %s22 = ssub.s32 %s16, 2
      %s29 = sadd.s32 1, %s24
      %p30 = scmp.ge.s32.totalorder %s29, 1
      %s31 = scalar_select %p30, 0, %s29
      %s32 = sadd.s32 1, %s23
      %s33 = scalar_select %p30, %s32, %s23
      %p34 = scmp.ge.s32.totalorder %s33, 2
      %s35 = scalar_select %p34, 0, %s33
      %s36 = ssub.s32 %s23, %s35
      %p37 = scmp.eq.s32.totalorder %s36, 0
      %s39 = sadd.s32 %s38, 1
      %s40 = scalar_select %p37, %s38, %s39
      %p43 = pneg %p37
      %p44 = scmp.eq.s32.totalorder %s16, 1
      %p45 = por %p43, %p44
      %p46 = scmp.ne.s32.totalorder %s38, %s41
      %p47 = scmp.eq.s32.totalorder %s16, 0
      %p48 = por %p46, %p47
      %p49 = scmp.ne.s32.totalorder %s38, %s41
      %p50 = scmp.eq.s32.totalorder %s21, 1
      %p51 = por %p49, %p50
      %p52 = scmp.ne.s32.totalorder %s41, %s42
      %p53 = scmp.eq.s32.totalorder %s21, 0
      %p54 = por %p52, %p53
      %p55 = scmp.ne.s32.totalorder %s41, %s42
      %p56 = scmp.eq.s32.totalorder %s22, 1
      %p57 = por %p55, %p56
      %p59 = scmp.ne.s32.totalorder %s42, %s58
      %p60 = scmp.eq.s32.totalorder %s22, 0
      %p61 = por %p59, %p60
      %s62 = ssub.s32 %s24, %s31
      %p63 = scmp.eq.s32.totalorder %s62, 0
      %s65 = sadd.s32 %s64, 1
      %s66 = scalar_select %p63, %s64, %s65
      %p69 = pneg %p63
      %p70 = scmp.eq.s32.totalorder %s16, 1
      %p71 = por %p69, %p70
      %p72 = scmp.ne.s32.totalorder %s64, %s67
      %p73 = scmp.eq.s32.totalorder %s16, 0
      %p74 = por %p72, %p73
      %p75 = scmp.ne.s32.totalorder %s64, %s67
      %p76 = scmp.eq.s32.totalorder %s21, 1
      %p77 = por %p75, %p76
      %p78 = scmp.ne.s32.totalorder %s67, %s68
      %p79 = scmp.eq.s32.totalorder %s21, 0
      %p80 = por %p78, %p79
      %p81 = scmp.ne.s32.totalorder %s67, %s68
      %p82 = scmp.eq.s32.totalorder %s22, 1
      %p83 = por %p81, %p82
      %p85 = scmp.ne.s32.totalorder %s68, %s84
      %p86 = scmp.eq.s32.totalorder %s22, 0
      %p87 = por %p85, %p86
      %s88 = ssub.s32 %s24, %s31
      %p89 = scmp.eq.s32.totalorder %s88, 0
      %s91 = sadd.s32 %s90, 1
      %s92 = scalar_select %p89, %s90, %s91
      %p95 = pneg %p89
      %p96 = scmp.eq.s32.totalorder %s16, 1
      %p97 = por %p95, %p96
      %p98 = scmp.ne.s32.totalorder %s90, %s93
      %p99 = scmp.eq.s32.totalorder %s16, 0
      %p100 = por %p98, %p99
      %p101 = scmp.ne.s32.totalorder %s90, %s93
      %p102 = scmp.eq.s32.totalorder %s21, 1
      %p103 = por %p101, %p102
      %p104 = scmp.ne.s32.totalorder %s93, %s94
      %p105 = scmp.eq.s32.totalorder %s21, 0
      %p106 = por %p104, %p105
      %p107 = scmp.ne.s32.totalorder %s93, %s94
      %p108 = scmp.eq.s32.totalorder %s22, 1
      %p109 = por %p107, %p108
      %p111 = scmp.ne.s32.totalorder %s94, %s110
      %p112 = scmp.eq.s32.totalorder %s22, 0
      %p113 = por %p111, %p112
      %s114 = ssub.s32 %s23, %s35
      %s115 = ssub.s32 %s24, %s31
      %s116 = sor.u32 %s114, %s115
      %p117 = scmp.eq.s32.totalorder %s116, 0
      %s119 = sadd.s32 %s118, 1
      %s120 = scalar_select %p117, %s118, %s119
      %p123 = pneg %p117
      %p124 = scmp.eq.s32.totalorder %s16, 1
      %p125 = por %p123, %p124
      %p126 = scmp.ne.s32.totalorder %s118, %s121
      %p127 = scmp.eq.s32.totalorder %s16, 0
      %p128 = por %p126, %p127
      %p129 = scmp.ne.s32.totalorder %s118, %s121
      %p130 = scmp.eq.s32.totalorder %s21, 1
      %p131 = por %p129, %p130
      %p132 = scmp.ne.s32.totalorder %s121, %s122
      %p133 = scmp.eq.s32.totalorder %s21, 0
      %p134 = por %p132, %p133
      %p135 = scmp.ne.s32.totalorder %s121, %s122
      %p136 = scmp.eq.s32.totalorder %s22, 1
      %p137 = por %p135, %p136
      %p139 = scmp.ne.s32.totalorder %s122, %s138
      %p140 = scmp.eq.s32.totalorder %s22, 0
      %p141 = por %p139, %p140
      %p142 = scmp.le.s32.totalorder 1, %s16
      %p143 = scmp.lt.s32.totalorder %s16, 3
      %p144 = pnand %p142, %p143
      %p145 = pneg %p144
      // Predicated region
      $region9: #{tpu_custom_call.1} parent=5 // pred_check
        _
      $region10: #{tpu_custom_call.1} parent=5 // pred_check_branch
        %147 = sbr.rel (%p144) target = $region12
      $region11: #{tpu_custom_call.1} parent=5 // pred_region
        %s148 = ssub.s32 %s16, 1
        // Predicated region
        $region13: #{tpu_custom_call.1} parent=11 // pred_check
          %p149 = pneg %p80
        $region14: #{tpu_custom_call.1} parent=11 // pred_check_branch
          %151 = sbr.rel (%p149) target = $region16
        $region15: #{tpu_custom_call.1} parent=11 // pred_region
          %s152 = smul.u32 6, %s26
          %s154 = ssub.s32 24576, 24576
          %155 = vsyncadd [#allocation6], %s154
          %s156 = smul.addr %s152, 128
          %s157 = scalar_lea.hbm %s1, %s156
          %s158 = sshll.u32 [#allocation5], 4
          %s159 = int_to_ptr.vmem [resolvable:$true] %s158
          %164 = dma.hbm_to_vmem [thread:$0]  %s157, 24576, %s159, [#allocation6], 768, 768, 48
        $region16: #{tpu_custom_call.1} parent=11 // pred_fallthru
          _
        // Predicated region
        $region17: #{tpu_custom_call.1} parent=11 // pred_check
          %p165 = pneg %p106
        $region18: #{tpu_custom_call.1} parent=11 // pred_check_branch
          %167 = sbr.rel (%p165) target = $region20
        $region19: #{tpu_custom_call.1} parent=11 // pred_region
          %s168 = smul.u32 6, %s26
          %s170 = ssub.s32 96, 96
          %171 = vsyncadd [#allocation6], %s170
          %s172 = smul.addr %s168, 16
          %s173 = scalar_lea.hbm %s2, %s172
          %s175 = sshll.u32 [#allocation7], 4
          %s176 = int_to_ptr.vmem [resolvable:$true] %s175
          %178 = dma.hbm_to_vmem [thread:$0]  %s173, 96, %s176, [#allocation6]
        $region20: #{tpu_custom_call.1} parent=11 // pred_fallthru
          _
      $region12: #{tpu_custom_call.1} parent=5 // pred_fallthru
        _
      %p179 = scmp.lt.s32.totalorder %s16, 2
      // Predicated region
      $region21: #{tpu_custom_call.1} parent=5 // pred_check
        %p180 = pneg %p179
      $region22: #{tpu_custom_call.1} parent=5 // pred_check_branch
        %182 = sbr.rel (%p180) target = $region24
      $region23: #{tpu_custom_call.1} parent=5 // pred_region
        // Predicated region
        $region25: #{tpu_custom_call.1} parent=23 // pred_check
          %p183 = pneg %p48
        $region26: #{tpu_custom_call.1} parent=23 // pred_check_branch
          %185 = sbr.rel (%p183) target = $region28
        $region27: #{tpu_custom_call.1} parent=23 // pred_region
          %s186 = sand.u32 %s38, 1
          %s187 = scalar_lea.sflag [#allocation3], %s186
          %s188 = sand.u32 %s38, 1
          %s189 = smul.addr %s188, 1024
          %s190 = scalar_lea.vmem [#allocation2], %s189
          %s191 = smul.u32 64, %s23
          %s193 = ssub.s32 16384, 16384
          %194 = vsyncadd %s187, %s193
          %s195 = smul.addr %s191, 2
          %s196 = smul.addr %s195, 128
          %s197 = scalar_lea.hbm %s0, %s196
          %s198 = sshll.u32 %s190, 4
          %s199 = int_to_ptr.vmem [resolvable:$true] %s198
          %204 = dma.hbm_to_vmem [thread:$0]  %s197, 16384, %s199, %s187, 256, 256, 16
        $region28: #{tpu_custom_call.1} parent=23 // pred_fallthru
          _
      $region24: #{tpu_custom_call.1} parent=5 // pred_fallthru
        _
      %p205 = scmp.le.s32.totalorder 1, %s16
      %p206 = scmp.lt.s32.totalorder %s16, 3
      %p207 = pnand %p205, %p206
      %p208 = pneg %p207
      // Predicated region
      $region29: #{tpu_custom_call.1} parent=5 // pred_check
        _
      $region30: #{tpu_custom_call.1} parent=5 // pred_check_branch
        %210 = sbr.rel (%p207) target = $region32
      $region31: #{tpu_custom_call.1} parent=5 // pred_region
        %s211 = ssub.s32 %s16, 1
        %s212 = sand.u32 %s41, 1
        %s213 = scalar_lea.sflag [#allocation3], %s212
        %s214 = sand.u32 %s41, 1
        %s215 = smul.addr %s214, 1024
        %s216 = scalar_lea.vmem [#allocation2], %s215
        // Predicated region
        $region33: #{tpu_custom_call.1} parent=31 // pred_check
          %p217 = pneg %p54
        $region34: #{tpu_custom_call.1} parent=31 // pred_check_branch
          %219 = sbr.rel (%p217) target = $region36
        $region35: #{tpu_custom_call.1} parent=31 // pred_region
          %220 = dma.done %s213, 16384
        $region36: #{tpu_custom_call.1} parent=31 // pred_fallthru
          _
        // Predicated region
        $region37: #{tpu_custom_call.1} parent=31 // pred_check
          %p221 = pneg %p80
        $region38: #{tpu_custom_call.1} parent=31 // pred_check_branch
          %223 = sbr.rel (%p221) target = $region40
        $region39: #{tpu_custom_call.1} parent=31 // pred_region
          %224 = dma.done [#allocation6], 24576
        $region40: #{tpu_custom_call.1} parent=31 // pred_fallthru
          _
        // Predicated region
        $region41: #{tpu_custom_call.1} parent=31 // pred_check
          %p225 = pneg %p106
        $region42: #{tpu_custom_call.1} parent=31 // pred_check_branch
          %227 = sbr.rel (%p225) target = $region44
        $region43: #{tpu_custom_call.1} parent=31 // pred_region
          %228 = dma.done [#allocation6], 96
        $region44: #{tpu_custom_call.1} parent=31 // pred_fallthru
          _
        %s229 = sand.u32 %s41, 1
        %s230 = scalar_lea.sflag [#allocation3], %s229
        %s231 = sand.u32 %s41, 1
        %s232 = smul.addr %s231, 1024
        %s233 = scalar_lea.vmem [#allocation2], %s232
        %p234 = pneg %p54
        %p235 = pneg %p51
        %p236 = pneg %p80
        %p237 = pneg %p77
        %p238 = pneg %p106
        %p239 = pneg %p103
        %p240 = pneg %p134
        %p241 = pneg %p131
        %s242 = sand.u32 %s121, 1
        %s243 = scalar_lea.sflag [#allocation4], %s242
        %s244 = sand.u32 %s121, 1
        %s245 = smul.addr %s244, 1536
        %s246 = scalar_lea.vmem [#allocation8], %s245
        %s247 = smul.u32 64, %s25
        %s248 = smul.u32 6, %s26
        %s249 = smul.u32 6, %s26
        %s250 = smul.u32 64, %s25
        %s251 = smul.u32 6, %s26
        %v252 = vld [vmem:[%s216] sm:$0xff]
        %v253 = vld [vmem:[%s216 + $0x8] sm:$0xff]
        %v254 = vld [vmem:[%s216 + $0x10] sm:$0xff]
        %v255 = vld [vmem:[%s216 + $0x18] sm:$0xff]
        %v256 = vld [vmem:[%s216 + $0x20] sm:$0xff]
        %v257 = vld [vmem:[%s216 + $0x28] sm:$0xff]
        %v258 = vld [vmem:[%s216 + $0x30] sm:$0xff]
        %v259 = vld [vmem:[%s216 + $0x38] sm:$0xff]
        %v260 = vld [vmem:[%s216 + $0x40] sm:$0xff]
        %v261 = vld [vmem:[%s216 + $0x48] sm:$0xff]
        %v262 = vld [vmem:[%s216 + $0x50] sm:$0xff]
        %v263 = vld [vmem:[%s216 + $0x58] sm:$0xff]
        %v264 = vld [vmem:[%s216 + $0x60] sm:$0xff]
        %v265 = vld [vmem:[%s216 + $0x68] sm:$0xff]
        %v266 = vld [vmem:[%s216 + $0x70] sm:$0xff]
        %v267 = vld [vmem:[%s216 + $0x78] sm:$0xff]
        %v268 = vld [vmem:[%s216 + $0x80] sm:$0xff]
        %v269 = vld [vmem:[%s216 + $0x88] sm:$0xff]
        %v270 = vld [vmem:[%s216 + $0x90] sm:$0xff]
        %v271 = vld [vmem:[%s216 + $0x98] sm:$0xff]
        %v272 = vld [vmem:[%s216 + $0xa0] sm:$0xff]
        %v273 = vld [vmem:[%s216 + $0xa8] sm:$0xff]
        %v274 = vld [vmem:[%s216 + $0xb0] sm:$0xff]
        %v275 = vld [vmem:[%s216 + $0xb8] sm:$0xff]
        %v276 = vld [vmem:[%s216 + $0xc0] sm:$0xff]
        %v277 = vld [vmem:[%s216 + $0xc8] sm:$0xff]
        %v278 = vld [vmem:[%s216 + $0xd0] sm:$0xff]
        %v279 = vld [vmem:[%s216 + $0xd8] sm:$0xff]
        %v280 = vld [vmem:[%s216 + $0xe0] sm:$0xff]
        %v281 = vld [vmem:[%s216 + $0xe8] sm:$0xff]
        %v282 = vld [vmem:[%s216 + $0xf0] sm:$0xff]
        %v283 = vld [vmem:[%s216 + $0xf8] sm:$0xff]
        %v284 = vld [vmem:[%s216 + $0x100] sm:$0xff]
        %v285 = vld [vmem:[%s216 + $0x108] sm:$0xff]
        %v286 = vld [vmem:[%s216 + $0x110] sm:$0xff]
        %v287 = vld [vmem:[%s216 + $0x118] sm:$0xff]
        %v288 = vld [vmem:[%s216 + $0x120] sm:$0xff]
        %v289 = vld [vmem:[%s216 + $0x128] sm:$0xff]
        %v290 = vld [vmem:[%s216 + $0x130] sm:$0xff]
        %v291 = vld [vmem:[%s216 + $0x138] sm:$0xff]
        %v292 = vld [vmem:[%s216 + $0x140] sm:$0xff]
        %v293 = vld [vmem:[%s216 + $0x148] sm:$0xff]
        %v294 = vld [vmem:[%s216 + $0x150] sm:$0xff]
        %v295 = vld [vmem:[%s216 + $0x158] sm:$0xff]
        %v296 = vld [vmem:[%s216 + $0x160] sm:$0xff]
        %v297 = vld [vmem:[%s216 + $0x168] sm:$0xff]
        %v298 = vld [vmem:[%s216 + $0x170] sm:$0xff]
        %v299 = vld [vmem:[%s216 + $0x178] sm:$0xff]
        %v300 = vld [vmem:[%s216 + $0x180] sm:$0xff]
        %v301 = vld [vmem:[%s216 + $0x188] sm:$0xff]
        %v302 = vld [vmem:[%s216 + $0x190] sm:$0xff]
        %v303 = vld [vmem:[%s216 + $0x198] sm:$0xff]
        %v304 = vld [vmem:[%s216 + $0x1a0] sm:$0xff]
        %v305 = vld [vmem:[%s216 + $0x1a8] sm:$0xff]
        %v306 = vld [vmem:[%s216 + $0x1b0] sm:$0xff]
        %v307 = vld [vmem:[%s216 + $0x1b8] sm:$0xff]
        %v308 = vld [vmem:[%s216 + $0x1c0] sm:$0xff]
        %v309 = vld [vmem:[%s216 + $0x1c8] sm:$0xff]
        %v310 = vld [vmem:[%s216 + $0x1d0] sm:$0xff]
        %v311 = vld [vmem:[%s216 + $0x1d8] sm:$0xff]
        %v312 = vld [vmem:[%s216 + $0x1e0] sm:$0xff]
        %v313 = vld [vmem:[%s216 + $0x1e8] sm:$0xff]
        %v314 = vld [vmem:[%s216 + $0x1f0] sm:$0xff]
        %v315 = vld [vmem:[%s216 + $0x1f8] sm:$0xff]
        %v316 = vld [vmem:[%s216 + $0x200] sm:$0xff]
        %v317 = vld [vmem:[%s216 + $0x208] sm:$0xff]
        %v318 = vld [vmem:[%s216 + $0x210] sm:$0xff]
        %v319 = vld [vmem:[%s216 + $0x218] sm:$0xff]
        %v320 = vld [vmem:[%s216 + $0x220] sm:$0xff]
        %v321 = vld [vmem:[%s216 + $0x228] sm:$0xff]
        %v322 = vld [vmem:[%s216 + $0x230] sm:$0xff]
        %v323 = vld [vmem:[%s216 + $0x238] sm:$0xff]
        %v324 = vld [vmem:[%s216 + $0x240] sm:$0xff]
        %v325 = vld [vmem:[%s216 + $0x248] sm:$0xff]
        %v326 = vld [vmem:[%s216 + $0x250] sm:$0xff]
        %v327 = vld [vmem:[%s216 + $0x258] sm:$0xff]
        %v328 = vld [vmem:[%s216 + $0x260] sm:$0xff]
        %v329 = vld [vmem:[%s216 + $0x268] sm:$0xff]
        %v330 = vld [vmem:[%s216 + $0x270] sm:$0xff]
        %v331 = vld [vmem:[%s216 + $0x278] sm:$0xff]
        %v332 = vld [vmem:[%s216 + $0x280] sm:$0xff]
        %v333 = vld [vmem:[%s216 + $0x288] sm:$0xff]
        %v334 = vld [vmem:[%s216 + $0x290] sm:$0xff]
        %v335 = vld [vmem:[%s216 + $0x298] sm:$0xff]
        %v336 = vld [vmem:[%s216 + $0x2a0] sm:$0xff]
        %v337 = vld [vmem:[%s216 + $0x2a8] sm:$0xff]
        %v338 = vld [vmem:[%s216 + $0x2b0] sm:$0xff]
        %v339 = vld [vmem:[%s216 + $0x2b8] sm:$0xff]
        %v340 = vld [vmem:[%s216 + $0x2c0] sm:$0xff]
        %v341 = vld [vmem:[%s216 + $0x2c8] sm:$0xff]
        %v342 = vld [vmem:[%s216 + $0x2d0] sm:$0xff]
        %v343 = vld [vmem:[%s216 + $0x2d8] sm:$0xff]
        %v344 = vld [vmem:[%s216 + $0x2e0] sm:$0xff]
        %v345 = vld [vmem:[%s216 + $0x2e8] sm:$0xff]
        %v346 = vld [vmem:[%s216 + $0x2f0] sm:$0xff]
        %v347 = vld [vmem:[%s216 + $0x2f8] sm:$0xff]
        %v348 = vld [vmem:[%s216 + $0x300] sm:$0xff]
        %v349 = vld [vmem:[%s216 + $0x308] sm:$0xff]
        %v350 = vld [vmem:[%s216 + $0x310] sm:$0xff]
        %v351 = vld [vmem:[%s216 + $0x318] sm:$0xff]
        %v352 = vld [vmem:[%s216 + $0x320] sm:$0xff]
        %v353 = vld [vmem:[%s216 + $0x328] sm:$0xff]
        %v354 = vld [vmem:[%s216 + $0x330] sm:$0xff]
        %v355 = vld [vmem:[%s216 + $0x338] sm:$0xff]
        %v356 = vld [vmem:[%s216 + $0x340] sm:$0xff]
        %v357 = vld [vmem:[%s216 + $0x348] sm:$0xff]
        %v358 = vld [vmem:[%s216 + $0x350] sm:$0xff]
        %v359 = vld [vmem:[%s216 + $0x358] sm:$0xff]
        %v360 = vld [vmem:[%s216 + $0x360] sm:$0xff]
        %v361 = vld [vmem:[%s216 + $0x368] sm:$0xff]
        %v362 = vld [vmem:[%s216 + $0x370] sm:$0xff]
        %v363 = vld [vmem:[%s216 + $0x378] sm:$0xff]
        %v364 = vld [vmem:[%s216 + $0x380] sm:$0xff]
        %v365 = vld [vmem:[%s216 + $0x388] sm:$0xff]
        %v366 = vld [vmem:[%s216 + $0x390] sm:$0xff]
        %v367 = vld [vmem:[%s216 + $0x398] sm:$0xff]
        %v368 = vld [vmem:[%s216 + $0x3a0] sm:$0xff]
        %v369 = vld [vmem:[%s216 + $0x3a8] sm:$0xff]
        %v370 = vld [vmem:[%s216 + $0x3b0] sm:$0xff]
        %v371 = vld [vmem:[%s216 + $0x3b8] sm:$0xff]
        %v372 = vld [vmem:[%s216 + $0x3c0] sm:$0xff]
        %v373 = vld [vmem:[%s216 + $0x3c8] sm:$0xff]
        %v374 = vld [vmem:[%s216 + $0x3d0] sm:$0xff]
        %v375 = vld [vmem:[%s216 + $0x3d8] sm:$0xff]
        %v376 = vld [vmem:[%s216 + $0x3e0] sm:$0xff]
        %v377 = vld [vmem:[%s216 + $0x3e8] sm:$0xff]
        %v378 = vld [vmem:[%s216 + $0x3f0] sm:$0xff]
        %v379 = vld [vmem:[%s216 + $0x3f8] sm:$0xff]
        %v380 = vld [vmem:[#allocation5] sm:$0xff]
        %v381 = vld [vmem:[#allocation5 + $0x8] sm:$0xff]
        %v382 = vld [vmem:[#allocation5 + $0x10] sm:$0xff]
        %v383 = vld [vmem:[#allocation5 + $0x18] sm:$0xff]
        %v384 = vld [vmem:[#allocation5 + $0x20] sm:$0xff]
        %v385 = vld [vmem:[#allocation5 + $0x28] sm:$0xff]
        %v386 = vld [vmem:[#allocation5 + $0x30] sm:$0xff]
        %v387 = vld [vmem:[#allocation5 + $0x38] sm:$0xff]
        %v388 = vld [vmem:[#allocation5 + $0x40] sm:$0xff]
        %v389 = vld [vmem:[#allocation5 + $0x48] sm:$0xff]
        %v390 = vld [vmem:[#allocation5 + $0x50] sm:$0xff]
        %v391 = vld [vmem:[#allocation5 + $0x58] sm:$0xff]
        %v392 = vld [vmem:[#allocation5 + $0x60] sm:$0xff]
        %v393 = vld [vmem:[#allocation5 + $0x68] sm:$0xff]
        %v394 = vld [vmem:[#allocation5 + $0x70] sm:$0xff]
        %v395 = vld [vmem:[#allocation5 + $0x78] sm:$0xff]
        %v396 = vld [vmem:[#allocation5 + $0x80] sm:$0xff]
        %v397 = vld [vmem:[#allocation5 + $0x88] sm:$0xff]
        %v398 = vld [vmem:[#allocation5 + $0x90] sm:$0xff]
        %v399 = vld [vmem:[#allocation5 + $0x98] sm:$0xff]
        %v400 = vld [vmem:[#allocation5 + $0xa0] sm:$0xff]
        %v401 = vld [vmem:[#allocation5 + $0xa8] sm:$0xff]
        %v402 = vld [vmem:[#allocation5 + $0xb0] sm:$0xff]
        %v403 = vld [vmem:[#allocation5 + $0xb8] sm:$0xff]
        %v404 = vld [vmem:[#allocation5 + $0xc0] sm:$0xff]
        %v405 = vld [vmem:[#allocation5 + $0xc8] sm:$0xff]
        %v406 = vld [vmem:[#allocation5 + $0xd0] sm:$0xff]
        %v407 = vld [vmem:[#allocation5 + $0xd8] sm:$0xff]
        %v408 = vld [vmem:[#allocation5 + $0xe0] sm:$0xff]
        %v409 = vld [vmem:[#allocation5 + $0xe8] sm:$0xff]
        %v410 = vld [vmem:[#allocation5 + $0xf0] sm:$0xff]
        %v411 = vld [vmem:[#allocation5 + $0xf8] sm:$0xff]
        %v412 = vld [vmem:[#allocation5 + $0x100] sm:$0xff]
        %v413 = vld [vmem:[#allocation5 + $0x108] sm:$0xff]
        %v414 = vld [vmem:[#allocation5 + $0x110] sm:$0xff]
        %v415 = vld [vmem:[#allocation5 + $0x118] sm:$0xff]
        %v416 = vld [vmem:[#allocation5 + $0x120] sm:$0xff]
        %v417 = vld [vmem:[#allocation5 + $0x128] sm:$0xff]
        %v418 = vld [vmem:[#allocation5 + $0x130] sm:$0xff]
        %v419 = vld [vmem:[#allocation5 + $0x138] sm:$0xff]
        %v420 = vld [vmem:[#allocation5 + $0x140] sm:$0xff]
        %v421 = vld [vmem:[#allocation5 + $0x148] sm:$0xff]
        %v422 = vld [vmem:[#allocation5 + $0x150] sm:$0xff]
        %v423 = vld [vmem:[#allocation5 + $0x158] sm:$0xff]
        %v424 = vld [vmem:[#allocation5 + $0x160] sm:$0xff]
        %v425 = vld [vmem:[#allocation5 + $0x168] sm:$0xff]
        %v426 = vld [vmem:[#allocation5 + $0x170] sm:$0xff]
        %v427 = vld [vmem:[#allocation5 + $0x178] sm:$0xff]
        %v428 = vld [vmem:[#allocation5 + $0x180] sm:$0xff]
        %v429 = vld [vmem:[#allocation5 + $0x188] sm:$0xff]
        %v430 = vld [vmem:[#allocation5 + $0x190] sm:$0xff]
        %v431 = vld [vmem:[#allocation5 + $0x198] sm:$0xff]
        %v432 = vld [vmem:[#allocation5 + $0x1a0] sm:$0xff]
        %v433 = vld [vmem:[#allocation5 + $0x1a8] sm:$0xff]
        %v434 = vld [vmem:[#allocation5 + $0x1b0] sm:$0xff]
        %v435 = vld [vmem:[#allocation5 + $0x1b8] sm:$0xff]
        %v436 = vld [vmem:[#allocation5 + $0x1c0] sm:$0xff]
        %v437 = vld [vmem:[#allocation5 + $0x1c8] sm:$0xff]
        %v438 = vld [vmem:[#allocation5 + $0x1d0] sm:$0xff]
        %v439 = vld [vmem:[#allocation5 + $0x1d8] sm:$0xff]
        %v440 = vld [vmem:[#allocation5 + $0x1e0] sm:$0xff]
        %v441 = vld [vmem:[#allocation5 + $0x1e8] sm:$0xff]
        %v442 = vld [vmem:[#allocation5 + $0x1f0] sm:$0xff]
        %v443 = vld [vmem:[#allocation5 + $0x1f8] sm:$0xff]
        %v444 = vld [vmem:[#allocation5 + $0x200] sm:$0xff]
        %v445 = vld [vmem:[#allocation5 + $0x208] sm:$0xff]
        %v446 = vld [vmem:[#allocation5 + $0x210] sm:$0xff]
        %v447 = vld [vmem:[#allocation5 + $0x218] sm:$0xff]
        %v448 = vld [vmem:[#allocation5 + $0x220] sm:$0xff]
        %v449 = vld [vmem:[#allocation5 + $0x228] sm:$0xff]
        %v450 = vld [vmem:[#allocation5 + $0x230] sm:$0xff]
        %v451 = vld [vmem:[#allocation5 + $0x238] sm:$0xff]
        %v452 = vld [vmem:[#allocation5 + $0x240] sm:$0xff]
        %v453 = vld [vmem:[#allocation5 + $0x248] sm:$0xff]
        %v454 = vld [vmem:[#allocation5 + $0x250] sm:$0xff]
        %v455 = vld [vmem:[#allocation5 + $0x258] sm:$0xff]
        %v456 = vld [vmem:[#allocation5 + $0x260] sm:$0xff]
        %v457 = vld [vmem:[#allocation5 + $0x268] sm:$0xff]
        %v458 = vld [vmem:[#allocation5 + $0x270] sm:$0xff]
        %v459 = vld [vmem:[#allocation5 + $0x278] sm:$0xff]
        %v460 = vld [vmem:[#allocation5 + $0x280] sm:$0xff]
        %v461 = vld [vmem:[#allocation5 + $0x288] sm:$0xff]
        %v462 = vld [vmem:[#allocation5 + $0x290] sm:$0xff]
        %v463 = vld [vmem:[#allocation5 + $0x298] sm:$0xff]
        %v464 = vld [vmem:[#allocation5 + $0x2a0] sm:$0xff]
        %v465 = vld [vmem:[#allocation5 + $0x2a8] sm:$0xff]
        %v466 = vld [vmem:[#allocation5 + $0x2b0] sm:$0xff]
        %v467 = vld [vmem:[#allocation5 + $0x2b8] sm:$0xff]
        %v468 = vld [vmem:[#allocation5 + $0x2c0] sm:$0xff]
        %v469 = vld [vmem:[#allocation5 + $0x2c8] sm:$0xff]
        %v470 = vld [vmem:[#allocation5 + $0x2d0] sm:$0xff]
        %v471 = vld [vmem:[#allocation5 + $0x2d8] sm:$0xff]
        %v472 = vld [vmem:[#allocation5 + $0x2e0] sm:$0xff]
        %v473 = vld [vmem:[#allocation5 + $0x2e8] sm:$0xff]
        %v474 = vld [vmem:[#allocation5 + $0x2f0] sm:$0xff]
        %v475 = vld [vmem:[#allocation5 + $0x2f8] sm:$0xff]
        %v476 = vld [vmem:[#allocation5 + $0x300] sm:$0xff]
        %v477 = vld [vmem:[#allocation5 + $0x308] sm:$0xff]
        %v478 = vld [vmem:[#allocation5 + $0x310] sm:$0xff]
        %v479 = vld [vmem:[#allocation5 + $0x318] sm:$0xff]
        %v480 = vld [vmem:[#allocation5 + $0x320] sm:$0xff]
        %v481 = vld [vmem:[#allocation5 + $0x328] sm:$0xff]
        %v482 = vld [vmem:[#allocation5 + $0x330] sm:$0xff]
        %v483 = vld [vmem:[#allocation5 + $0x338] sm:$0xff]
        %v484 = vld [vmem:[#allocation5 + $0x340] sm:$0xff]
        %v485 = vld [vmem:[#allocation5 + $0x348] sm:$0xff]
        %v486 = vld [vmem:[#allocation5 + $0x350] sm:$0xff]
        %v487 = vld [vmem:[#allocation5 + $0x358] sm:$0xff]
        %v488 = vld [vmem:[#allocation5 + $0x360] sm:$0xff]
        %v489 = vld [vmem:[#allocation5 + $0x368] sm:$0xff]
        %v490 = vld [vmem:[#allocation5 + $0x370] sm:$0xff]
        %v491 = vld [vmem:[#allocation5 + $0x378] sm:$0xff]
        %v492 = vld [vmem:[#allocation5 + $0x380] sm:$0xff]
        %v493 = vld [vmem:[#allocation5 + $0x388] sm:$0xff]
        %v494 = vld [vmem:[#allocation5 + $0x390] sm:$0xff]
        %v495 = vld [vmem:[#allocation5 + $0x398] sm:$0xff]
        %v496 = vld [vmem:[#allocation5 + $0x3a0] sm:$0xff]
        %v497 = vld [vmem:[#allocation5 + $0x3a8] sm:$0xff]
        %v498 = vld [vmem:[#allocation5 + $0x3b0] sm:$0xff]
        %v499 = vld [vmem:[#allocation5 + $0x3b8] sm:$0xff]
        %v500 = vld [vmem:[#allocation5 + $0x3c0] sm:$0xff]
        %v501 = vld [vmem:[#allocation5 + $0x3c8] sm:$0xff]
        %v502 = vld [vmem:[#allocation5 + $0x3d0] sm:$0xff]
        %v503 = vld [vmem:[#allocation5 + $0x3d8] sm:$0xff]
        %v504 = vld [vmem:[#allocation5 + $0x3e0] sm:$0xff]
        %v505 = vld [vmem:[#allocation5 + $0x3e8] sm:$0xff]
        %v506 = vld [vmem:[#allocation5 + $0x3f0] sm:$0xff]
        %v507 = vld [vmem:[#allocation5 + $0x3f8] sm:$0xff]
        %v508 = vld [vmem:[#allocation5 + $0x400] sm:$0xff]
        %v509 = vld [vmem:[#allocation5 + $0x408] sm:$0xff]
        %v510 = vld [vmem:[#allocation5 + $0x410] sm:$0xff]
        %v511 = vld [vmem:[#allocation5 + $0x418] sm:$0xff]
        %v512 = vld [vmem:[#allocation5 + $0x420] sm:$0xff]
        %v513 = vld [vmem:[#allocation5 + $0x428] sm:$0xff]
        %v514 = vld [vmem:[#allocation5 + $0x430] sm:$0xff]
        %v515 = vld [vmem:[#allocation5 + $0x438] sm:$0xff]
        %v516 = vld [vmem:[#allocation5 + $0x440] sm:$0xff]
        %v517 = vld [vmem:[#allocation5 + $0x448] sm:$0xff]
        %v518 = vld [vmem:[#allocation5 + $0x450] sm:$0xff]
        %v519 = vld [vmem:[#allocation5 + $0x458] sm:$0xff]
        %v520 = vld [vmem:[#allocation5 + $0x460] sm:$0xff]
        %v521 = vld [vmem:[#allocation5 + $0x468] sm:$0xff]
        %v522 = vld [vmem:[#allocation5 + $0x470] sm:$0xff]
        %v523 = vld [vmem:[#allocation5 + $0x478] sm:$0xff]
        %v524 = vld [vmem:[#allocation5 + $0x480] sm:$0xff]
        %v525 = vld [vmem:[#allocation5 + $0x488] sm:$0xff]
        %v526 = vld [vmem:[#allocation5 + $0x490] sm:$0xff]
        %v527 = vld [vmem:[#allocation5 + $0x498] sm:$0xff]
        %v528 = vld [vmem:[#allocation5 + $0x4a0] sm:$0xff]
        %v529 = vld [vmem:[#allocation5 + $0x4a8] sm:$0xff]
        %v530 = vld [vmem:[#allocation5 + $0x4b0] sm:$0xff]
        %v531 = vld [vmem:[#allocation5 + $0x4b8] sm:$0xff]
        %v532 = vld [vmem:[#allocation5 + $0x4c0] sm:$0xff]
        %v533 = vld [vmem:[#allocation5 + $0x4c8] sm:$0xff]
        %v534 = vld [vmem:[#allocation5 + $0x4d0] sm:$0xff]
        %v535 = vld [vmem:[#allocation5 + $0x4d8] sm:$0xff]
        %v536 = vld [vmem:[#allocation5 + $0x4e0] sm:$0xff]
        %v537 = vld [vmem:[#allocation5 + $0x4e8] sm:$0xff]
        %v538 = vld [vmem:[#allocation5 + $0x4f0] sm:$0xff]
        %v539 = vld [vmem:[#allocation5 + $0x4f8] sm:$0xff]
        %v540 = vld [vmem:[#allocation5 + $0x500] sm:$0xff]
        %v541 = vld [vmem:[#allocation5 + $0x508] sm:$0xff]
        %v542 = vld [vmem:[#allocation5 + $0x510] sm:$0xff]
        %v543 = vld [vmem:[#allocation5 + $0x518] sm:$0xff]
        %v544 = vld [vmem:[#allocation5 + $0x520] sm:$0xff]
        %v545 = vld [vmem:[#allocation5 + $0x528] sm:$0xff]
        %v546 = vld [vmem:[#allocation5 + $0x530] sm:$0xff]
        %v547 = vld [vmem:[#allocation5 + $0x538] sm:$0xff]
        %v548 = vld [vmem:[#allocation5 + $0x540] sm:$0xff]
        %v549 = vld [vmem:[#allocation5 + $0x548] sm:$0xff]
        %v550 = vld [vmem:[#allocation5 + $0x550] sm:$0xff]
        %v551 = vld [vmem:[#allocation5 + $0x558] sm:$0xff]
        %v552 = vld [vmem:[#allocation5 + $0x560] sm:$0xff]
        %v553 = vld [vmem:[#allocation5 + $0x568] sm:$0xff]
        %v554 = vld [vmem:[#allocation5 + $0x570] sm:$0xff]
        %v555 = vld [vmem:[#allocation5 + $0x578] sm:$0xff]
        %v556 = vld [vmem:[#allocation5 + $0x580] sm:$0xff]
        %v557 = vld [vmem:[#allocation5 + $0x588] sm:$0xff]
        %v558 = vld [vmem:[#allocation5 + $0x590] sm:$0xff]
        %v559 = vld [vmem:[#allocation5 + $0x598] sm:$0xff]
        %v560 = vld [vmem:[#allocation5 + $0x5a0] sm:$0xff]
        %v561 = vld [vmem:[#allocation5 + $0x5a8] sm:$0xff]
        %v562 = vld [vmem:[#allocation5 + $0x5b0] sm:$0xff]
        %v563 = vld [vmem:[#allocation5 + $0x5b8] sm:$0xff]
        %v564 = vld [vmem:[#allocation5 + $0x5c0] sm:$0xff]
        %v565 = vld [vmem:[#allocation5 + $0x5c8] sm:$0xff]
        %v566 = vld [vmem:[#allocation5 + $0x5d0] sm:$0xff]
        %v567 = vld [vmem:[#allocation5 + $0x5d8] sm:$0xff]
        %v568 = vld [vmem:[#allocation5 + $0x5e0] sm:$0xff]
        %v569 = vld [vmem:[#allocation5 + $0x5e8] sm:$0xff]
        %v570 = vld [vmem:[#allocation5 + $0x5f0] sm:$0xff]
        %v571 = vld [vmem:[#allocation5 + $0x5f8] sm:$0xff]
        %v572 = vld [vmem:[#allocation7] sm:$0x3f]
        %v574 = vlaneseq
        %v575 = vshrl.u32 %v574, 7
        %v576 = vsub.s32 0, %v575
        %v577 = vrot.slane %v572, %v576
        %v578 = vlaneseq
        %v579 = vshrl.u32 %v578, 7
        %v580 = vsub.s32 1, %v579
        %v581 = vrot.slane %v572, %v580
        %v582 = vlaneseq
        %v583 = vshrl.u32 %v582, 7
        %v584 = vsub.s32 2, %v583
        %v585 = vrot.slane %v572, %v584
        %v586 = vlaneseq
        %v587 = vshrl.u32 %v586, 7
        %v588 = vsub.s32 3, %v587
        %v589 = vrot.slane %v572, %v588
        %v590 = vlaneseq
        %v591 = vshrl.u32 %v590, 7
        %v592 = vsub.s32 4, %v591
        %v593 = vrot.slane %v572, %v592
        %v594 = vlaneseq
        %v595 = vshrl.u32 %v594, 7
        %v596 = vsub.s32 5, %v595
        %v597 = vrot.slane %v572, %v596
        %604 = vmatprep.subr.mxu0 %v471
        %605 = vmatpush1.msra.mxu0 %v470
        %606 = vmatprep.subr.mxu0 %v465
        %607 = vmatpush1.msra.mxu0 %v464
        %608 = vmatprep.subr.mxu0 %v459
        %609 = vmatpush1.msra.mxu0 %v458
        %610 = vmatprep.subr.mxu0 %v453
        %611 = vmatpush1.msra.mxu0 %v452
        %612 = vmatprep.subr.mxu0 %v447
        %613 = vmatpush1.msra.mxu0 %v446
        %614 = vmatprep.subr.mxu0 %v441
        %615 = vmatpush1.msra.mxu0 %v440
        %616 = vmatprep.subr.mxu0 %v435
        %617 = vmatpush1.msra.mxu0 %v434
        %618 = vmatprep.subr.mxu0 %v429
        %619 = vmatpush1.msra.mxu0 %v428
        %620 = vmatprep.subr.mxu0 %v423
        %621 = vmatpush1.msra.mxu0 %v422
        %622 = vmatprep.subr.mxu0 %v417
        %623 = vmatpush1.msra.mxu0 %v416
        %624 = vmatprep.subr.mxu0 %v411
        %625 = vmatpush1.msra.mxu0 %v410
        %626 = vmatprep.subr.mxu0 %v405
        %627 = vmatpush1.msra.mxu0 %v404
        %628 = vmatprep.subr.mxu0 %v399
        %629 = vmatpush1.msra.mxu0 %v398
        %630 = vmatprep.subr.mxu0 %v393
        %631 = vmatpush1.msra.mxu0 %v392
        %632 = vmatprep.subr.mxu0 %v387
        %633 = vmatpush1.msra.mxu0 %v386
        %634 = vmatprep.subr.mxu0 %v381
        %635 = vmatpush1.msra.mxu0 %v380
        %636 = vmatprep.subr.mxu0 %v567
        %637 = vmatpush2.msra.mxu0 %v566
        %638 = vmatprep.subr.mxu0 %v561
        %639 = vmatpush2.msra.mxu0 %v560
        %640 = vmatprep.subr.mxu0 %v555
        %641 = vmatpush2.msra.mxu0 %v554
        %642 = vmatprep.subr.mxu0 %v549
        %643 = vmatpush2.msra.mxu0 %v548
        %644 = vmatprep.subr.mxu0 %v543
        %645 = vmatpush2.msra.mxu0 %v542
        %646 = vmatprep.subr.mxu0 %v537
        %647 = vmatpush2.msra.mxu0 %v536
        %648 = vmatprep.subr.mxu0 %v531
        %649 = vmatpush2.msra.mxu0 %v530
        %650 = vmatprep.subr.mxu0 %v525
        %651 = vmatpush2.msra.mxu0 %v524
        %652 = vmatprep.subr.mxu0 %v519
        %653 = vmatpush2.msra.mxu0 %v518
        %654 = vmatprep.subr.mxu0 %v513
        %655 = vmatpush2.msra.mxu0 %v512
        %656 = vmatprep.subr.mxu0 %v507
        %657 = vmatpush2.msra.mxu0 %v506
        %658 = vmatprep.subr.mxu0 %v501
        %659 = vmatpush2.msra.mxu0 %v500
        %660 = vmatprep.subr.mxu0 %v495
        %661 = vmatpush2.msra.mxu0 %v494
        %662 = vmatprep.subr.mxu0 %v489
        %663 = vmatpush2.msra.mxu0 %v488
        %664 = vmatprep.subr.mxu0 %v483
        %665 = vmatpush2.msra.mxu0 %v482
        %666 = vmatprep.subr.mxu0 %v477
        %667 = vmatpush2.msra.mxu0 %v476
        %668 = vmatprep.mubr.f32.mxu0 %v253
        %669 = vmatmul.mubr.f32.gmra.mxu0 %v252
        %v670 = vpop.f32.mrf.mxu0
        %v671 = vadd.f32 %v577, %v670
        %v672 = vpop.f32.mrf.mxu0
        %v673 = vadd.f32 %v581, %v672
        %674 = vmatprep.mubr.f32.mxu0 %v255
        %675 = vmatmul.mubr.f32.gmra.mxu0 %v254
        %v676 = vpop.f32.mrf.mxu0
        %v677 = vadd.f32 %v577, %v676
        %v678 = vpop.f32.mrf.mxu0
        %v679 = vadd.f32 %v581, %v678
        %680 = vmatprep.mubr.f32.mxu0 %v257
        %681 = vmatmul.mubr.f32.gmra.mxu0 %v256
        %v682 = vpop.f32.mrf.mxu0
        %v683 = vadd.f32 %v577, %v682
        %v684 = vpop.f32.mrf.mxu0
        %v685 = vadd.f32 %v581, %v684
        %686 = vmatprep.mubr.f32.mxu0 %v259
        %687 = vmatmul.mubr.f32.gmra.mxu0 %v258
        %v688 = vpop.f32.mrf.mxu0
        %v689 = vadd.f32 %v577, %v688
        %v690 = vpop.f32.mrf.mxu0
        %v691 = vadd.f32 %v581, %v690
        %692 = vmatprep.mubr.f32.mxu0 %v261
        %693 = vmatmul.mubr.f32.gmra.mxu0 %v260
        %v694 = vpop.f32.mrf.mxu0
        %v695 = vadd.f32 %v577, %v694
        %v696 = vpop.f32.mrf.mxu0
        %v697 = vadd.f32 %v581, %v696
        %698 = vmatprep.mubr.f32.mxu0 %v263
        %699 = vmatmul.mubr.f32.gmra.mxu0 %v262
        %v700 = vpop.f32.mrf.mxu0
        %v701 = vadd.f32 %v577, %v700
        %v702 = vpop.f32.mrf.mxu0
        %v703 = vadd.f32 %v581, %v702
        %704 = vmatprep.mubr.f32.mxu0 %v265
        %705 = vmatmul.mubr.f32.gmra.mxu0 %v264
        %v706 = vpop.f32.mrf.mxu0
        %v707 = vadd.f32 %v577, %v706
        %v708 = vpop.f32.mrf.mxu0
        %v709 = vadd.f32 %v581, %v708
        %710 = vmatprep.mubr.f32.mxu0 %v267
        %711 = vmatmul.mubr.f32.gmra.mxu0 %v266
        %v712 = vpop.f32.mrf.mxu0
        %v713 = vadd.f32 %v577, %v712
        %v714 = vpop.f32.mrf.mxu0
        %v715 = vadd.f32 %v581, %v714
        %716 = vmatprep.mubr.f32.mxu0 %v269
        %717 = vmatmul.mubr.f32.gmra.mxu0 %v268
        %v718 = vpop.f32.mrf.mxu0
        %v719 = vadd.f32 %v577, %v718
        %v720 = vpop.f32.mrf.mxu0
        %v721 = vadd.f32 %v581, %v720
        %722 = vmatprep.mubr.f32.mxu0 %v271
        %723 = vmatmul.mubr.f32.gmra.mxu0 %v270
        %v724 = vpop.f32.mrf.mxu0
        %v725 = vadd.f32 %v577, %v724
        %v726 = vpop.f32.mrf.mxu0
        %v727 = vadd.f32 %v581, %v726
        %728 = vmatprep.mubr.f32.mxu0 %v273
        %729 = vmatmul.mubr.f32.gmra.mxu0 %v272
        %v730 = vpop.f32.mrf.mxu0
        %v731 = vadd.f32 %v577, %v730
        %v732 = vpop.f32.mrf.mxu0
        %v733 = vadd.f32 %v581, %v732
        %734 = vmatprep.mubr.f32.mxu0 %v275
        %735 = vmatmul.mubr.f32.gmra.mxu0 %v274
        %v736 = vpop.f32.mrf.mxu0
        %v737 = vadd.f32 %v577, %v736
        %v738 = vpop.f32.mrf.mxu0
        %v739 = vadd.f32 %v581, %v738
        %740 = vmatprep.mubr.f32.mxu0 %v277
        %741 = vmatmul.mubr.f32.gmra.mxu0 %v276
        %v742 = vpop.f32.mrf.mxu0
        %v743 = vadd.f32 %v577, %v742
        %v744 = vpop.f32.mrf.mxu0
        %v745 = vadd.f32 %v581, %v744
        %746 = vmatprep.mubr.f32.mxu0 %v279
        %747 = vmatmul.mubr.f32.gmra.mxu0 %v278
        %v748 = vpop.f32.mrf.mxu0
        %v749 = vadd.f32 %v577, %v748
        %v750 = vpop.f32.mrf.mxu0
        %v751 = vadd.f32 %v581, %v750
        %752 = vmatprep.mubr.f32.mxu0 %v281
        %753 = vmatmul.mubr.f32.gmra.mxu0 %v280
        %v754 = vpop.f32.mrf.mxu0
        %v755 = vadd.f32 %v577, %v754
        %v756 = vpop.f32.mrf.mxu0
        %v757 = vadd.f32 %v581, %v756
        %758 = vmatprep.mubr.f32.mxu0 %v283
        %759 = vmatmul.mubr.f32.gmra.mxu0 %v282
        %v760 = vpop.f32.mrf.mxu0
        %v761 = vadd.f32 %v577, %v760
        %v762 = vpop.f32.mrf.mxu0
        %v763 = vadd.f32 %v581, %v762
        %764 = vmatprep.mubr.f32.mxu0 %v285
        %765 = vmatmul.mubr.f32.gmra.mxu0 %v284
        %v766 = vpop.f32.mrf.mxu0
        %v767 = vadd.f32 %v577, %v766
        %v768 = vpop.f32.mrf.mxu0
        %v769 = vadd.f32 %v581, %v768
        %770 = vmatprep.mubr.f32.mxu0 %v287
        %771 = vmatmul.mubr.f32.gmra.mxu0 %v286
        %v772 = vpop.f32.mrf.mxu0
        %v773 = vadd.f32 %v577, %v772
        %v774 = vpop.f32.mrf.mxu0
        %v775 = vadd.f32 %v581, %v774
        %776 = vmatprep.mubr.f32.mxu0 %v289
        %777 = vmatmul.mubr.f32.gmra.mxu0 %v288
        %v778 = vpop.f32.mrf.mxu0
        %v779 = vadd.f32 %v577, %v778
        %v780 = vpop.f32.mrf.mxu0
        %v781 = vadd.f32 %v581, %v780
        %782 = vmatprep.mubr.f32.mxu0 %v291
        %783 = vmatmul.mubr.f32.gmra.mxu0 %v290
        %v784 = vpop.f32.mrf.mxu0
        %v785 = vadd.f32 %v577, %v784
        %v786 = vpop.f32.mrf.mxu0
        %v787 = vadd.f32 %v581, %v786
        %788 = vmatprep.mubr.f32.mxu0 %v293
        %789 = vmatmul.mubr.f32.gmra.mxu0 %v292
        %v790 = vpop.f32.mrf.mxu0
        %v791 = vadd.f32 %v577, %v790
        %v792 = vpop.f32.mrf.mxu0
        %v793 = vadd.f32 %v581, %v792
        %794 = vmatprep.mubr.f32.mxu0 %v295
        %795 = vmatmul.mubr.f32.gmra.mxu0 %v294
        %v796 = vpop.f32.mrf.mxu0
        %v797 = vadd.f32 %v577, %v796
        %v798 = vpop.f32.mrf.mxu0
        %v799 = vadd.f32 %v581, %v798
        %800 = vmatprep.mubr.f32.mxu0 %v297
        %801 = vmatmul.mubr.f32.gmra.mxu0 %v296
        %v802 = vpop.f32.mrf.mxu0
        %v803 = vadd.f32 %v577, %v802
        %v804 = vpop.f32.mrf.mxu0
        %v805 = vadd.f32 %v581, %v804
        %806 = vmatprep.mubr.f32.mxu0 %v299
        %807 = vmatmul.mubr.f32.gmra.mxu0 %v298
        %v808 = vpop.f32.mrf.mxu0
        %v809 = vadd.f32 %v577, %v808
        %v810 = vpop.f32.mrf.mxu0
        %v811 = vadd.f32 %v581, %v810
        %812 = vmatprep.mubr.f32.mxu0 %v301
        %813 = vmatmul.mubr.f32.gmra.mxu0 %v300
        %v814 = vpop.f32.mrf.mxu0
        %v815 = vadd.f32 %v577, %v814
        %v816 = vpop.f32.mrf.mxu0
        %v817 = vadd.f32 %v581, %v816
        %818 = vmatprep.mubr.f32.mxu0 %v303
        %819 = vmatmul.mubr.f32.gmra.mxu0 %v302
        %v820 = vpop.f32.mrf.mxu0
        %v821 = vadd.f32 %v577, %v820
        %v822 = vpop.f32.mrf.mxu0
        %v823 = vadd.f32 %v581, %v822
        %824 = vmatprep.mubr.f32.mxu0 %v305
        %825 = vmatmul.mubr.f32.gmra.mxu0 %v304
        %v826 = vpop.f32.mrf.mxu0
        %v827 = vadd.f32 %v577, %v826
        %v828 = vpop.f32.mrf.mxu0
        %v829 = vadd.f32 %v581, %v828
        %830 = vmatprep.mubr.f32.mxu0 %v307
        %831 = vmatmul.mubr.f32.gmra.mxu0 %v306
        %v832 = vpop.f32.mrf.mxu0
        %v833 = vadd.f32 %v577, %v832
        %v834 = vpop.f32.mrf.mxu0
        %v835 = vadd.f32 %v581, %v834
        %836 = vmatprep.mubr.f32.mxu0 %v309
        %837 = vmatmul.mubr.f32.gmra.mxu0 %v308
        %v838 = vpop.f32.mrf.mxu0
        %v839 = vadd.f32 %v577, %v838
        %v840 = vpop.f32.mrf.mxu0
        %v841 = vadd.f32 %v581, %v840
        %842 = vmatprep.mubr.f32.mxu0 %v311
        %843 = vmatmul.mubr.f32.gmra.mxu0 %v310
        %v844 = vpop.f32.mrf.mxu0
        %v845 = vadd.f32 %v577, %v844
        %v846 = vpop.f32.mrf.mxu0
        %v847 = vadd.f32 %v581, %v846
        %848 = vmatprep.mubr.f32.mxu0 %v313
        %849 = vmatmul.mubr.f32.gmra.mxu0 %v312
        %v850 = vpop.f32.mrf.mxu0
        %v851 = vadd.f32 %v577, %v850
        %v852 = vpop.f32.mrf.mxu0
        %v853 = vadd.f32 %v581, %v852
        %854 = vmatprep.mubr.f32.mxu0 %v315
        %855 = vmatmul.mubr.f32.gmra.mxu0 %v314
        %v856 = vpop.f32.mrf.mxu0
        %v857 = vadd.f32 %v577, %v856
        %v858 = vpop.f32.mrf.mxu0
        %v859 = vadd.f32 %v581, %v858
        %860 = vmatprep.mubr.f32.mxu0 %v317
        %861 = vmatmul.mubr.f32.gmra.mxu0 %v316
        %v862 = vpop.f32.mrf.mxu0
        %v863 = vadd.f32 %v577, %v862
        %v864 = vpop.f32.mrf.mxu0
        %v865 = vadd.f32 %v581, %v864
        %866 = vmatprep.mubr.f32.mxu0 %v319
        %867 = vmatmul.mubr.f32.gmra.mxu0 %v318
        %v868 = vpop.f32.mrf.mxu0
        %v869 = vadd.f32 %v577, %v868
        %v870 = vpop.f32.mrf.mxu0
        %v871 = vadd.f32 %v581, %v870
        %872 = vmatprep.mubr.f32.mxu0 %v321
        %873 = vmatmul.mubr.f32.gmra.mxu0 %v320
        %v874 = vpop.f32.mrf.mxu0
        %v875 = vadd.f32 %v577, %v874
        %v876 = vpop.f32.mrf.mxu0
        %v877 = vadd.f32 %v581, %v876
        %878 = vmatprep.mubr.f32.mxu0 %v323
        %879 = vmatmul.mubr.f32.gmra.mxu0 %v322
        %v880 = vpop.f32.mrf.mxu0
        %v881 = vadd.f32 %v577, %v880
        %v882 = vpop.f32.mrf.mxu0
        %v883 = vadd.f32 %v581, %v882
        %884 = vmatprep.mubr.f32.mxu0 %v325
        %885 = vmatmul.mubr.f32.gmra.mxu0 %v324
        %v886 = vpop.f32.mrf.mxu0
        %v887 = vadd.f32 %v577, %v886
        %v888 = vpop.f32.mrf.mxu0
        %v889 = vadd.f32 %v581, %v888
        %890 = vmatprep.mubr.f32.mxu0 %v327
        %891 = vmatmul.mubr.f32.gmra.mxu0 %v326
        %v892 = vpop.f32.mrf.mxu0
        %v893 = vadd.f32 %v577, %v892
        %v894 = vpop.f32.mrf.mxu0
        %v895 = vadd.f32 %v581, %v894
        %896 = vmatprep.mubr.f32.mxu0 %v329
        %897 = vmatmul.mubr.f32.gmra.mxu0 %v328
        %v898 = vpop.f32.mrf.mxu0
        %v899 = vadd.f32 %v577, %v898
        %v900 = vpop.f32.mrf.mxu0
        %v901 = vadd.f32 %v581, %v900
        %902 = vmatprep.mubr.f32.mxu0 %v331
        %903 = vmatmul.mubr.f32.gmra.mxu0 %v330
        %v904 = vpop.f32.mrf.mxu0
        %v905 = vadd.f32 %v577, %v904
        %v906 = vpop.f32.mrf.mxu0
        %v907 = vadd.f32 %v581, %v906
        %908 = vmatprep.mubr.f32.mxu0 %v333
        %909 = vmatmul.mubr.f32.gmra.mxu0 %v332
        %v910 = vpop.f32.mrf.mxu0
        %v911 = vadd.f32 %v577, %v910
        %v912 = vpop.f32.mrf.mxu0
        %v913 = vadd.f32 %v581, %v912
        %914 = vmatprep.mubr.f32.mxu0 %v335
        %915 = vmatmul.mubr.f32.gmra.mxu0 %v334
        %v916 = vpop.f32.mrf.mxu0
        %v917 = vadd.f32 %v577, %v916
        %v918 = vpop.f32.mrf.mxu0
        %v919 = vadd.f32 %v581, %v918
        %920 = vmatprep.mubr.f32.mxu0 %v337
        %921 = vmatmul.mubr.f32.gmra.mxu0 %v336
        %v922 = vpop.f32.mrf.mxu0
        %v923 = vadd.f32 %v577, %v922
        %v924 = vpop.f32.mrf.mxu0
        %v925 = vadd.f32 %v581, %v924
        %926 = vmatprep.mubr.f32.mxu0 %v339
        %927 = vmatmul.mubr.f32.gmra.mxu0 %v338
        %v928 = vpop.f32.mrf.mxu0
        %v929 = vadd.f32 %v577, %v928
        %v930 = vpop.f32.mrf.mxu0
        %v931 = vadd.f32 %v581, %v930
        %932 = vmatprep.mubr.f32.mxu0 %v341
        %933 = vmatmul.mubr.f32.gmra.mxu0 %v340
        %v934 = vpop.f32.mrf.mxu0
        %v935 = vadd.f32 %v577, %v934
        %v936 = vpop.f32.mrf.mxu0
        %v937 = vadd.f32 %v581, %v936
        %938 = vmatprep.mubr.f32.mxu0 %v343
        %939 = vmatmul.mubr.f32.gmra.mxu0 %v342
        %v940 = vpop.f32.mrf.mxu0
        %v941 = vadd.f32 %v577, %v940
        %v942 = vpop.f32.mrf.mxu0
        %v943 = vadd.f32 %v581, %v942
        %944 = vmatprep.mubr.f32.mxu0 %v345
        %945 = vmatmul.mubr.f32.gmra.mxu0 %v344
        %v946 = vpop.f32.mrf.mxu0
        %v947 = vadd.f32 %v577, %v946
        %v948 = vpop.f32.mrf.mxu0
        %v949 = vadd.f32 %v581, %v948
        %950 = vmatprep.mubr.f32.mxu0 %v347
        %951 = vmatmul.mubr.f32.gmra.mxu0 %v346
        %v952 = vpop.f32.mrf.mxu0
        %v953 = vadd.f32 %v577, %v952
        %v954 = vpop.f32.mrf.mxu0
        %v955 = vadd.f32 %v581, %v954
        %956 = vmatprep.mubr.f32.mxu0 %v349
        %957 = vmatmul.mubr.f32.gmra.mxu0 %v348
        %v958 = vpop.f32.mrf.mxu0
        %v959 = vadd.f32 %v577, %v958
        %v960 = vpop.f32.mrf.mxu0
        %v961 = vadd.f32 %v581, %v960
        %962 = vmatprep.mubr.f32.mxu0 %v351
        %963 = vmatmul.mubr.f32.gmra.mxu0 %v350
        %v964 = vpop.f32.mrf.mxu0
        %v965 = vadd.f32 %v577, %v964
        %v966 = vpop.f32.mrf.mxu0
        %v967 = vadd.f32 %v581, %v966
        %968 = vmatprep.mubr.f32.mxu0 %v353
        %969 = vmatmul.mubr.f32.gmra.mxu0 %v352
        %v970 = vpop.f32.mrf.mxu0
        %v971 = vadd.f32 %v577, %v970
        %v972 = vpop.f32.mrf.mxu0
        %v973 = vadd.f32 %v581, %v972
        %974 = vmatprep.mubr.f32.mxu0 %v355
        %975 = vmatmul.mubr.f32.gmra.mxu0 %v354
        %v976 = vpop.f32.mrf.mxu0
        %v977 = vadd.f32 %v577, %v976
        %v978 = vpop.f32.mrf.mxu0
        %v979 = vadd.f32 %v581, %v978
        %980 = vmatprep.mubr.f32.mxu0 %v357
        %981 = vmatmul.mubr.f32.gmra.mxu0 %v356
        %v982 = vpop.f32.mrf.mxu0
        %v983 = vadd.f32 %v577, %v982
        %v984 = vpop.f32.mrf.mxu0
        %v985 = vadd.f32 %v581, %v984
        %986 = vmatprep.mubr.f32.mxu0 %v359
        %987 = vmatmul.mubr.f32.gmra.mxu0 %v358
        %v988 = vpop.f32.mrf.mxu0
        %v989 = vadd.f32 %v577, %v988
        %v990 = vpop.f32.mrf.mxu0
        %v991 = vadd.f32 %v581, %v990
        %992 = vmatprep.mubr.f32.mxu0 %v361
        %993 = vmatmul.mubr.f32.gmra.mxu0 %v360
        %v994 = vpop.f32.mrf.mxu0
        %v995 = vadd.f32 %v577, %v994
        %v996 = vpop.f32.mrf.mxu0
        %v997 = vadd.f32 %v581, %v996
        %998 = vmatprep.mubr.f32.mxu0 %v363
        %999 = vmatmul.mubr.f32.gmra.mxu0 %v362
        %v1000 = vpop.f32.mrf.mxu0
        %v1001 = vadd.f32 %v577, %v1000
        %v1002 = vpop.f32.mrf.mxu0
        %v1003 = vadd.f32 %v581, %v1002
        %1004 = vmatprep.mubr.f32.mxu0 %v365
        %1005 = vmatmul.mubr.f32.gmra.mxu0 %v364
        %v1006 = vpop.f32.mrf.mxu0
        %v1007 = vadd.f32 %v577, %v1006
        %v1008 = vpop.f32.mrf.mxu0
        %v1009 = vadd.f32 %v581, %v1008
        %1010 = vmatprep.mubr.f32.mxu0 %v367
        %1011 = vmatmul.mubr.f32.gmra.mxu0 %v366
        %v1012 = vpop.f32.mrf.mxu0
        %v1013 = vadd.f32 %v577, %v1012
        %v1014 = vpop.f32.mrf.mxu0
        %v1015 = vadd.f32 %v581, %v1014
        %1016 = vmatprep.mubr.f32.mxu0 %v369
        %1017 = vmatmul.mubr.f32.gmra.mxu0 %v368
        %v1018 = vpop.f32.mrf.mxu0
        %v1019 = vadd.f32 %v577, %v1018
        %v1020 = vpop.f32.mrf.mxu0
        %v1021 = vadd.f32 %v581, %v1020
        %1022 = vmatprep.mubr.f32.mxu0 %v371
        %1023 = vmatmul.mubr.f32.gmra.mxu0 %v370
        %v1024 = vpop.f32.mrf.mxu0
        %v1025 = vadd.f32 %v577, %v1024
        %v1026 = vpop.f32.mrf.mxu0
        %v1027 = vadd.f32 %v581, %v1026
        %1028 = vmatprep.mubr.f32.mxu0 %v373
        %1029 = vmatmul.mubr.f32.gmra.mxu0 %v372
        %v1030 = vpop.f32.mrf.mxu0
        %v1031 = vadd.f32 %v577, %v1030
        %v1032 = vpop.f32.mrf.mxu0
        %v1033 = vadd.f32 %v581, %v1032
        %1034 = vmatprep.mubr.f32.mxu0 %v375
        %1035 = vmatmul.mubr.f32.gmra.mxu0 %v374
        %v1036 = vpop.f32.mrf.mxu0
        %v1037 = vadd.f32 %v577, %v1036
        %v1038 = vpop.f32.mrf.mxu0
        %v1039 = vadd.f32 %v581, %v1038
        %1040 = vmatprep.mubr.f32.mxu0 %v377
        %1041 = vmatmul.mubr.f32.gmra.mxu0 %v376
        %v1042 = vpop.f32.mrf.mxu0
        %v1043 = vadd.f32 %v577, %v1042
        %v1044 = vpop.f32.mrf.mxu0
        %v1045 = vadd.f32 %v581, %v1044
        %1046 = vmatprep.mubr.f32.mxu0 %v379
        %1047 = vmatmul.mubr.f32.gmra.mxu0 %v378
        %v1048 = vpop.f32.mrf.mxu0
        %v1049 = vadd.f32 %v577, %v1048
        %v1050 = vpop.f32.mrf.mxu0
        %v1051 = vadd.f32 %v581, %v1050
        %1052 = vdwg.mxu0
        %1053 = vmatprep.subr.mxu0 %v473
        %1054 = vmatpush1.msra.mxu0 %v472
        %1055 = vmatprep.subr.mxu0 %v467
        %1056 = vmatpush1.msra.mxu0 %v466
        %1057 = vmatprep.subr.mxu0 %v461
        %1058 = vmatpush1.msra.mxu0 %v460
        %1059 = vmatprep.subr.mxu0 %v455
        %1060 = vmatpush1.msra.mxu0 %v454
        %1061 = vmatprep.subr.mxu0 %v449
        %1062 = vmatpush1.msra.mxu0 %v448
        %1063 = vmatprep.subr.mxu0 %v443
        %1064 = vmatpush1.msra.mxu0 %v442
        %1065 = vmatprep.subr.mxu0 %v437
        %1066 = vmatpush1.msra.mxu0 %v436
        %1067 = vmatprep.subr.mxu0 %v431
        %1068 = vmatpush1.msra.mxu0 %v430
        %1069 = vmatprep.subr.mxu0 %v425
        %1070 = vmatpush1.msra.mxu0 %v424
        %1071 = vmatprep.subr.mxu0 %v419
        %1072 = vmatpush1.msra.mxu0 %v418
        %1073 = vmatprep.subr.mxu0 %v413
        %1074 = vmatpush1.msra.mxu0 %v412
        %1075 = vmatprep.subr.mxu0 %v407
        %1076 = vmatpush1.msra.mxu0 %v406
        %1077 = vmatprep.subr.mxu0 %v401
        %1078 = vmatpush1.msra.mxu0 %v400
        %1079 = vmatprep.subr.mxu0 %v395
        %1080 = vmatpush1.msra.mxu0 %v394
        %1081 = vmatprep.subr.mxu0 %v389
        %1082 = vmatpush1.msra.mxu0 %v388
        %1083 = vmatprep.subr.mxu0 %v383
        %1084 = vmatpush1.msra.mxu0 %v382
        %1085 = vmatprep.subr.mxu0 %v569
        %1086 = vmatpush2.msra.mxu0 %v568
        %1087 = vmatprep.subr.mxu0 %v563
        %1088 = vmatpush2.msra.mxu0 %v562
        %1089 = vmatprep.subr.mxu0 %v557
        %1090 = vmatpush2.msra.mxu0 %v556
        %1091 = vmatprep.subr.mxu0 %v551
        %1092 = vmatpush2.msra.mxu0 %v550
        %1093 = vmatprep.subr.mxu0 %v545
        %1094 = vmatpush2.msra.mxu0 %v544
        %1095 = vmatprep.subr.mxu0 %v539
        %1096 = vmatpush2.msra.mxu0 %v538
        %1097 = vmatprep.subr.mxu0 %v533
        %1098 = vmatpush2.msra.mxu0 %v532
        %1099 = vmatprep.subr.mxu0 %v527
        %1100 = vmatpush2.msra.mxu0 %v526
        %1101 = vmatprep.subr.mxu0 %v521
        %1102 = vmatpush2.msra.mxu0 %v520
        %1103 = vmatprep.subr.mxu0 %v515
        %1104 = vmatpush2.msra.mxu0 %v514
        %1105 = vmatprep.subr.mxu0 %v509
        %1106 = vmatpush2.msra.mxu0 %v508
        %1107 = vmatprep.subr.mxu0 %v503
        %1108 = vmatpush2.msra.mxu0 %v502
        %1109 = vmatprep.subr.mxu0 %v497
        %1110 = vmatpush2.msra.mxu0 %v496
        %1111 = vmatprep.subr.mxu0 %v491
        %1112 = vmatpush2.msra.mxu0 %v490
        %1113 = vmatprep.subr.mxu0 %v485
        %1114 = vmatpush2.msra.mxu0 %v484
        %1115 = vmatprep.subr.mxu0 %v479
        %1116 = vmatpush2.msra.mxu0 %v478
        %1117 = vmatprep.mubr.f32.mxu0 %v253
        %1118 = vmatmul.mubr.f32.gmra.mxu0 %v252
        %v1119 = vpop.f32.mrf.mxu0
        %v1120 = vadd.f32 %v585, %v1119
        %v1121 = vpop.f32.mrf.mxu0
        %v1122 = vadd.f32 %v589, %v1121
        %1123 = vmatprep.mubr.f32.mxu0 %v255
        %1124 = vmatmul.mubr.f32.gmra.mxu0 %v254
        %v1125 = vpop.f32.mrf.mxu0
        %v1126 = vadd.f32 %v585, %v1125
        %v1127 = vpop.f32.mrf.mxu0
        %v1128 = vadd.f32 %v589, %v1127
        %1129 = vmatprep.mubr.f32.mxu0 %v257
        %1130 = vmatmul.mubr.f32.gmra.mxu0 %v256
        %v1131 = vpop.f32.mrf.mxu0
        %v1132 = vadd.f32 %v585, %v1131
        %v1133 = vpop.f32.mrf.mxu0
        %v1134 = vadd.f32 %v589, %v1133
        %1135 = vmatprep.mubr.f32.mxu0 %v259
        %1136 = vmatmul.mubr.f32.gmra.mxu0 %v258
        %v1137 = vpop.f32.mrf.mxu0
        %v1138 = vadd.f32 %v585, %v1137
        %v1139 = vpop.f32.mrf.mxu0
        %v1140 = vadd.f32 %v589, %v1139
        %1141 = vmatprep.mubr.f32.mxu0 %v261
        %1142 = vmatmul.mubr.f32.gmra.mxu0 %v260
        %v1143 = vpop.f32.mrf.mxu0
        %v1144 = vadd.f32 %v585, %v1143
        %v1145 = vpop.f32.mrf.mxu0
        %v1146 = vadd.f32 %v589, %v1145
        %1147 = vmatprep.mubr.f32.mxu0 %v263
        %1148 = vmatmul.mubr.f32.gmra.mxu0 %v262
        %v1149 = vpop.f32.mrf.mxu0
        %v1150 = vadd.f32 %v585, %v1149
        %v1151 = vpop.f32.mrf.mxu0
        %v1152 = vadd.f32 %v589, %v1151
        %1153 = vmatprep.mubr.f32.mxu0 %v265
        %1154 = vmatmul.mubr.f32.gmra.mxu0 %v264
        %v1155 = vpop.f32.mrf.mxu0
        %v1156 = vadd.f32 %v585, %v1155
        %v1157 = vpop.f32.mrf.mxu0
        %v1158 = vadd.f32 %v589, %v1157
        %1159 = vmatprep.mubr.f32.mxu0 %v267
        %1160 = vmatmul.mubr.f32.gmra.mxu0 %v266
        %v1161 = vpop.f32.mrf.mxu0
        %v1162 = vadd.f32 %v585, %v1161
        %v1163 = vpop.f32.mrf.mxu0
        %v1164 = vadd.f32 %v589, %v1163
        %1165 = vmatprep.mubr.f32.mxu0 %v269
        %1166 = vmatmul.mubr.f32.gmra.mxu0 %v268
        %v1167 = vpop.f32.mrf.mxu0
        %v1168 = vadd.f32 %v585, %v1167
        %v1169 = vpop.f32.mrf.mxu0
        %v1170 = vadd.f32 %v589, %v1169
        %1171 = vmatprep.mubr.f32.mxu0 %v271
        %1172 = vmatmul.mubr.f32.gmra.mxu0 %v270
        %v1173 = vpop.f32.mrf.mxu0
        %v1174 = vadd.f32 %v585, %v1173
        %v1175 = vpop.f32.mrf.mxu0
        %v1176 = vadd.f32 %v589, %v1175
        %1177 = vmatprep.mubr.f32.mxu0 %v273
        %1178 = vmatmul.mubr.f32.gmra.mxu0 %v272
        %v1179 = vpop.f32.mrf.mxu0
        %v1180 = vadd.f32 %v585, %v1179
        %v1181 = vpop.f32.mrf.mxu0
        %v1182 = vadd.f32 %v589, %v1181
        %1183 = vmatprep.mubr.f32.mxu0 %v275
        %1184 = vmatmul.mubr.f32.gmra.mxu0 %v274
        %v1185 = vpop.f32.mrf.mxu0
        %v1186 = vadd.f32 %v585, %v1185
        %v1187 = vpop.f32.mrf.mxu0
        %v1188 = vadd.f32 %v589, %v1187
        %1189 = vmatprep.mubr.f32.mxu0 %v277
        %1190 = vmatmul.mubr.f32.gmra.mxu0 %v276
        %v1191 = vpop.f32.mrf.mxu0
        %v1192 = vadd.f32 %v585, %v1191
        %v1193 = vpop.f32.mrf.mxu0
        %v1194 = vadd.f32 %v589, %v1193
        %1195 = vmatprep.mubr.f32.mxu0 %v279
        %1196 = vmatmul.mubr.f32.gmra.mxu0 %v278
        %v1197 = vpop.f32.mrf.mxu0
        %v1198 = vadd.f32 %v585, %v1197
        %v1199 = vpop.f32.mrf.mxu0
        %v1200 = vadd.f32 %v589, %v1199
        %1201 = vmatprep.mubr.f32.mxu0 %v281
        %1202 = vmatmul.mubr.f32.gmra.mxu0 %v280
        %v1203 = vpop.f32.mrf.mxu0
        %v1204 = vadd.f32 %v585, %v1203
        %v1205 = vpop.f32.mrf.mxu0
        %v1206 = vadd.f32 %v589, %v1205
        %1207 = vmatprep.mubr.f32.mxu0 %v283
        %1208 = vmatmul.mubr.f32.gmra.mxu0 %v282
        %v1209 = vpop.f32.mrf.mxu0
        %v1210 = vadd.f32 %v585, %v1209
        %v1211 = vpop.f32.mrf.mxu0
        %v1212 = vadd.f32 %v589, %v1211
        %1213 = vmatprep.mubr.f32.mxu0 %v285
        %1214 = vmatmul.mubr.f32.gmra.mxu0 %v284
        %v1215 = vpop.f32.mrf.mxu0
        %v1216 = vadd.f32 %v585, %v1215
        %v1217 = vpop.f32.mrf.mxu0
        %v1218 = vadd.f32 %v589, %v1217
        %1219 = vmatprep.mubr.f32.mxu0 %v287
        %1220 = vmatmul.mubr.f32.gmra.mxu0 %v286
        %v1221 = vpop.f32.mrf.mxu0
        %v1222 = vadd.f32 %v585, %v1221
        %v1223 = vpop.f32.mrf.mxu0
        %v1224 = vadd.f32 %v589, %v1223
        %1225 = vmatprep.mubr.f32.mxu0 %v289
        %1226 = vmatmul.mubr.f32.gmra.mxu0 %v288
        %v1227 = vpop.f32.mrf.mxu0
        %v1228 = vadd.f32 %v585, %v1227
        %v1229 = vpop.f32.mrf.mxu0
        %v1230 = vadd.f32 %v589, %v1229
        %1231 = vmatprep.mubr.f32.mxu0 %v291
        %1232 = vmatmul.mubr.f32.gmra.mxu0 %v290
        %v1233 = vpop.f32.mrf.mxu0
        %v1234 = vadd.f32 %v585, %v1233
        %v1235 = vpop.f32.mrf.mxu0
        %v1236 = vadd.f32 %v589, %v1235
        %1237 = vmatprep.mubr.f32.mxu0 %v293
        %1238 = vmatmul.mubr.f32.gmra.mxu0 %v292
        %v1239 = vpop.f32.mrf.mxu0
        %v1240 = vadd.f32 %v585, %v1239
        %v1241 = vpop.f32.mrf.mxu0
        %v1242 = vadd.f32 %v589, %v1241
        %1243 = vmatprep.mubr.f32.mxu0 %v295
        %1244 = vmatmul.mubr.f32.gmra.mxu0 %v294
        %v1245 = vpop.f32.mrf.mxu0
        %v1246 = vadd.f32 %v585, %v1245
        %v1247 = vpop.f32.mrf.mxu0
        %v1248 = vadd.f32 %v589, %v1247
        %1249 = vmatprep.mubr.f32.mxu0 %v297
        %1250 = vmatmul.mubr.f32.gmra.mxu0 %v296
        %v1251 = vpop.f32.mrf.mxu0
        %v1252 = vadd.f32 %v585, %v1251
        %v1253 = vpop.f32.mrf.mxu0
        %v1254 = vadd.f32 %v589, %v1253
        %1255 = vmatprep.mubr.f32.mxu0 %v299
        %1256 = vmatmul.mubr.f32.gmra.mxu0 %v298
        %v1257 = vpop.f32.mrf.mxu0
        %v1258 = vadd.f32 %v585, %v1257
        %v1259 = vpop.f32.mrf.mxu0
        %v1260 = vadd.f32 %v589, %v1259
        %1261 = vmatprep.mubr.f32.mxu0 %v301
        %1262 = vmatmul.mubr.f32.gmra.mxu0 %v300
        %v1263 = vpop.f32.mrf.mxu0
        %v1264 = vadd.f32 %v585, %v1263
        %v1265 = vpop.f32.mrf.mxu0
        %v1266 = vadd.f32 %v589, %v1265
        %1267 = vmatprep.mubr.f32.mxu0 %v303
        %1268 = vmatmul.mubr.f32.gmra.mxu0 %v302
        %v1269 = vpop.f32.mrf.mxu0
        %v1270 = vadd.f32 %v585, %v1269
        %v1271 = vpop.f32.mrf.mxu0
        %v1272 = vadd.f32 %v589, %v1271
        %1273 = vmatprep.mubr.f32.mxu0 %v305
        %1274 = vmatmul.mubr.f32.gmra.mxu0 %v304
        %v1275 = vpop.f32.mrf.mxu0
        %v1276 = vadd.f32 %v585, %v1275
        %v1277 = vpop.f32.mrf.mxu0
        %v1278 = vadd.f32 %v589, %v1277
        %1279 = vmatprep.mubr.f32.mxu0 %v307
        %1280 = vmatmul.mubr.f32.gmra.mxu0 %v306
        %v1281 = vpop.f32.mrf.mxu0
        %v1282 = vadd.f32 %v585, %v1281
        %v1283 = vpop.f32.mrf.mxu0
        %v1284 = vadd.f32 %v589, %v1283
        %1285 = vmatprep.mubr.f32.mxu0 %v309
        %1286 = vmatmul.mubr.f32.gmra.mxu0 %v308
        %v1287 = vpop.f32.mrf.mxu0
        %v1288 = vadd.f32 %v585, %v1287
        %v1289 = vpop.f32.mrf.mxu0
        %v1290 = vadd.f32 %v589, %v1289
        %1291 = vmatprep.mubr.f32.mxu0 %v311
        %1292 = vmatmul.mubr.f32.gmra.mxu0 %v310
        %v1293 = vpop.f32.mrf.mxu0
        %v1294 = vadd.f32 %v585, %v1293
        %v1295 = vpop.f32.mrf.mxu0
        %v1296 = vadd.f32 %v589, %v1295
        %1297 = vmatprep.mubr.f32.mxu0 %v313
        %1298 = vmatmul.mubr.f32.gmra.mxu0 %v312
        %v1299 = vpop.f32.mrf.mxu0
        %v1300 = vadd.f32 %v585, %v1299
        %v1301 = vpop.f32.mrf.mxu0
        %v1302 = vadd.f32 %v589, %v1301
        %1303 = vmatprep.mubr.f32.mxu0 %v315
        %1304 = vmatmul.mubr.f32.gmra.mxu0 %v314
        %v1305 = vpop.f32.mrf.mxu0
        %v1306 = vadd.f32 %v585, %v1305
        %v1307 = vpop.f32.mrf.mxu0
        %v1308 = vadd.f32 %v589, %v1307
        %1309 = vmatprep.mubr.f32.mxu0 %v317
        %1310 = vmatmul.mubr.f32.gmra.mxu0 %v316
        %v1311 = vpop.f32.mrf.mxu0
        %v1312 = vadd.f32 %v585, %v1311
        %v1313 = vpop.f32.mrf.mxu0
        %v1314 = vadd.f32 %v589, %v1313
        %1315 = vmatprep.mubr.f32.mxu0 %v319
        %1316 = vmatmul.mubr.f32.gmra.mxu0 %v318
        %v1317 = vpop.f32.mrf.mxu0
        %v1318 = vadd.f32 %v585, %v1317
        %v1319 = vpop.f32.mrf.mxu0
        %v1320 = vadd.f32 %v589, %v1319
        %1321 = vmatprep.mubr.f32.mxu0 %v321
        %1322 = vmatmul.mubr.f32.gmra.mxu0 %v320
        %v1323 = vpop.f32.mrf.mxu0
        %v1324 = vadd.f32 %v585, %v1323
        %v1325 = vpop.f32.mrf.mxu0
        %v1326 = vadd.f32 %v589, %v1325
        %1327 = vmatprep.mubr.f32.mxu0 %v323
        %1328 = vmatmul.mubr.f32.gmra.mxu0 %v322
        %v1329 = vpop.f32.mrf.mxu0
        %v1330 = vadd.f32 %v585, %v1329
        %v1331 = vpop.f32.mrf.mxu0
        %v1332 = vadd.f32 %v589, %v1331
        %1333 = vmatprep.mubr.f32.mxu0 %v325
        %1334 = vmatmul.mubr.f32.gmra.mxu0 %v324
        %v1335 = vpop.f32.mrf.mxu0
        %v1336 = vadd.f32 %v585, %v1335
        %v1337 = vpop.f32.mrf.mxu0
        %v1338 = vadd.f32 %v589, %v1337
        %1339 = vmatprep.mubr.f32.mxu0 %v327
        %1340 = vmatmul.mubr.f32.gmra.mxu0 %v326
        %v1341 = vpop.f32.mrf.mxu0
        %v1342 = vadd.f32 %v585, %v1341
        %v1343 = vpop.f32.mrf.mxu0
        %v1344 = vadd.f32 %v589, %v1343
        %1345 = vmatprep.mubr.f32.mxu0 %v329
        %1346 = vmatmul.mubr.f32.gmra.mxu0 %v328
        %v1347 = vpop.f32.mrf.mxu0
        %v1348 = vadd.f32 %v585, %v1347
        %v1349 = vpop.f32.mrf.mxu0
        %v1350 = vadd.f32 %v589, %v1349
        %1351 = vmatprep.mubr.f32.mxu0 %v331
        %1352 = vmatmul.mubr.f32.gmra.mxu0 %v330
        %v1353 = vpop.f32.mrf.mxu0
        %v1354 = vadd.f32 %v585, %v1353
        %v1355 = vpop.f32.mrf.mxu0
        %v1356 = vadd.f32 %v589, %v1355
        %1357 = vmatprep.mubr.f32.mxu0 %v333
        %1358 = vmatmul.mubr.f32.gmra.mxu0 %v332
        %v1359 = vpop.f32.mrf.mxu0
        %v1360 = vadd.f32 %v585, %v1359
        %v1361 = vpop.f32.mrf.mxu0
        %v1362 = vadd.f32 %v589, %v1361
        %1363 = vmatprep.mubr.f32.mxu0 %v335
        %1364 = vmatmul.mubr.f32.gmra.mxu0 %v334
        %v1365 = vpop.f32.mrf.mxu0
        %v1366 = vadd.f32 %v585, %v1365
        %v1367 = vpop.f32.mrf.mxu0
        %v1368 = vadd.f32 %v589, %v1367
        %1369 = vmatprep.mubr.f32.mxu0 %v337
        %1370 = vmatmul.mubr.f32.gmra.mxu0 %v336
        %v1371 = vpop.f32.mrf.mxu0
        %v1372 = vadd.f32 %v585, %v1371
        %v1373 = vpop.f32.mrf.mxu0
        %v1374 = vadd.f32 %v589, %v1373
        %1375 = vmatprep.mubr.f32.mxu0 %v339
        %1376 = vmatmul.mubr.f32.gmra.mxu0 %v338
        %v1377 = vpop.f32.mrf.mxu0
        %v1378 = vadd.f32 %v585, %v1377
        %v1379 = vpop.f32.mrf.mxu0
        %v1380 = vadd.f32 %v589, %v1379
        %1381 = vmatprep.mubr.f32.mxu0 %v341
        %1382 = vmatmul.mubr.f32.gmra.mxu0 %v340
        %v1383 = vpop.f32.mrf.mxu0
        %v1384 = vadd.f32 %v585, %v1383
        %v1385 = vpop.f32.mrf.mxu0
        %v1386 = vadd.f32 %v589, %v1385
        %1387 = vmatprep.mubr.f32.mxu0 %v343
        %1388 = vmatmul.mubr.f32.gmra.mxu0 %v342
        %v1389 = vpop.f32.mrf.mxu0
        %v1390 = vadd.f32 %v585, %v1389
        %v1391 = vpop.f32.mrf.mxu0
        %v1392 = vadd.f32 %v589, %v1391
        %1393 = vmatprep.mubr.f32.mxu0 %v345
        %1394 = vmatmul.mubr.f32.gmra.mxu0 %v344
        %v1395 = vpop.f32.mrf.mxu0
        %v1396 = vadd.f32 %v585, %v1395
        %v1397 = vpop.f32.mrf.mxu0
        %v1398 = vadd.f32 %v589, %v1397
        %1399 = vmatprep.mubr.f32.mxu0 %v347
        %1400 = vmatmul.mubr.f32.gmra.mxu0 %v346
        %v1401 = vpop.f32.mrf.mxu0
        %v1402 = vadd.f32 %v585, %v1401
        %v1403 = vpop.f32.mrf.mxu0
        %v1404 = vadd.f32 %v589, %v1403
        %1405 = vmatprep.mubr.f32.mxu0 %v349
        %1406 = vmatmul.mubr.f32.gmra.mxu0 %v348
        %v1407 = vpop.f32.mrf.mxu0
        %v1408 = vadd.f32 %v585, %v1407
        %v1409 = vpop.f32.mrf.mxu0
        %v1410 = vadd.f32 %v589, %v1409
        %1411 = vmatprep.mubr.f32.mxu0 %v351
        %1412 = vmatmul.mubr.f32.gmra.mxu0 %v350
        %v1413 = vpop.f32.mrf.mxu0
        %v1414 = vadd.f32 %v585, %v1413
        %v1415 = vpop.f32.mrf.mxu0
        %v1416 = vadd.f32 %v589, %v1415
        %1417 = vmatprep.mubr.f32.mxu0 %v353
        %1418 = vmatmul.mubr.f32.gmra.mxu0 %v352
        %v1419 = vpop.f32.mrf.mxu0
        %v1420 = vadd.f32 %v585, %v1419
        %v1421 = vpop.f32.mrf.mxu0
        %v1422 = vadd.f32 %v589, %v1421
        %1423 = vmatprep.mubr.f32.mxu0 %v355
        %1424 = vmatmul.mubr.f32.gmra.mxu0 %v354
        %v1425 = vpop.f32.mrf.mxu0
        %v1426 = vadd.f32 %v585, %v1425
        %v1427 = vpop.f32.mrf.mxu0
        %v1428 = vadd.f32 %v589, %v1427
        %1429 = vmatprep.mubr.f32.mxu0 %v357
        %1430 = vmatmul.mubr.f32.gmra.mxu0 %v356
        %v1431 = vpop.f32.mrf.mxu0
        %v1432 = vadd.f32 %v585, %v1431
        %v1433 = vpop.f32.mrf.mxu0
        %v1434 = vadd.f32 %v589, %v1433
        %1435 = vmatprep.mubr.f32.mxu0 %v359
        %1436 = vmatmul.mubr.f32.gmra.mxu0 %v358
        %v1437 = vpop.f32.mrf.mxu0
        %v1438 = vadd.f32 %v585, %v1437
        %v1439 = vpop.f32.mrf.mxu0
        %v1440 = vadd.f32 %v589, %v1439
        %1441 = vmatprep.mubr.f32.mxu0 %v361
        %1442 = vmatmul.mubr.f32.gmra.mxu0 %v360
        %v1443 = vpop.f32.mrf.mxu0
        %v1444 = vadd.f32 %v585, %v1443
        %v1445 = vpop.f32.mrf.mxu0
        %v1446 = vadd.f32 %v589, %v1445
        %1447 = vmatprep.mubr.f32.mxu0 %v363
        %1448 = vmatmul.mubr.f32.gmra.mxu0 %v362
        %v1449 = vpop.f32.mrf.mxu0
        %v1450 = vadd.f32 %v585, %v1449
        %v1451 = vpop.f32.mrf.mxu0
        %v1452 = vadd.f32 %v589, %v1451
        %1453 = vmatprep.mubr.f32.mxu0 %v365
        %1454 = vmatmul.mubr.f32.gmra.mxu0 %v364
        %v1455 = vpop.f32.mrf.mxu0
        %v1456 = vadd.f32 %v585, %v1455
        %v1457 = vpop.f32.mrf.mxu0
        %v1458 = vadd.f32 %v589, %v1457
        %1459 = vmatprep.mubr.f32.mxu0 %v367
        %1460 = vmatmul.mubr.f32.gmra.mxu0 %v366
        %v1461 = vpop.f32.mrf.mxu0
        %v1462 = vadd.f32 %v585, %v1461
        %v1463 = vpop.f32.mrf.mxu0
        %v1464 = vadd.f32 %v589, %v1463
        %1465 = vmatprep.mubr.f32.mxu0 %v369
        %1466 = vmatmul.mubr.f32.gmra.mxu0 %v368
        %v1467 = vpop.f32.mrf.mxu0
        %v1468 = vadd.f32 %v585, %v1467
        %v1469 = vpop.f32.mrf.mxu0
        %v1470 = vadd.f32 %v589, %v1469
        %1471 = vmatprep.mubr.f32.mxu0 %v371
        %1472 = vmatmul.mubr.f32.gmra.mxu0 %v370
        %v1473 = vpop.f32.mrf.mxu0
        %v1474 = vadd.f32 %v585, %v1473
        %v1475 = vpop.f32.mrf.mxu0
        %v1476 = vadd.f32 %v589, %v1475
        %1477 = vmatprep.mubr.f32.mxu0 %v373
        %1478 = vmatmul.mubr.f32.gmra.mxu0 %v372
        %v1479 = vpop.f32.mrf.mxu0
        %v1480 = vadd.f32 %v585, %v1479
        %v1481 = vpop.f32.mrf.mxu0
        %v1482 = vadd.f32 %v589, %v1481
        %1483 = vmatprep.mubr.f32.mxu0 %v375
        %1484 = vmatmul.mubr.f32.gmra.mxu0 %v374
        %v1485 = vpop.f32.mrf.mxu0
        %v1486 = vadd.f32 %v585, %v1485
        %v1487 = vpop.f32.mrf.mxu0
        %v1488 = vadd.f32 %v589, %v1487
        %1489 = vmatprep.mubr.f32.mxu0 %v377
        %1490 = vmatmul.mubr.f32.gmra.mxu0 %v376
        %v1491 = vpop.f32.mrf.mxu0
        %v1492 = vadd.f32 %v585, %v1491
        %v1493 = vpop.f32.mrf.mxu0
        %v1494 = vadd.f32 %v589, %v1493
        %1495 = vmatprep.mubr.f32.mxu0 %v379
        %1496 = vmatmul.mubr.f32.gmra.mxu0 %v378
        %v1497 = vpop.f32.mrf.mxu0
        %v1498 = vadd.f32 %v585, %v1497
        %v1499 = vpop.f32.mrf.mxu0
        %v1500 = vadd.f32 %v589, %v1499
        %1501 = vdwg.mxu0
        %1502 = vmatprep.subr.mxu0 %v475
        %1503 = vmatpush1.msra.mxu0 %v474
        %1504 = vmatprep.subr.mxu0 %v469
        %1505 = vmatpush1.msra.mxu0 %v468
        %1506 = vmatprep.subr.mxu0 %v463
        %1507 = vmatpush1.msra.mxu0 %v462
        %1508 = vmatprep.subr.mxu0 %v457
        %1509 = vmatpush1.msra.mxu0 %v456
        %1510 = vmatprep.subr.mxu0 %v451
        %1511 = vmatpush1.msra.mxu0 %v450
        %1512 = vmatprep.subr.mxu0 %v445
        %1513 = vmatpush1.msra.mxu0 %v444
        %1514 = vmatprep.subr.mxu0 %v439
        %1515 = vmatpush1.msra.mxu0 %v438
        %1516 = vmatprep.subr.mxu0 %v433
        %1517 = vmatpush1.msra.mxu0 %v432
        %1518 = vmatprep.subr.mxu0 %v427
        %1519 = vmatpush1.msra.mxu0 %v426
        %1520 = vmatprep.subr.mxu0 %v421
        %1521 = vmatpush1.msra.mxu0 %v420
        %1522 = vmatprep.subr.mxu0 %v415
        %1523 = vmatpush1.msra.mxu0 %v414
        %1524 = vmatprep.subr.mxu0 %v409
        %1525 = vmatpush1.msra.mxu0 %v408
        %1526 = vmatprep.subr.mxu0 %v403
        %1527 = vmatpush1.msra.mxu0 %v402
        %1528 = vmatprep.subr.mxu0 %v397
        %1529 = vmatpush1.msra.mxu0 %v396
        %1530 = vmatprep.subr.mxu0 %v391
        %1531 = vmatpush1.msra.mxu0 %v390
        %1532 = vmatprep.subr.mxu0 %v385
        %1533 = vmatpush1.msra.mxu0 %v384
        %1534 = vmatprep.subr.mxu0 %v571
        %1535 = vmatpush2.msra.mxu0 %v570
        %1536 = vmatprep.subr.mxu0 %v565
        %1537 = vmatpush2.msra.mxu0 %v564
        %1538 = vmatprep.subr.mxu0 %v559
        %1539 = vmatpush2.msra.mxu0 %v558
        %1540 = vmatprep.subr.mxu0 %v553
        %1541 = vmatpush2.msra.mxu0 %v552
        %1542 = vmatprep.subr.mxu0 %v547
        %1543 = vmatpush2.msra.mxu0 %v546
        %1544 = vmatprep.subr.mxu0 %v541
        %1545 = vmatpush2.msra.mxu0 %v540
        %1546 = vmatprep.subr.mxu0 %v535
        %1547 = vmatpush2.msra.mxu0 %v534
        %1548 = vmatprep.subr.mxu0 %v529
        %1549 = vmatpush2.msra.mxu0 %v528
        %1550 = vmatprep.subr.mxu0 %v523
        %1551 = vmatpush2.msra.mxu0 %v522
        %1552 = vmatprep.subr.mxu0 %v517
        %1553 = vmatpush2.msra.mxu0 %v516
        %1554 = vmatprep.subr.mxu0 %v511
        %1555 = vmatpush2.msra.mxu0 %v510
        %1556 = vmatprep.subr.mxu0 %v505
        %1557 = vmatpush2.msra.mxu0 %v504
        %1558 = vmatprep.subr.mxu0 %v499
        %1559 = vmatpush2.msra.mxu0 %v498
        %1560 = vmatprep.subr.mxu0 %v493
        %1561 = vmatpush2.msra.mxu0 %v492
        %1562 = vmatprep.subr.mxu0 %v487
        %1563 = vmatpush2.msra.mxu0 %v486
        %1564 = vmatprep.subr.mxu0 %v481
        %1565 = vmatpush2.msra.mxu0 %v480
        %1566 = vmatprep.mubr.f32.mxu0 %v253
        %1567 = vmatmul.mubr.f32.gmra.mxu0 %v252
        %v1568 = vpop.f32.mrf.mxu0
        %v1569 = vadd.f32 %v593, %v1568
        %v1570 = vpop.f32.mrf.mxu0
        %v1571 = vadd.f32 %v597, %v1570
        %1572 = vmatprep.mubr.f32.mxu0 %v255
        %1573 = vmatmul.mubr.f32.gmra.mxu0 %v254
        %v1574 = vpop.f32.mrf.mxu0
        %v1575 = vadd.f32 %v593, %v1574
        %v1576 = vpop.f32.mrf.mxu0
        %v1577 = vadd.f32 %v597, %v1576
        %1578 = vmatprep.mubr.f32.mxu0 %v257
        %1579 = vmatmul.mubr.f32.gmra.mxu0 %v256
        %v1580 = vpop.f32.mrf.mxu0
        %v1581 = vadd.f32 %v593, %v1580
        %v1582 = vpop.f32.mrf.mxu0
        %v1583 = vadd.f32 %v597, %v1582
        %1584 = vmatprep.mubr.f32.mxu0 %v259
        %1585 = vmatmul.mubr.f32.gmra.mxu0 %v258
        %v1586 = vpop.f32.mrf.mxu0
        %v1587 = vadd.f32 %v593, %v1586
        %v1588 = vpop.f32.mrf.mxu0
        %v1589 = vadd.f32 %v597, %v1588
        %1590 = vmatprep.mubr.f32.mxu0 %v261
        %1591 = vmatmul.mubr.f32.gmra.mxu0 %v260
        %v1592 = vpop.f32.mrf.mxu0
        %v1593 = vadd.f32 %v593, %v1592
        %v1594 = vpop.f32.mrf.mxu0
        %v1595 = vadd.f32 %v597, %v1594
        %1596 = vmatprep.mubr.f32.mxu0 %v263
        %1597 = vmatmul.mubr.f32.gmra.mxu0 %v262
        %v1598 = vpop.f32.mrf.mxu0
        %v1599 = vadd.f32 %v593, %v1598
        %v1600 = vpop.f32.mrf.mxu0
        %v1601 = vadd.f32 %v597, %v1600
        %1602 = vmatprep.mubr.f32.mxu0 %v265
        %1603 = vmatmul.mubr.f32.gmra.mxu0 %v264
        %v1604 = vpop.f32.mrf.mxu0
        %v1605 = vadd.f32 %v593, %v1604
        %v1606 = vpop.f32.mrf.mxu0
        %v1607 = vadd.f32 %v597, %v1606
        %1608 = vmatprep.mubr.f32.mxu0 %v267
        %1609 = vmatmul.mubr.f32.gmra.mxu0 %v266
        %v1610 = vpop.f32.mrf.mxu0
        %v1611 = vadd.f32 %v593, %v1610
        %v1612 = vpop.f32.mrf.mxu0
        %v1613 = vadd.f32 %v597, %v1612
        %1614 = vmatprep.mubr.f32.mxu0 %v269
        %1615 = vmatmul.mubr.f32.gmra.mxu0 %v268
        %v1616 = vpop.f32.mrf.mxu0
        %v1617 = vadd.f32 %v593, %v1616
        %v1618 = vpop.f32.mrf.mxu0
        %v1619 = vadd.f32 %v597, %v1618
        %1620 = vmatprep.mubr.f32.mxu0 %v271
        %1621 = vmatmul.mubr.f32.gmra.mxu0 %v270
        %v1622 = vpop.f32.mrf.mxu0
        %v1623 = vadd.f32 %v593, %v1622
        %v1624 = vpop.f32.mrf.mxu0
        %v1625 = vadd.f32 %v597, %v1624
        %1626 = vmatprep.mubr.f32.mxu0 %v273
        %1627 = vmatmul.mubr.f32.gmra.mxu0 %v272
        %v1628 = vpop.f32.mrf.mxu0
        %v1629 = vadd.f32 %v593, %v1628
        %v1630 = vpop.f32.mrf.mxu0
        %v1631 = vadd.f32 %v597, %v1630
        %1632 = vmatprep.mubr.f32.mxu0 %v275
        %1633 = vmatmul.mubr.f32.gmra.mxu0 %v274
        %v1634 = vpop.f32.mrf.mxu0
        %v1635 = vadd.f32 %v593, %v1634
        %v1636 = vpop.f32.mrf.mxu0
        %v1637 = vadd.f32 %v597, %v1636
        %1638 = vmatprep.mubr.f32.mxu0 %v277
        %1639 = vmatmul.mubr.f32.gmra.mxu0 %v276
        %v1640 = vpop.f32.mrf.mxu0
        %v1641 = vadd.f32 %v593, %v1640
        %v1642 = vpop.f32.mrf.mxu0
        %v1643 = vadd.f32 %v597, %v1642
        %1644 = vmatprep.mubr.f32.mxu0 %v279
        %1645 = vmatmul.mubr.f32.gmra.mxu0 %v278
        %v1646 = vpop.f32.mrf.mxu0
        %v1647 = vadd.f32 %v593, %v1646
        %v1648 = vpop.f32.mrf.mxu0
        %v1649 = vadd.f32 %v597, %v1648
        %1650 = vmatprep.mubr.f32.mxu0 %v281
        %1651 = vmatmul.mubr.f32.gmra.mxu0 %v280
        %v1652 = vpop.f32.mrf.mxu0
        %v1653 = vadd.f32 %v593, %v1652
        %v1654 = vpop.f32.mrf.mxu0
        %v1655 = vadd.f32 %v597, %v1654
        %1656 = vmatprep.mubr.f32.mxu0 %v283
        %1657 = vmatmul.mubr.f32.gmra.mxu0 %v282
        %v1658 = vpop.f32.mrf.mxu0
        %v1659 = vadd.f32 %v593, %v1658
        %v1660 = vpop.f32.mrf.mxu0
        %v1661 = vadd.f32 %v597, %v1660
        %1662 = vmatprep.mubr.f32.mxu0 %v285
        %1663 = vmatmul.mubr.f32.gmra.mxu0 %v284
        %v1664 = vpop.f32.mrf.mxu0
        %v1665 = vadd.f32 %v593, %v1664
        %v1666 = vpop.f32.mrf.mxu0
        %v1667 = vadd.f32 %v597, %v1666
        %1668 = vmatprep.mubr.f32.mxu0 %v287
        %1669 = vmatmul.mubr.f32.gmra.mxu0 %v286
        %v1670 = vpop.f32.mrf.mxu0
        %v1671 = vadd.f32 %v593, %v1670
        %v1672 = vpop.f32.mrf.mxu0
        %v1673 = vadd.f32 %v597, %v1672
        %1674 = vmatprep.mubr.f32.mxu0 %v289
        %1675 = vmatmul.mubr.f32.gmra.mxu0 %v288
        %v1676 = vpop.f32.mrf.mxu0
        %v1677 = vadd.f32 %v593, %v1676
        %v1678 = vpop.f32.mrf.mxu0
        %v1679 = vadd.f32 %v597, %v1678
        %1680 = vmatprep.mubr.f32.mxu0 %v291
        %1681 = vmatmul.mubr.f32.gmra.mxu0 %v290
        %v1682 = vpop.f32.mrf.mxu0
        %v1683 = vadd.f32 %v593, %v1682
        %v1684 = vpop.f32.mrf.mxu0
        %v1685 = vadd.f32 %v597, %v1684
        %1686 = vmatprep.mubr.f32.mxu0 %v293
        %1687 = vmatmul.mubr.f32.gmra.mxu0 %v292
        %v1688 = vpop.f32.mrf.mxu0
        %v1689 = vadd.f32 %v593, %v1688
        %v1690 = vpop.f32.mrf.mxu0
        %v1691 = vadd.f32 %v597, %v1690
        %1692 = vmatprep.mubr.f32.mxu0 %v295
        %1693 = vmatmul.mubr.f32.gmra.mxu0 %v294
        %v1694 = vpop.f32.mrf.mxu0
        %v1695 = vadd.f32 %v593, %v1694
        %v1696 = vpop.f32.mrf.mxu0
        %v1697 = vadd.f32 %v597, %v1696
        %1698 = vmatprep.mubr.f32.mxu0 %v297
        %1699 = vmatmul.mubr.f32.gmra.mxu0 %v296
        %v1700 = vpop.f32.mrf.mxu0
        %v1701 = vadd.f32 %v593, %v1700
        %v1702 = vpop.f32.mrf.mxu0
        %v1703 = vadd.f32 %v597, %v1702
        %1704 = vmatprep.mubr.f32.mxu0 %v299
        %1705 = vmatmul.mubr.f32.gmra.mxu0 %v298
        %v1706 = vpop.f32.mrf.mxu0
        %v1707 = vadd.f32 %v593, %v1706
        %v1708 = vpop.f32.mrf.mxu0
        %v1709 = vadd.f32 %v597, %v1708
        %1710 = vmatprep.mubr.f32.mxu0 %v301
        %1711 = vmatmul.mubr.f32.gmra.mxu0 %v300
        %v1712 = vpop.f32.mrf.mxu0
        %v1713 = vadd.f32 %v593, %v1712
        %v1714 = vpop.f32.mrf.mxu0
        %v1715 = vadd.f32 %v597, %v1714
        %1716 = vmatprep.mubr.f32.mxu0 %v303
        %1717 = vmatmul.mubr.f32.gmra.mxu0 %v302
        %v1718 = vpop.f32.mrf.mxu0
        %v1719 = vadd.f32 %v593, %v1718
        %v1720 = vpop.f32.mrf.mxu0
        %v1721 = vadd.f32 %v597, %v1720
        %1722 = vmatprep.mubr.f32.mxu0 %v305
        %1723 = vmatmul.mubr.f32.gmra.mxu0 %v304
        %v1724 = vpop.f32.mrf.mxu0
        %v1725 = vadd.f32 %v593, %v1724
        %v1726 = vpop.f32.mrf.mxu0
        %v1727 = vadd.f32 %v597, %v1726
        %1728 = vmatprep.mubr.f32.mxu0 %v307
        %1729 = vmatmul.mubr.f32.gmra.mxu0 %v306
        %v1730 = vpop.f32.mrf.mxu0
        %v1731 = vadd.f32 %v593, %v1730
        %v1732 = vpop.f32.mrf.mxu0
        %v1733 = vadd.f32 %v597, %v1732
        %1734 = vmatprep.mubr.f32.mxu0 %v309
        %1735 = vmatmul.mubr.f32.gmra.mxu0 %v308
        %v1736 = vpop.f32.mrf.mxu0
        %v1737 = vadd.f32 %v593, %v1736
        %v1738 = vpop.f32.mrf.mxu0
        %v1739 = vadd.f32 %v597, %v1738
        %1740 = vmatprep.mubr.f32.mxu0 %v311
        %1741 = vmatmul.mubr.f32.gmra.mxu0 %v310
        %v1742 = vpop.f32.mrf.mxu0
        %v1743 = vadd.f32 %v593, %v1742
        %v1744 = vpop.f32.mrf.mxu0
        %v1745 = vadd.f32 %v597, %v1744
        %1746 = vmatprep.mubr.f32.mxu0 %v313
        %1747 = vmatmul.mubr.f32.gmra.mxu0 %v312
        %v1748 = vpop.f32.mrf.mxu0
        %v1749 = vadd.f32 %v593, %v1748
        %v1750 = vpop.f32.mrf.mxu0
        %v1751 = vadd.f32 %v597, %v1750
        %1752 = vmatprep.mubr.f32.mxu0 %v315
        %1753 = vmatmul.mubr.f32.gmra.mxu0 %v314
        %v1754 = vpop.f32.mrf.mxu0
        %v1755 = vadd.f32 %v593, %v1754
        %v1756 = vpop.f32.mrf.mxu0
        %v1757 = vadd.f32 %v597, %v1756
        %1758 = vmatprep.mubr.f32.mxu0 %v317
        %1759 = vmatmul.mubr.f32.gmra.mxu0 %v316
        %v1760 = vpop.f32.mrf.mxu0
        %v1761 = vadd.f32 %v593, %v1760
        %v1762 = vpop.f32.mrf.mxu0
        %v1763 = vadd.f32 %v597, %v1762
        %1764 = vmatprep.mubr.f32.mxu0 %v319
        %1765 = vmatmul.mubr.f32.gmra.mxu0 %v318
        %v1766 = vpop.f32.mrf.mxu0
        %v1767 = vadd.f32 %v593, %v1766
        %v1768 = vpop.f32.mrf.mxu0
        %v1769 = vadd.f32 %v597, %v1768
        %1770 = vmatprep.mubr.f32.mxu0 %v321
        %1771 = vmatmul.mubr.f32.gmra.mxu0 %v320
        %v1772 = vpop.f32.mrf.mxu0
        %v1773 = vadd.f32 %v593, %v1772
        %v1774 = vpop.f32.mrf.mxu0
        %v1775 = vadd.f32 %v597, %v1774
        %1776 = vmatprep.mubr.f32.mxu0 %v323
        %1777 = vmatmul.mubr.f32.gmra.mxu0 %v322
        %v1778 = vpop.f32.mrf.mxu0
        %v1779 = vadd.f32 %v593, %v1778
        %v1780 = vpop.f32.mrf.mxu0
        %v1781 = vadd.f32 %v597, %v1780
        %1782 = vmatprep.mubr.f32.mxu0 %v325
        %1783 = vmatmul.mubr.f32.gmra.mxu0 %v324
        %v1784 = vpop.f32.mrf.mxu0
        %v1785 = vadd.f32 %v593, %v1784
        %v1786 = vpop.f32.mrf.mxu0
        %v1787 = vadd.f32 %v597, %v1786
        %1788 = vmatprep.mubr.f32.mxu0 %v327
        %1789 = vmatmul.mubr.f32.gmra.mxu0 %v326
        %v1790 = vpop.f32.mrf.mxu0
        %v1791 = vadd.f32 %v593, %v1790
        %v1792 = vpop.f32.mrf.mxu0
        %v1793 = vadd.f32 %v597, %v1792
        %1794 = vmatprep.mubr.f32.mxu0 %v329
        %1795 = vmatmul.mubr.f32.gmra.mxu0 %v328
        %v1796 = vpop.f32.mrf.mxu0
        %v1797 = vadd.f32 %v593, %v1796
        %v1798 = vpop.f32.mrf.mxu0
        %v1799 = vadd.f32 %v597, %v1798
        %1800 = vmatprep.mubr.f32.mxu0 %v331
        %1801 = vmatmul.mubr.f32.gmra.mxu0 %v330
        %v1802 = vpop.f32.mrf.mxu0
        %v1803 = vadd.f32 %v593, %v1802
        %v1804 = vpop.f32.mrf.mxu0
        %v1805 = vadd.f32 %v597, %v1804
        %1806 = vmatprep.mubr.f32.mxu0 %v333
        %1807 = vmatmul.mubr.f32.gmra.mxu0 %v332
        %v1808 = vpop.f32.mrf.mxu0
        %v1809 = vadd.f32 %v593, %v1808
        %v1810 = vpop.f32.mrf.mxu0
        %v1811 = vadd.f32 %v597, %v1810
        %1812 = vmatprep.mubr.f32.mxu0 %v335
        %1813 = vmatmul.mubr.f32.gmra.mxu0 %v334
        %v1814 = vpop.f32.mrf.mxu0
        %v1815 = vadd.f32 %v593, %v1814
        %v1816 = vpop.f32.mrf.mxu0
        %v1817 = vadd.f32 %v597, %v1816
        %1818 = vmatprep.mubr.f32.mxu0 %v337
        %1819 = vmatmul.mubr.f32.gmra.mxu0 %v336
        %v1820 = vpop.f32.mrf.mxu0
        %v1821 = vadd.f32 %v593, %v1820
        %v1822 = vpop.f32.mrf.mxu0
        %v1823 = vadd.f32 %v597, %v1822
        %1824 = vmatprep.mubr.f32.mxu0 %v339
        %1825 = vmatmul.mubr.f32.gmra.mxu0 %v338
        %v1826 = vpop.f32.mrf.mxu0
        %v1827 = vadd.f32 %v593, %v1826
        %v1828 = vpop.f32.mrf.mxu0
        %v1829 = vadd.f32 %v597, %v1828
        %1830 = vmatprep.mubr.f32.mxu0 %v341
        %1831 = vmatmul.mubr.f32.gmra.mxu0 %v340
        %v1832 = vpop.f32.mrf.mxu0
        %v1833 = vadd.f32 %v593, %v1832
        %v1834 = vpop.f32.mrf.mxu0
        %v1835 = vadd.f32 %v597, %v1834
        %1836 = vmatprep.mubr.f32.mxu0 %v343
        %1837 = vmatmul.mubr.f32.gmra.mxu0 %v342
        %v1838 = vpop.f32.mrf.mxu0
        %v1839 = vadd.f32 %v593, %v1838
        %v1840 = vpop.f32.mrf.mxu0
        %v1841 = vadd.f32 %v597, %v1840
        %1842 = vmatprep.mubr.f32.mxu0 %v345
        %1843 = vmatmul.mubr.f32.gmra.mxu0 %v344
        %v1844 = vpop.f32.mrf.mxu0
        %v1845 = vadd.f32 %v593, %v1844
        %v1846 = vpop.f32.mrf.mxu0
        %v1847 = vadd.f32 %v597, %v1846
        %1848 = vmatprep.mubr.f32.mxu0 %v347
        %1849 = vmatmul.mubr.f32.gmra.mxu0 %v346
        %v1850 = vpop.f32.mrf.mxu0
        %v1851 = vadd.f32 %v593, %v1850
        %v1852 = vpop.f32.mrf.mxu0
        %v1853 = vadd.f32 %v597, %v1852
        %1854 = vmatprep.mubr.f32.mxu0 %v349
        %1855 = vmatmul.mubr.f32.gmra.mxu0 %v348
        %v1856 = vpop.f32.mrf.mxu0
        %v1857 = vadd.f32 %v593, %v1856
        %v1858 = vpop.f32.mrf.mxu0
        %v1859 = vadd.f32 %v597, %v1858
        %1860 = vmatprep.mubr.f32.mxu0 %v351
        %1861 = vmatmul.mubr.f32.gmra.mxu0 %v350
        %v1862 = vpop.f32.mrf.mxu0
        %v1863 = vadd.f32 %v593, %v1862
        %v1864 = vpop.f32.mrf.mxu0
        %v1865 = vadd.f32 %v597, %v1864
        %1866 = vmatprep.mubr.f32.mxu0 %v353
        %1867 = vmatmul.mubr.f32.gmra.mxu0 %v352
        %v1868 = vpop.f32.mrf.mxu0
        %v1869 = vadd.f32 %v593, %v1868
        %v1870 = vpop.f32.mrf.mxu0
        %v1871 = vadd.f32 %v597, %v1870
        %1872 = vmatprep.mubr.f32.mxu0 %v355
        %1873 = vmatmul.mubr.f32.gmra.mxu0 %v354
        %v1874 = vpop.f32.mrf.mxu0
        %v1875 = vadd.f32 %v593, %v1874
        %v1876 = vpop.f32.mrf.mxu0
        %v1877 = vadd.f32 %v597, %v1876
        %1878 = vmatprep.mubr.f32.mxu0 %v357
        %1879 = vmatmul.mubr.f32.gmra.mxu0 %v356
        %v1880 = vpop.f32.mrf.mxu0
        %v1881 = vadd.f32 %v593, %v1880
        %v1882 = vpop.f32.mrf.mxu0
        %v1883 = vadd.f32 %v597, %v1882
        %1884 = vmatprep.mubr.f32.mxu0 %v359
        %1885 = vmatmul.mubr.f32.gmra.mxu0 %v358
        %v1886 = vpop.f32.mrf.mxu0
        %v1887 = vadd.f32 %v593, %v1886
        %v1888 = vpop.f32.mrf.mxu0
        %v1889 = vadd.f32 %v597, %v1888
        %1890 = vmatprep.mubr.f32.mxu0 %v361
        %1891 = vmatmul.mubr.f32.gmra.mxu0 %v360
        %v1892 = vpop.f32.mrf.mxu0
        %v1893 = vadd.f32 %v593, %v1892
        %v1894 = vpop.f32.mrf.mxu0
        %v1895 = vadd.f32 %v597, %v1894
        %1896 = vmatprep.mubr.f32.mxu0 %v363
        %1897 = vmatmul.mubr.f32.gmra.mxu0 %v362
        %v1898 = vpop.f32.mrf.mxu0
        %v1899 = vadd.f32 %v593, %v1898
        %v1900 = vpop.f32.mrf.mxu0
        %v1901 = vadd.f32 %v597, %v1900
        %1902 = vmatprep.mubr.f32.mxu0 %v365
        %1903 = vmatmul.mubr.f32.gmra.mxu0 %v364
        %v1904 = vpop.f32.mrf.mxu0
        %v1905 = vadd.f32 %v593, %v1904
        %v1906 = vpop.f32.mrf.mxu0
        %v1907 = vadd.f32 %v597, %v1906
        %1908 = vmatprep.mubr.f32.mxu0 %v367
        %1909 = vmatmul.mubr.f32.gmra.mxu0 %v366
        %v1910 = vpop.f32.mrf.mxu0
        %v1911 = vadd.f32 %v593, %v1910
        %v1912 = vpop.f32.mrf.mxu0
        %v1913 = vadd.f32 %v597, %v1912
        %1914 = vmatprep.mubr.f32.mxu0 %v369
        %1915 = vmatmul.mubr.f32.gmra.mxu0 %v368
        %v1916 = vpop.f32.mrf.mxu0
        %v1917 = vadd.f32 %v593, %v1916
        %v1918 = vpop.f32.mrf.mxu0
        %v1919 = vadd.f32 %v597, %v1918
        %1920 = vmatprep.mubr.f32.mxu0 %v371
        %1921 = vmatmul.mubr.f32.gmra.mxu0 %v370
        %v1922 = vpop.f32.mrf.mxu0
        %v1923 = vadd.f32 %v593, %v1922
        %v1924 = vpop.f32.mrf.mxu0
        %v1925 = vadd.f32 %v597, %v1924
        %1926 = vmatprep.mubr.f32.mxu0 %v373
        %1927 = vmatmul.mubr.f32.gmra.mxu0 %v372
        %v1928 = vpop.f32.mrf.mxu0
        %v1929 = vadd.f32 %v593, %v1928
        %v1930 = vpop.f32.mrf.mxu0
        %v1931 = vadd.f32 %v597, %v1930
        %1932 = vmatprep.mubr.f32.mxu0 %v375
        %1933 = vmatmul.mubr.f32.gmra.mxu0 %v374
        %v1934 = vpop.f32.mrf.mxu0
        %v1935 = vadd.f32 %v593, %v1934
        %v1936 = vpop.f32.mrf.mxu0
        %v1937 = vadd.f32 %v597, %v1936
        %1938 = vmatprep.mubr.f32.mxu0 %v377
        %1939 = vmatmul.mubr.f32.gmra.mxu0 %v376
        %v1940 = vpop.f32.mrf.mxu0
        %v1941 = vadd.f32 %v593, %v1940
        %v1942 = vpop.f32.mrf.mxu0
        %v1943 = vadd.f32 %v597, %v1942
        %1944 = vmatprep.mubr.f32.mxu0 %v379
        %1945 = vmatmul.mubr.f32.gmra.mxu0 %v378
        %v1946 = vpop.f32.mrf.mxu0
        %v1947 = vadd.f32 %v593, %v1946
        %v1948 = vpop.f32.mrf.mxu0
        %v1949 = vadd.f32 %v597, %v1948
        %1950 = vdwg.mxu0
        %v1951 = vpack.c.bf16 %v677, %v671
        %v1952 = vpack.c.bf16 %v679, %v673
        %v1953 = vpack.c.bf16 %v1126, %v1120
        %v1954 = vpack.c.bf16 %v1128, %v1122
        %v1955 = vpack.c.bf16 %v1575, %v1569
        %v1956 = vpack.c.bf16 %v1577, %v1571
        %v1957 = vpack.c.bf16 %v689, %v683
        %v1958 = vpack.c.bf16 %v691, %v685
        %v1959 = vpack.c.bf16 %v1138, %v1132
        %v1960 = vpack.c.bf16 %v1140, %v1134
        %v1961 = vpack.c.bf16 %v1587, %v1581
        %v1962 = vpack.c.bf16 %v1589, %v1583
        %v1963 = vpack.c.bf16 %v701, %v695
        %v1964 = vpack.c.bf16 %v703, %v697
        %v1965 = vpack.c.bf16 %v1150, %v1144
        %v1966 = vpack.c.bf16 %v1152, %v1146
        %v1967 = vpack.c.bf16 %v1599, %v1593
        %v1968 = vpack.c.bf16 %v1601, %v1595
        %v1969 = vpack.c.bf16 %v713, %v707
        %v1970 = vpack.c.bf16 %v715, %v709
        %v1971 = vpack.c.bf16 %v1162, %v1156
        %v1972 = vpack.c.bf16 %v1164, %v1158
        %v1973 = vpack.c.bf16 %v1611, %v1605
        %v1974 = vpack.c.bf16 %v1613, %v1607
        %v1975 = vpack.c.bf16 %v725, %v719
        %v1976 = vpack.c.bf16 %v727, %v721
        %v1977 = vpack.c.bf16 %v1174, %v1168
        %v1978 = vpack.c.bf16 %v1176, %v1170
        %v1979 = vpack.c.bf16 %v1623, %v1617
        %v1980 = vpack.c.bf16 %v1625, %v1619
        %v1981 = vpack.c.bf16 %v737, %v731
        %v1982 = vpack.c.bf16 %v739, %v733
        %v1983 = vpack.c.bf16 %v1186, %v1180
        %v1984 = vpack.c.bf16 %v1188, %v1182
        %v1985 = vpack.c.bf16 %v1635, %v1629
        %v1986 = vpack.c.bf16 %v1637, %v1631
        %v1987 = vpack.c.bf16 %v749, %v743
        %v1988 = vpack.c.bf16 %v751, %v745
        %v1989 = vpack.c.bf16 %v1198, %v1192
        %v1990 = vpack.c.bf16 %v1200, %v1194
        %v1991 = vpack.c.bf16 %v1647, %v1641
        %v1992 = vpack.c.bf16 %v1649, %v1643
        %v1993 = vpack.c.bf16 %v761, %v755
        %v1994 = vpack.c.bf16 %v763, %v757
        %v1995 = vpack.c.bf16 %v1210, %v1204
        %v1996 = vpack.c.bf16 %v1212, %v1206
        %v1997 = vpack.c.bf16 %v1659, %v1653
        %v1998 = vpack.c.bf16 %v1661, %v1655
        %v1999 = vpack.c.bf16 %v773, %v767
        %v2000 = vpack.c.bf16 %v775, %v769
        %v2001 = vpack.c.bf16 %v1222, %v1216
        %v2002 = vpack.c.bf16 %v1224, %v1218
        %v2003 = vpack.c.bf16 %v1671, %v1665
        %v2004 = vpack.c.bf16 %v1673, %v1667
        %v2005 = vpack.c.bf16 %v785, %v779
        %v2006 = vpack.c.bf16 %v787, %v781
        %v2007 = vpack.c.bf16 %v1234, %v1228
        %v2008 = vpack.c.bf16 %v1236, %v1230
        %v2009 = vpack.c.bf16 %v1683, %v1677
        %v2010 = vpack.c.bf16 %v1685, %v1679
        %v2011 = vpack.c.bf16 %v797, %v791
        %v2012 = vpack.c.bf16 %v799, %v793
        %v2013 = vpack.c.bf16 %v1246, %v1240
        %v2014 = vpack.c.bf16 %v1248, %v1242
        %v2015 = vpack.c.bf16 %v1695, %v1689
        %v2016 = vpack.c.bf16 %v1697, %v1691
        %v2017 = vpack.c.bf16 %v809, %v803
        %v2018 = vpack.c.bf16 %v811, %v805
        %v2019 = vpack.c.bf16 %v1258, %v1252
        %v2020 = vpack.c.bf16 %v1260, %v1254
        %v2021 = vpack.c.bf16 %v1707, %v1701
        %v2022 = vpack.c.bf16 %v1709, %v1703
        %v2023 = vpack.c.bf16 %v821, %v815
        %v2024 = vpack.c.bf16 %v823, %v817
        %v2025 = vpack.c.bf16 %v1270, %v1264
        %v2026 = vpack.c.bf16 %v1272, %v1266
        %v2027 = vpack.c.bf16 %v1719, %v1713
        %v2028 = vpack.c.bf16 %v1721, %v1715
        %v2029 = vpack.c.bf16 %v833, %v827
        %v2030 = vpack.c.bf16 %v835, %v829
        %v2031 = vpack.c.bf16 %v1282, %v1276
        %v2032 = vpack.c.bf16 %v1284, %v1278
        %v2033 = vpack.c.bf16 %v1731, %v1725
        %v2034 = vpack.c.bf16 %v1733, %v1727
        %v2035 = vpack.c.bf16 %v845, %v839
        %v2036 = vpack.c.bf16 %v847, %v841
        %v2037 = vpack.c.bf16 %v1294, %v1288
        %v2038 = vpack.c.bf16 %v1296, %v1290
        %v2039 = vpack.c.bf16 %v1743, %v1737
        %v2040 = vpack.c.bf16 %v1745, %v1739
        %v2041 = vpack.c.bf16 %v857, %v851
        %v2042 = vpack.c.bf16 %v859, %v853
        %v2043 = vpack.c.bf16 %v1306, %v1300
        %v2044 = vpack.c.bf16 %v1308, %v1302
        %v2045 = vpack.c.bf16 %v1755, %v1749
        %v2046 = vpack.c.bf16 %v1757, %v1751
        %v2047 = vpack.c.bf16 %v869, %v863
        %v2048 = vpack.c.bf16 %v871, %v865
        %v2049 = vpack.c.bf16 %v1318, %v1312
        %v2050 = vpack.c.bf16 %v1320, %v1314
        %v2051 = vpack.c.bf16 %v1767, %v1761
        %v2052 = vpack.c.bf16 %v1769, %v1763
        %v2053 = vpack.c.bf16 %v881, %v875
        %v2054 = vpack.c.bf16 %v883, %v877
        %v2055 = vpack.c.bf16 %v1330, %v1324
        %v2056 = vpack.c.bf16 %v1332, %v1326
        %v2057 = vpack.c.bf16 %v1779, %v1773
        %v2058 = vpack.c.bf16 %v1781, %v1775
        %v2059 = vpack.c.bf16 %v893, %v887
        %v2060 = vpack.c.bf16 %v895, %v889
        %v2061 = vpack.c.bf16 %v1342, %v1336
        %v2062 = vpack.c.bf16 %v1344, %v1338
        %v2063 = vpack.c.bf16 %v1791, %v1785
        %v2064 = vpack.c.bf16 %v1793, %v1787
        %v2065 = vpack.c.bf16 %v905, %v899
        %v2066 = vpack.c.bf16 %v907, %v901
        %v2067 = vpack.c.bf16 %v1354, %v1348
        %v2068 = vpack.c.bf16 %v1356, %v1350
        %v2069 = vpack.c.bf16 %v1803, %v1797
        %v2070 = vpack.c.bf16 %v1805, %v1799
        %v2071 = vpack.c.bf16 %v917, %v911
        %v2072 = vpack.c.bf16 %v919, %v913
        %v2073 = vpack.c.bf16 %v1366, %v1360
        %v2074 = vpack.c.bf16 %v1368, %v1362
        %v2075 = vpack.c.bf16 %v1815, %v1809
        %v2076 = vpack.c.bf16 %v1817, %v1811
        %v2077 = vpack.c.bf16 %v929, %v923
        %v2078 = vpack.c.bf16 %v931, %v925
        %v2079 = vpack.c.bf16 %v1378, %v1372
        %v2080 = vpack.c.bf16 %v1380, %v1374
        %v2081 = vpack.c.bf16 %v1827, %v1821
        %v2082 = vpack.c.bf16 %v1829, %v1823
        %v2083 = vpack.c.bf16 %v941, %v935
        %v2084 = vpack.c.bf16 %v943, %v937
        %v2085 = vpack.c.bf16 %v1390, %v1384
        %v2086 = vpack.c.bf16 %v1392, %v1386
        %v2087 = vpack.c.bf16 %v1839, %v1833
        %v2088 = vpack.c.bf16 %v1841, %v1835
        %v2089 = vpack.c.bf16 %v953, %v947
        %v2090 = vpack.c.bf16 %v955, %v949
        %v2091 = vpack.c.bf16 %v1402, %v1396
        %v2092 = vpack.c.bf16 %v1404, %v1398
        %v2093 = vpack.c.bf16 %v1851, %v1845
        %v2094 = vpack.c.bf16 %v1853, %v1847
        %v2095 = vpack.c.bf16 %v965, %v959
        %v2096 = vpack.c.bf16 %v967, %v961
        %v2097 = vpack.c.bf16 %v1414, %v1408
        %v2098 = vpack.c.bf16 %v1416, %v1410
        %v2099 = vpack.c.bf16 %v1863, %v1857
        %v2100 = vpack.c.bf16 %v1865, %v1859
        %v2101 = vpack.c.bf16 %v977, %v971
        %v2102 = vpack.c.bf16 %v979, %v973
        %v2103 = vpack.c.bf16 %v1426, %v1420
        %v2104 = vpack.c.bf16 %v1428, %v1422
        %v2105 = vpack.c.bf16 %v1875, %v1869
        %v2106 = vpack.c.bf16 %v1877, %v1871
        %v2107 = vpack.c.bf16 %v989, %v983
        %v2108 = vpack.c.bf16 %v991, %v985
        %v2109 = vpack.c.bf16 %v1438, %v1432
        %v2110 = vpack.c.bf16 %v1440, %v1434
        %v2111 = vpack.c.bf16 %v1887, %v1881
        %v2112 = vpack.c.bf16 %v1889, %v1883
        %v2113 = vpack.c.bf16 %v1001, %v995
        %v2114 = vpack.c.bf16 %v1003, %v997
        %v2115 = vpack.c.bf16 %v1450, %v1444
        %v2116 = vpack.c.bf16 %v1452, %v1446
        %v2117 = vpack.c.bf16 %v1899, %v1893
        %v2118 = vpack.c.bf16 %v1901, %v1895
        %v2119 = vpack.c.bf16 %v1013, %v1007
        %v2120 = vpack.c.bf16 %v1015, %v1009
        %v2121 = vpack.c.bf16 %v1462, %v1456
        %v2122 = vpack.c.bf16 %v1464, %v1458
        %v2123 = vpack.c.bf16 %v1911, %v1905
        %v2124 = vpack.c.bf16 %v1913, %v1907
        %v2125 = vpack.c.bf16 %v1025, %v1019
        %v2126 = vpack.c.bf16 %v1027, %v1021
        %v2127 = vpack.c.bf16 %v1474, %v1468
        %v2128 = vpack.c.bf16 %v1476, %v1470
        %v2129 = vpack.c.bf16 %v1923, %v1917
        %v2130 = vpack.c.bf16 %v1925, %v1919
        %v2131 = vpack.c.bf16 %v1037, %v1031
        %v2132 = vpack.c.bf16 %v1039, %v1033
        %v2133 = vpack.c.bf16 %v1486, %v1480
        %v2134 = vpack.c.bf16 %v1488, %v1482
        %v2135 = vpack.c.bf16 %v1935, %v1929
        %v2136 = vpack.c.bf16 %v1937, %v1931
        %v2137 = vpack.c.bf16 %v1049, %v1043
        %v2138 = vpack.c.bf16 %v1051, %v1045
        %v2139 = vpack.c.bf16 %v1498, %v1492
        %v2140 = vpack.c.bf16 %v1500, %v1494
        %v2141 = vpack.c.bf16 %v1947, %v1941
        %v2142 = vpack.c.bf16 %v1949, %v1943
        %v2335 = vunpack.c.l.b16 %v1951
        %v2336 = vunpack.c.l.b16 %v1952
        %v2337 = vunpack.c.l.b16 %v1953
        %v2338 = vunpack.c.l.b16 %v1954
        %v2339 = vunpack.c.l.b16 %v1955
        %v2340 = vunpack.c.l.b16 %v1956
        %v2341 = vunpack.c.h.b16 %v1951
        %v2342 = vunpack.c.h.b16 %v1952
        %v2343 = vunpack.c.h.b16 %v1953
        %v2344 = vunpack.c.h.b16 %v1954
        %v2345 = vunpack.c.h.b16 %v1955
        %v2346 = vunpack.c.h.b16 %v1956
        %v2347 = vunpack.c.l.b16 %v1957
        %v2348 = vunpack.c.l.b16 %v1958
        %v2349 = vunpack.c.l.b16 %v1959
        %v2350 = vunpack.c.l.b16 %v1960
        %v2351 = vunpack.c.l.b16 %v1961
        %v2352 = vunpack.c.l.b16 %v1962
        %v2353 = vunpack.c.h.b16 %v1957
        %v2354 = vunpack.c.h.b16 %v1958
        %v2355 = vunpack.c.h.b16 %v1959
        %v2356 = vunpack.c.h.b16 %v1960
        %v2357 = vunpack.c.h.b16 %v1961
        %v2358 = vunpack.c.h.b16 %v1962
        %v2359 = vunpack.c.l.b16 %v1963
        %v2360 = vunpack.c.l.b16 %v1964
        %v2361 = vunpack.c.l.b16 %v1965
        %v2362 = vunpack.c.l.b16 %v1966
        %v2363 = vunpack.c.l.b16 %v1967
        %v2364 = vunpack.c.l.b16 %v1968
        %v2365 = vunpack.c.h.b16 %v1963
        %v2366 = vunpack.c.h.b16 %v1964
        %v2367 = vunpack.c.h.b16 %v1965
        %v2368 = vunpack.c.h.b16 %v1966
        %v2369 = vunpack.c.h.b16 %v1967
        %v2370 = vunpack.c.h.b16 %v1968
        %v2371 = vunpack.c.l.b16 %v1969
        %v2372 = vunpack.c.l.b16 %v1970
        %v2373 = vunpack.c.l.b16 %v1971
        %v2374 = vunpack.c.l.b16 %v1972
        %v2375 = vunpack.c.l.b16 %v1973
        %v2376 = vunpack.c.l.b16 %v1974
        %v2377 = vunpack.c.h.b16 %v1969
        %v2378 = vunpack.c.h.b16 %v1970
        %v2379 = vunpack.c.h.b16 %v1971
        %v2380 = vunpack.c.h.b16 %v1972
        %v2381 = vunpack.c.h.b16 %v1973
        %v2382 = vunpack.c.h.b16 %v1974
        %v2383 = vunpack.c.l.b16 %v1975
        %v2384 = vunpack.c.l.b16 %v1976
        %v2385 = vunpack.c.l.b16 %v1977
        %v2386 = vunpack.c.l.b16 %v1978
        %v2387 = vunpack.c.l.b16 %v1979
        %v2388 = vunpack.c.l.b16 %v1980
        %v2389 = vunpack.c.h.b16 %v1975
        %v2390 = vunpack.c.h.b16 %v1976
        %v2391 = vunpack.c.h.b16 %v1977
        %v2392 = vunpack.c.h.b16 %v1978
        %v2393 = vunpack.c.h.b16 %v1979
        %v2394 = vunpack.c.h.b16 %v1980
        %v2395 = vunpack.c.l.b16 %v1981
        %v2396 = vunpack.c.l.b16 %v1982
        %v2397 = vunpack.c.l.b16 %v1983
        %v2398 = vunpack.c.l.b16 %v1984
        %v2399 = vunpack.c.l.b16 %v1985
        %v2400 = vunpack.c.l.b16 %v1986
        %v2401 = vunpack.c.h.b16 %v1981
        %v2402 = vunpack.c.h.b16 %v1982
        %v2403 = vunpack.c.h.b16 %v1983
        %v2404 = vunpack.c.h.b16 %v1984
        %v2405 = vunpack.c.h.b16 %v1985
        %v2406 = vunpack.c.h.b16 %v1986
        %v2407 = vunpack.c.l.b16 %v1987
        %v2408 = vunpack.c.l.b16 %v1988
        %v2409 = vunpack.c.l.b16 %v1989
        %v2410 = vunpack.c.l.b16 %v1990
        %v2411 = vunpack.c.l.b16 %v1991
        %v2412 = vunpack.c.l.b16 %v1992
        %v2413 = vunpack.c.h.b16 %v1987
        %v2414 = vunpack.c.h.b16 %v1988
        %v2415 = vunpack.c.h.b16 %v1989
        %v2416 = vunpack.c.h.b16 %v1990
        %v2417 = vunpack.c.h.b16 %v1991
        %v2418 = vunpack.c.h.b16 %v1992
        %v2419 = vunpack.c.l.b16 %v1993
        %v2420 = vunpack.c.l.b16 %v1994
        %v2421 = vunpack.c.l.b16 %v1995
        %v2422 = vunpack.c.l.b16 %v1996
        %v2423 = vunpack.c.l.b16 %v1997
        %v2424 = vunpack.c.l.b16 %v1998
        %v2425 = vunpack.c.h.b16 %v1993
        %v2426 = vunpack.c.h.b16 %v1994
        %v2427 = vunpack.c.h.b16 %v1995
        %v2428 = vunpack.c.h.b16 %v1996
        %v2429 = vunpack.c.h.b16 %v1997
        %v2430 = vunpack.c.h.b16 %v1998
        %v2431 = vunpack.c.l.b16 %v1999
        %v2432 = vunpack.c.l.b16 %v2000
        %v2433 = vunpack.c.l.b16 %v2001
        %v2434 = vunpack.c.l.b16 %v2002
        %v2435 = vunpack.c.l.b16 %v2003
        %v2436 = vunpack.c.l.b16 %v2004
        %v2437 = vunpack.c.h.b16 %v1999
        %v2438 = vunpack.c.h.b16 %v2000
        %v2439 = vunpack.c.h.b16 %v2001
        %v2440 = vunpack.c.h.b16 %v2002
        %v2441 = vunpack.c.h.b16 %v2003
        %v2442 = vunpack.c.h.b16 %v2004
        %v2443 = vunpack.c.l.b16 %v2005
        %v2444 = vunpack.c.l.b16 %v2006
        %v2445 = vunpack.c.l.b16 %v2007
        %v2446 = vunpack.c.l.b16 %v2008
        %v2447 = vunpack.c.l.b16 %v2009
        %v2448 = vunpack.c.l.b16 %v2010
        %v2449 = vunpack.c.h.b16 %v2005
        %v2450 = vunpack.c.h.b16 %v2006
        %v2451 = vunpack.c.h.b16 %v2007
        %v2452 = vunpack.c.h.b16 %v2008
        %v2453 = vunpack.c.h.b16 %v2009
        %v2454 = vunpack.c.h.b16 %v2010
        %v2455 = vunpack.c.l.b16 %v2011
        %v2456 = vunpack.c.l.b16 %v2012
        %v2457 = vunpack.c.l.b16 %v2013
        %v2458 = vunpack.c.l.b16 %v2014
        %v2459 = vunpack.c.l.b16 %v2015
        %v2460 = vunpack.c.l.b16 %v2016
        %v2461 = vunpack.c.h.b16 %v2011
        %v2462 = vunpack.c.h.b16 %v2012
        %v2463 = vunpack.c.h.b16 %v2013
        %v2464 = vunpack.c.h.b16 %v2014
        %v2465 = vunpack.c.h.b16 %v2015
        %v2466 = vunpack.c.h.b16 %v2016
        %v2467 = vunpack.c.l.b16 %v2017
        %v2468 = vunpack.c.l.b16 %v2018
        %v2469 = vunpack.c.l.b16 %v2019
        %v2470 = vunpack.c.l.b16 %v2020
        %v2471 = vunpack.c.l.b16 %v2021
        %v2472 = vunpack.c.l.b16 %v2022
        %v2473 = vunpack.c.h.b16 %v2017
        %v2474 = vunpack.c.h.b16 %v2018
        %v2475 = vunpack.c.h.b16 %v2019
        %v2476 = vunpack.c.h.b16 %v2020
        %v2477 = vunpack.c.h.b16 %v2021
        %v2478 = vunpack.c.h.b16 %v2022
        %v2479 = vunpack.c.l.b16 %v2023
        %v2480 = vunpack.c.l.b16 %v2024
        %v2481 = vunpack.c.l.b16 %v2025
        %v2482 = vunpack.c.l.b16 %v2026
        %v2483 = vunpack.c.l.b16 %v2027
        %v2484 = vunpack.c.l.b16 %v2028
        %v2485 = vunpack.c.h.b16 %v2023
        %v2486 = vunpack.c.h.b16 %v2024
        %v2487 = vunpack.c.h.b16 %v2025
        %v2488 = vunpack.c.h.b16 %v2026
        %v2489 = vunpack.c.h.b16 %v2027
        %v2490 = vunpack.c.h.b16 %v2028
        %v2491 = vunpack.c.l.b16 %v2029
        %v2492 = vunpack.c.l.b16 %v2030
        %v2493 = vunpack.c.l.b16 %v2031
        %v2494 = vunpack.c.l.b16 %v2032
        %v2495 = vunpack.c.l.b16 %v2033
        %v2496 = vunpack.c.l.b16 %v2034
        %v2497 = vunpack.c.h.b16 %v2029
        %v2498 = vunpack.c.h.b16 %v2030
        %v2499 = vunpack.c.h.b16 %v2031
        %v2500 = vunpack.c.h.b16 %v2032
        %v2501 = vunpack.c.h.b16 %v2033
        %v2502 = vunpack.c.h.b16 %v2034
        %v2503 = vunpack.c.l.b16 %v2035
        %v2504 = vunpack.c.l.b16 %v2036
        %v2505 = vunpack.c.l.b16 %v2037
        %v2506 = vunpack.c.l.b16 %v2038
        %v2507 = vunpack.c.l.b16 %v2039
        %v2508 = vunpack.c.l.b16 %v2040
        %v2509 = vunpack.c.h.b16 %v2035
        %v2510 = vunpack.c.h.b16 %v2036
        %v2511 = vunpack.c.h.b16 %v2037
        %v2512 = vunpack.c.h.b16 %v2038
        %v2513 = vunpack.c.h.b16 %v2039
        %v2514 = vunpack.c.h.b16 %v2040
        %v2515 = vunpack.c.l.b16 %v2041
        %v2516 = vunpack.c.l.b16 %v2042
        %v2517 = vunpack.c.l.b16 %v2043
        %v2518 = vunpack.c.l.b16 %v2044
        %v2519 = vunpack.c.l.b16 %v2045
        %v2520 = vunpack.c.l.b16 %v2046
        %v2521 = vunpack.c.h.b16 %v2041
        %v2522 = vunpack.c.h.b16 %v2042
        %v2523 = vunpack.c.h.b16 %v2043
        %v2524 = vunpack.c.h.b16 %v2044
        %v2525 = vunpack.c.h.b16 %v2045
        %v2526 = vunpack.c.h.b16 %v2046
        %v2527 = vunpack.c.l.b16 %v2047
        %v2528 = vunpack.c.l.b16 %v2048
        %v2529 = vunpack.c.l.b16 %v2049
        %v2530 = vunpack.c.l.b16 %v2050
        %v2531 = vunpack.c.l.b16 %v2051
        %v2532 = vunpack.c.l.b16 %v2052
        %v2533 = vunpack.c.h.b16 %v2047
        %v2534 = vunpack.c.h.b16 %v2048
        %v2535 = vunpack.c.h.b16 %v2049
        %v2536 = vunpack.c.h.b16 %v2050
        %v2537 = vunpack.c.h.b16 %v2051
        %v2538 = vunpack.c.h.b16 %v2052
        %v2539 = vunpack.c.l.b16 %v2053
        %v2540 = vunpack.c.l.b16 %v2054
        %v2541 = vunpack.c.l.b16 %v2055
        %v2542 = vunpack.c.l.b16 %v2056
        %v2543 = vunpack.c.l.b16 %v2057
        %v2544 = vunpack.c.l.b16 %v2058
        %v2545 = vunpack.c.h.b16 %v2053
        %v2546 = vunpack.c.h.b16 %v2054
        %v2547 = vunpack.c.h.b16 %v2055
        %v2548 = vunpack.c.h.b16 %v2056
        %v2549 = vunpack.c.h.b16 %v2057
        %v2550 = vunpack.c.h.b16 %v2058
        %v2551 = vunpack.c.l.b16 %v2059
        %v2552 = vunpack.c.l.b16 %v2060
        %v2553 = vunpack.c.l.b16 %v2061
        %v2554 = vunpack.c.l.b16 %v2062
        %v2555 = vunpack.c.l.b16 %v2063
        %v2556 = vunpack.c.l.b16 %v2064
        %v2557 = vunpack.c.h.b16 %v2059
        %v2558 = vunpack.c.h.b16 %v2060
        %v2559 = vunpack.c.h.b16 %v2061
        %v2560 = vunpack.c.h.b16 %v2062
        %v2561 = vunpack.c.h.b16 %v2063
        %v2562 = vunpack.c.h.b16 %v2064
        %v2563 = vunpack.c.l.b16 %v2065
        %v2564 = vunpack.c.l.b16 %v2066
        %v2565 = vunpack.c.l.b16 %v2067
        %v2566 = vunpack.c.l.b16 %v2068
        %v2567 = vunpack.c.l.b16 %v2069
        %v2568 = vunpack.c.l.b16 %v2070
        %v2569 = vunpack.c.h.b16 %v2065
        %v2570 = vunpack.c.h.b16 %v2066
        %v2571 = vunpack.c.h.b16 %v2067
        %v2572 = vunpack.c.h.b16 %v2068
        %v2573 = vunpack.c.h.b16 %v2069
        %v2574 = vunpack.c.h.b16 %v2070
        %v2575 = vunpack.c.l.b16 %v2071
        %v2576 = vunpack.c.l.b16 %v2072
        %v2577 = vunpack.c.l.b16 %v2073
        %v2578 = vunpack.c.l.b16 %v2074
        %v2579 = vunpack.c.l.b16 %v2075
        %v2580 = vunpack.c.l.b16 %v2076
        %v2581 = vunpack.c.h.b16 %v2071
        %v2582 = vunpack.c.h.b16 %v2072
        %v2583 = vunpack.c.h.b16 %v2073
        %v2584 = vunpack.c.h.b16 %v2074
        %v2585 = vunpack.c.h.b16 %v2075
        %v2586 = vunpack.c.h.b16 %v2076
        %v2587 = vunpack.c.l.b16 %v2077
        %v2588 = vunpack.c.l.b16 %v2078
        %v2589 = vunpack.c.l.b16 %v2079
        %v2590 = vunpack.c.l.b16 %v2080
        %v2591 = vunpack.c.l.b16 %v2081
        %v2592 = vunpack.c.l.b16 %v2082
        %v2593 = vunpack.c.h.b16 %v2077
        %v2594 = vunpack.c.h.b16 %v2078
        %v2595 = vunpack.c.h.b16 %v2079
        %v2596 = vunpack.c.h.b16 %v2080
        %v2597 = vunpack.c.h.b16 %v2081
        %v2598 = vunpack.c.h.b16 %v2082
        %v2599 = vunpack.c.l.b16 %v2083
        %v2600 = vunpack.c.l.b16 %v2084
        %v2601 = vunpack.c.l.b16 %v2085
        %v2602 = vunpack.c.l.b16 %v2086
        %v2603 = vunpack.c.l.b16 %v2087
        %v2604 = vunpack.c.l.b16 %v2088
        %v2605 = vunpack.c.h.b16 %v2083
        %v2606 = vunpack.c.h.b16 %v2084
        %v2607 = vunpack.c.h.b16 %v2085
        %v2608 = vunpack.c.h.b16 %v2086
        %v2609 = vunpack.c.h.b16 %v2087
        %v2610 = vunpack.c.h.b16 %v2088
        %v2611 = vunpack.c.l.b16 %v2089
        %v2612 = vunpack.c.l.b16 %v2090
        %v2613 = vunpack.c.l.b16 %v2091
        %v2614 = vunpack.c.l.b16 %v2092
        %v2615 = vunpack.c.l.b16 %v2093
        %v2616 = vunpack.c.l.b16 %v2094
        %v2617 = vunpack.c.h.b16 %v2089
        %v2618 = vunpack.c.h.b16 %v2090
        %v2619 = vunpack.c.h.b16 %v2091
        %v2620 = vunpack.c.h.b16 %v2092
        %v2621 = vunpack.c.h.b16 %v2093
        %v2622 = vunpack.c.h.b16 %v2094
        %v2623 = vunpack.c.l.b16 %v2095
        %v2624 = vunpack.c.l.b16 %v2096
        %v2625 = vunpack.c.l.b16 %v2097
        %v2626 = vunpack.c.l.b16 %v2098
        %v2627 = vunpack.c.l.b16 %v2099
        %v2628 = vunpack.c.l.b16 %v2100
        %v2629 = vunpack.c.h.b16 %v2095
        %v2630 = vunpack.c.h.b16 %v2096
        %v2631 = vunpack.c.h.b16 %v2097
        %v2632 = vunpack.c.h.b16 %v2098
        %v2633 = vunpack.c.h.b16 %v2099
        %v2634 = vunpack.c.h.b16 %v2100
        %v2635 = vunpack.c.l.b16 %v2101
        %v2636 = vunpack.c.l.b16 %v2102
        %v2637 = vunpack.c.l.b16 %v2103
        %v2638 = vunpack.c.l.b16 %v2104
        %v2639 = vunpack.c.l.b16 %v2105
        %v2640 = vunpack.c.l.b16 %v2106
        %v2641 = vunpack.c.h.b16 %v2101
        %v2642 = vunpack.c.h.b16 %v2102
        %v2643 = vunpack.c.h.b16 %v2103
        %v2644 = vunpack.c.h.b16 %v2104
        %v2645 = vunpack.c.h.b16 %v2105
        %v2646 = vunpack.c.h.b16 %v2106
        %v2647 = vunpack.c.l.b16 %v2107
        %v2648 = vunpack.c.l.b16 %v2108
        %v2649 = vunpack.c.l.b16 %v2109
        %v2650 = vunpack.c.l.b16 %v2110
        %v2651 = vunpack.c.l.b16 %v2111
        %v2652 = vunpack.c.l.b16 %v2112
        %v2653 = vunpack.c.h.b16 %v2107
        %v2654 = vunpack.c.h.b16 %v2108
        %v2655 = vunpack.c.h.b16 %v2109
        %v2656 = vunpack.c.h.b16 %v2110
        %v2657 = vunpack.c.h.b16 %v2111
        %v2658 = vunpack.c.h.b16 %v2112
        %v2659 = vunpack.c.l.b16 %v2113
        %v2660 = vunpack.c.l.b16 %v2114
        %v2661 = vunpack.c.l.b16 %v2115
        %v2662 = vunpack.c.l.b16 %v2116
        %v2663 = vunpack.c.l.b16 %v2117
        %v2664 = vunpack.c.l.b16 %v2118
        %v2665 = vunpack.c.h.b16 %v2113
        %v2666 = vunpack.c.h.b16 %v2114
        %v2667 = vunpack.c.h.b16 %v2115
        %v2668 = vunpack.c.h.b16 %v2116
        %v2669 = vunpack.c.h.b16 %v2117
        %v2670 = vunpack.c.h.b16 %v2118
        %v2671 = vunpack.c.l.b16 %v2119
        %v2672 = vunpack.c.l.b16 %v2120
        %v2673 = vunpack.c.l.b16 %v2121
        %v2674 = vunpack.c.l.b16 %v2122
        %v2675 = vunpack.c.l.b16 %v2123
        %v2676 = vunpack.c.l.b16 %v2124
        %v2677 = vunpack.c.h.b16 %v2119
        %v2678 = vunpack.c.h.b16 %v2120
        %v2679 = vunpack.c.h.b16 %v2121
        %v2680 = vunpack.c.h.b16 %v2122
        %v2681 = vunpack.c.h.b16 %v2123
        %v2682 = vunpack.c.h.b16 %v2124
        %v2683 = vunpack.c.l.b16 %v2125
        %v2684 = vunpack.c.l.b16 %v2126
        %v2685 = vunpack.c.l.b16 %v2127
        %v2686 = vunpack.c.l.b16 %v2128
        %v2687 = vunpack.c.l.b16 %v2129
        %v2688 = vunpack.c.l.b16 %v2130
        %v2689 = vunpack.c.h.b16 %v2125
        %v2690 = vunpack.c.h.b16 %v2126
        %v2691 = vunpack.c.h.b16 %v2127
        %v2692 = vunpack.c.h.b16 %v2128
        %v2693 = vunpack.c.h.b16 %v2129
        %v2694 = vunpack.c.h.b16 %v2130
        %v2695 = vunpack.c.l.b16 %v2131
        %v2696 = vunpack.c.l.b16 %v2132
        %v2697 = vunpack.c.l.b16 %v2133
        %v2698 = vunpack.c.l.b16 %v2134
        %v2699 = vunpack.c.l.b16 %v2135
        %v2700 = vunpack.c.l.b16 %v2136
        %v2701 = vunpack.c.h.b16 %v2131
        %v2702 = vunpack.c.h.b16 %v2132
        %v2703 = vunpack.c.h.b16 %v2133
        %v2704 = vunpack.c.h.b16 %v2134
        %v2705 = vunpack.c.h.b16 %v2135
        %v2706 = vunpack.c.h.b16 %v2136
        %v2707 = vunpack.c.l.b16 %v2137
        %v2708 = vunpack.c.l.b16 %v2138
        %v2709 = vunpack.c.l.b16 %v2139
        %v2710 = vunpack.c.l.b16 %v2140
        %v2711 = vunpack.c.l.b16 %v2141
        %v2712 = vunpack.c.l.b16 %v2142
        %v2713 = vunpack.c.h.b16 %v2137
        %v2714 = vunpack.c.h.b16 %v2138
        %v2715 = vunpack.c.h.b16 %v2139
        %v2716 = vunpack.c.h.b16 %v2140
        %v2717 = vunpack.c.h.b16 %v2141
        %v2718 = vunpack.c.h.b16 %v2142
        %v2719 = vpack.c.b16 %v2336, %v2335
        %v2720 = vpack.c.b16 %v2338, %v2337
        %v2721 = vpack.c.b16 %v2340, %v2339
        %v2722 = vpack.c.b16 %v2342, %v2341
        %v2723 = vpack.c.b16 %v2344, %v2343
        %v2724 = vpack.c.b16 %v2346, %v2345
        %v2725 = vpack.c.b16 %v2348, %v2347
        %v2726 = vpack.c.b16 %v2350, %v2349
        %v2727 = vpack.c.b16 %v2352, %v2351
        %v2728 = vpack.c.b16 %v2354, %v2353
        %v2729 = vpack.c.b16 %v2356, %v2355
        %v2730 = vpack.c.b16 %v2358, %v2357
        %v2731 = vpack.c.b16 %v2360, %v2359
        %v2732 = vpack.c.b16 %v2362, %v2361
        %v2733 = vpack.c.b16 %v2364, %v2363
        %v2734 = vpack.c.b16 %v2366, %v2365
        %v2735 = vpack.c.b16 %v2368, %v2367
        %v2736 = vpack.c.b16 %v2370, %v2369
        %v2737 = vpack.c.b16 %v2372, %v2371
        %v2738 = vpack.c.b16 %v2374, %v2373
        %v2739 = vpack.c.b16 %v2376, %v2375
        %v2740 = vpack.c.b16 %v2378, %v2377
        %v2741 = vpack.c.b16 %v2380, %v2379
        %v2742 = vpack.c.b16 %v2382, %v2381
        %v2743 = vpack.c.b16 %v2384, %v2383
        %v2744 = vpack.c.b16 %v2386, %v2385
        %v2745 = vpack.c.b16 %v2388, %v2387
        %v2746 = vpack.c.b16 %v2390, %v2389
        %v2747 = vpack.c.b16 %v2392, %v2391
        %v2748 = vpack.c.b16 %v2394, %v2393
        %v2749 = vpack.c.b16 %v2396, %v2395
        %v2750 = vpack.c.b16 %v2398, %v2397
        %v2751 = vpack.c.b16 %v2400, %v2399
        %v2752 = vpack.c.b16 %v2402, %v2401
        %v2753 = vpack.c.b16 %v2404, %v2403
        %v2754 = vpack.c.b16 %v2406, %v2405
        %v2755 = vpack.c.b16 %v2408, %v2407
        %v2756 = vpack.c.b16 %v2410, %v2409
        %v2757 = vpack.c.b16 %v2412, %v2411
        %v2758 = vpack.c.b16 %v2414, %v2413
        %v2759 = vpack.c.b16 %v2416, %v2415
        %v2760 = vpack.c.b16 %v2418, %v2417
        %v2761 = vpack.c.b16 %v2420, %v2419
        %v2762 = vpack.c.b16 %v2422, %v2421
        %v2763 = vpack.c.b16 %v2424, %v2423
        %v2764 = vpack.c.b16 %v2426, %v2425
        %v2765 = vpack.c.b16 %v2428, %v2427
        %v2766 = vpack.c.b16 %v2430, %v2429
        %v2767 = vpack.c.b16 %v2432, %v2431
        %v2768 = vpack.c.b16 %v2434, %v2433
        %v2769 = vpack.c.b16 %v2436, %v2435
        %v2770 = vpack.c.b16 %v2438, %v2437
        %v2771 = vpack.c.b16 %v2440, %v2439
        %v2772 = vpack.c.b16 %v2442, %v2441
        %v2773 = vpack.c.b16 %v2444, %v2443
        %v2774 = vpack.c.b16 %v2446, %v2445
        %v2775 = vpack.c.b16 %v2448, %v2447
        %v2776 = vpack.c.b16 %v2450, %v2449
        %v2777 = vpack.c.b16 %v2452, %v2451
        %v2778 = vpack.c.b16 %v2454, %v2453
        %v2779 = vpack.c.b16 %v2456, %v2455
        %v2780 = vpack.c.b16 %v2458, %v2457
        %v2781 = vpack.c.b16 %v2460, %v2459
        %v2782 = vpack.c.b16 %v2462, %v2461
        %v2783 = vpack.c.b16 %v2464, %v2463
        %v2784 = vpack.c.b16 %v2466, %v2465
        %v2785 = vpack.c.b16 %v2468, %v2467
        %v2786 = vpack.c.b16 %v2470, %v2469
        %v2787 = vpack.c.b16 %v2472, %v2471
        %v2788 = vpack.c.b16 %v2474, %v2473
        %v2789 = vpack.c.b16 %v2476, %v2475
        %v2790 = vpack.c.b16 %v2478, %v2477
        %v2791 = vpack.c.b16 %v2480, %v2479
        %v2792 = vpack.c.b16 %v2482, %v2481
        %v2793 = vpack.c.b16 %v2484, %v2483
        %v2794 = vpack.c.b16 %v2486, %v2485
        %v2795 = vpack.c.b16 %v2488, %v2487
        %v2796 = vpack.c.b16 %v2490, %v2489
        %v2797 = vpack.c.b16 %v2492, %v2491
        %v2798 = vpack.c.b16 %v2494, %v2493
        %v2799 = vpack.c.b16 %v2496, %v2495
        %v2800 = vpack.c.b16 %v2498, %v2497
        %v2801 = vpack.c.b16 %v2500, %v2499
        %v2802 = vpack.c.b16 %v2502, %v2501
        %v2803 = vpack.c.b16 %v2504, %v2503
        %v2804 = vpack.c.b16 %v2506, %v2505
        %v2805 = vpack.c.b16 %v2508, %v2507
        %v2806 = vpack.c.b16 %v2510, %v2509
        %v2807 = vpack.c.b16 %v2512, %v2511
        %v2808 = vpack.c.b16 %v2514, %v2513
        %v2809 = vpack.c.b16 %v2516, %v2515
        %v2810 = vpack.c.b16 %v2518, %v2517
        %v2811 = vpack.c.b16 %v2520, %v2519
        %v2812 = vpack.c.b16 %v2522, %v2521
        %v2813 = vpack.c.b16 %v2524, %v2523
        %v2814 = vpack.c.b16 %v2526, %v2525
        %v2815 = vpack.c.b16 %v2528, %v2527
        %v2816 = vpack.c.b16 %v2530, %v2529
        %v2817 = vpack.c.b16 %v2532, %v2531
        %v2818 = vpack.c.b16 %v2534, %v2533
        %v2819 = vpack.c.b16 %v2536, %v2535
        %v2820 = vpack.c.b16 %v2538, %v2537
        %v2821 = vpack.c.b16 %v2540, %v2539
        %v2822 = vpack.c.b16 %v2542, %v2541
        %v2823 = vpack.c.b16 %v2544, %v2543
        %v2824 = vpack.c.b16 %v2546, %v2545
        %v2825 = vpack.c.b16 %v2548, %v2547
        %v2826 = vpack.c.b16 %v2550, %v2549
        %v2827 = vpack.c.b16 %v2552, %v2551
        %v2828 = vpack.c.b16 %v2554, %v2553
        %v2829 = vpack.c.b16 %v2556, %v2555
        %v2830 = vpack.c.b16 %v2558, %v2557
        %v2831 = vpack.c.b16 %v2560, %v2559
        %v2832 = vpack.c.b16 %v2562, %v2561
        %v2833 = vpack.c.b16 %v2564, %v2563
        %v2834 = vpack.c.b16 %v2566, %v2565
        %v2835 = vpack.c.b16 %v2568, %v2567
        %v2836 = vpack.c.b16 %v2570, %v2569
        %v2837 = vpack.c.b16 %v2572, %v2571
        %v2838 = vpack.c.b16 %v2574, %v2573
        %v2839 = vpack.c.b16 %v2576, %v2575
        %v2840 = vpack.c.b16 %v2578, %v2577
        %v2841 = vpack.c.b16 %v2580, %v2579
        %v2842 = vpack.c.b16 %v2582, %v2581
        %v2843 = vpack.c.b16 %v2584, %v2583
        %v2844 = vpack.c.b16 %v2586, %v2585
        %v2845 = vpack.c.b16 %v2588, %v2587
        %v2846 = vpack.c.b16 %v2590, %v2589
        %v2847 = vpack.c.b16 %v2592, %v2591
        %v2848 = vpack.c.b16 %v2594, %v2593
        %v2849 = vpack.c.b16 %v2596, %v2595
        %v2850 = vpack.c.b16 %v2598, %v2597
        %v2851 = vpack.c.b16 %v2600, %v2599
        %v2852 = vpack.c.b16 %v2602, %v2601
        %v2853 = vpack.c.b16 %v2604, %v2603
        %v2854 = vpack.c.b16 %v2606, %v2605
        %v2855 = vpack.c.b16 %v2608, %v2607
        %v2856 = vpack.c.b16 %v2610, %v2609
        %v2857 = vpack.c.b16 %v2612, %v2611
        %v2858 = vpack.c.b16 %v2614, %v2613
        %v2859 = vpack.c.b16 %v2616, %v2615
        %v2860 = vpack.c.b16 %v2618, %v2617
        %v2861 = vpack.c.b16 %v2620, %v2619
        %v2862 = vpack.c.b16 %v2622, %v2621
        %v2863 = vpack.c.b16 %v2624, %v2623
        %v2864 = vpack.c.b16 %v2626, %v2625
        %v2865 = vpack.c.b16 %v2628, %v2627
        %v2866 = vpack.c.b16 %v2630, %v2629
        %v2867 = vpack.c.b16 %v2632, %v2631
        %v2868 = vpack.c.b16 %v2634, %v2633
        %v2869 = vpack.c.b16 %v2636, %v2635
        %v2870 = vpack.c.b16 %v2638, %v2637
        %v2871 = vpack.c.b16 %v2640, %v2639
        %v2872 = vpack.c.b16 %v2642, %v2641
        %v2873 = vpack.c.b16 %v2644, %v2643
        %v2874 = vpack.c.b16 %v2646, %v2645
        %v2875 = vpack.c.b16 %v2648, %v2647
        %v2876 = vpack.c.b16 %v2650, %v2649
        %v2877 = vpack.c.b16 %v2652, %v2651
        %v2878 = vpack.c.b16 %v2654, %v2653
        %v2879 = vpack.c.b16 %v2656, %v2655
        %v2880 = vpack.c.b16 %v2658, %v2657
        %v2881 = vpack.c.b16 %v2660, %v2659
        %v2882 = vpack.c.b16 %v2662, %v2661
        %v2883 = vpack.c.b16 %v2664, %v2663
        %v2884 = vpack.c.b16 %v2666, %v2665
        %v2885 = vpack.c.b16 %v2668, %v2667
        %v2886 = vpack.c.b16 %v2670, %v2669
        %v2887 = vpack.c.b16 %v2672, %v2671
        %v2888 = vpack.c.b16 %v2674, %v2673
        %v2889 = vpack.c.b16 %v2676, %v2675
        %v2890 = vpack.c.b16 %v2678, %v2677
        %v2891 = vpack.c.b16 %v2680, %v2679
        %v2892 = vpack.c.b16 %v2682, %v2681
        %v2893 = vpack.c.b16 %v2684, %v2683
        %v2894 = vpack.c.b16 %v2686, %v2685
        %v2895 = vpack.c.b16 %v2688, %v2687
        %v2896 = vpack.c.b16 %v2690, %v2689
        %v2897 = vpack.c.b16 %v2692, %v2691
        %v2898 = vpack.c.b16 %v2694, %v2693
        %v2899 = vpack.c.b16 %v2696, %v2695
        %v2900 = vpack.c.b16 %v2698, %v2697
        %v2901 = vpack.c.b16 %v2700, %v2699
        %v2902 = vpack.c.b16 %v2702, %v2701
        %v2903 = vpack.c.b16 %v2704, %v2703
        %v2904 = vpack.c.b16 %v2706, %v2705
        %v2905 = vpack.c.b16 %v2708, %v2707
        %v2906 = vpack.c.b16 %v2710, %v2709
        %v2907 = vpack.c.b16 %v2712, %v2711
        %v2908 = vpack.c.b16 %v2714, %v2713
        %v2909 = vpack.c.b16 %v2716, %v2715
        %v2910 = vpack.c.b16 %v2718, %v2717
        %3103 = vst [vmem:[%s246] sm:$0xff] %v2719
        %3104 = vst [vmem:[%s246 + $0x8] sm:$0xff] %v2720
        %3105 = vst [vmem:[%s246 + $0x10] sm:$0xff] %v2721
        %3106 = vst [vmem:[%s246 + $0x18] sm:$0xff] %v2722
        %3107 = vst [vmem:[%s246 + $0x20] sm:$0xff] %v2723
        %3108 = vst [vmem:[%s246 + $0x28] sm:$0xff] %v2724
        %3109 = vst [vmem:[%s246 + $0x30] sm:$0xff] %v2725
        %3110 = vst [vmem:[%s246 + $0x38] sm:$0xff] %v2726
        %3111 = vst [vmem:[%s246 + $0x40] sm:$0xff] %v2727
        %3112 = vst [vmem:[%s246 + $0x48] sm:$0xff] %v2728
        %3113 = vst [vmem:[%s246 + $0x50] sm:$0xff] %v2729
        %3114 = vst [vmem:[%s246 + $0x58] sm:$0xff] %v2730
        %3115 = vst [vmem:[%s246 + $0x60] sm:$0xff] %v2731
        %3116 = vst [vmem:[%s246 + $0x68] sm:$0xff] %v2732
        %3117 = vst [vmem:[%s246 + $0x70] sm:$0xff] %v2733
        %3118 = vst [vmem:[%s246 + $0x78] sm:$0xff] %v2734
        %3119 = vst [vmem:[%s246 + $0x80] sm:$0xff] %v2735
        %3120 = vst [vmem:[%s246 + $0x88] sm:$0xff] %v2736
        %3121 = vst [vmem:[%s246 + $0x90] sm:$0xff] %v2737
        %3122 = vst [vmem:[%s246 + $0x98] sm:$0xff] %v2738
        %3123 = vst [vmem:[%s246 + $0xa0] sm:$0xff] %v2739
        %3124 = vst [vmem:[%s246 + $0xa8] sm:$0xff] %v2740
        %3125 = vst [vmem:[%s246 + $0xb0] sm:$0xff] %v2741
        %3126 = vst [vmem:[%s246 + $0xb8] sm:$0xff] %v2742
        %3127 = vst [vmem:[%s246 + $0xc0] sm:$0xff] %v2743
        %3128 = vst [vmem:[%s246 + $0xc8] sm:$0xff] %v2744
        %3129 = vst [vmem:[%s246 + $0xd0] sm:$0xff] %v2745
        %3130 = vst [vmem:[%s246 + $0xd8] sm:$0xff] %v2746
        %3131 = vst [vmem:[%s246 + $0xe0] sm:$0xff] %v2747
        %3132 = vst [vmem:[%s246 + $0xe8] sm:$0xff] %v2748
        %3133 = vst [vmem:[%s246 + $0xf0] sm:$0xff] %v2749
        %3134 = vst [vmem:[%s246 + $0xf8] sm:$0xff] %v2750
        %3135 = vst [vmem:[%s246 + $0x100] sm:$0xff] %v2751
        %3136 = vst [vmem:[%s246 + $0x108] sm:$0xff] %v2752
        %3137 = vst [vmem:[%s246 + $0x110] sm:$0xff] %v2753
        %3138 = vst [vmem:[%s246 + $0x118] sm:$0xff] %v2754
        %3139 = vst [vmem:[%s246 + $0x120] sm:$0xff] %v2755
        %3140 = vst [vmem:[%s246 + $0x128] sm:$0xff] %v2756
        %3141 = vst [vmem:[%s246 + $0x130] sm:$0xff] %v2757
        %3142 = vst [vmem:[%s246 + $0x138] sm:$0xff] %v2758
        %3143 = vst [vmem:[%s246 + $0x140] sm:$0xff] %v2759
        %3144 = vst [vmem:[%s246 + $0x148] sm:$0xff] %v2760
        %3145 = vst [vmem:[%s246 + $0x150] sm:$0xff] %v2761
        %3146 = vst [vmem:[%s246 + $0x158] sm:$0xff] %v2762
        %3147 = vst [vmem:[%s246 + $0x160] sm:$0xff] %v2763
        %3148 = vst [vmem:[%s246 + $0x168] sm:$0xff] %v2764
        %3149 = vst [vmem:[%s246 + $0x170] sm:$0xff] %v2765
        %3150 = vst [vmem:[%s246 + $0x178] sm:$0xff] %v2766
        %3151 = vst [vmem:[%s246 + $0x180] sm:$0xff] %v2767
        %3152 = vst [vmem:[%s246 + $0x188] sm:$0xff] %v2768
        %3153 = vst [vmem:[%s246 + $0x190] sm:$0xff] %v2769
        %3154 = vst [vmem:[%s246 + $0x198] sm:$0xff] %v2770
        %3155 = vst [vmem:[%s246 + $0x1a0] sm:$0xff] %v2771
        %3156 = vst [vmem:[%s246 + $0x1a8] sm:$0xff] %v2772
        %3157 = vst [vmem:[%s246 + $0x1b0] sm:$0xff] %v2773
        %3158 = vst [vmem:[%s246 + $0x1b8] sm:$0xff] %v2774
        %3159 = vst [vmem:[%s246 + $0x1c0] sm:$0xff] %v2775
        %3160 = vst [vmem:[%s246 + $0x1c8] sm:$0xff] %v2776
        %3161 = vst [vmem:[%s246 + $0x1d0] sm:$0xff] %v2777
        %3162 = vst [vmem:[%s246 + $0x1d8] sm:$0xff] %v2778
        %3163 = vst [vmem:[%s246 + $0x1e0] sm:$0xff] %v2779
        %3164 = vst [vmem:[%s246 + $0x1e8] sm:$0xff] %v2780
        %3165 = vst [vmem:[%s246 + $0x1f0] sm:$0xff] %v2781
        %3166 = vst [vmem:[%s246 + $0x1f8] sm:$0xff] %v2782
        %3167 = vst [vmem:[%s246 + $0x200] sm:$0xff] %v2783
        %3168 = vst [vmem:[%s246 + $0x208] sm:$0xff] %v2784
        %3169 = vst [vmem:[%s246 + $0x210] sm:$0xff] %v2785
        %3170 = vst [vmem:[%s246 + $0x218] sm:$0xff] %v2786
        %3171 = vst [vmem:[%s246 + $0x220] sm:$0xff] %v2787
        %3172 = vst [vmem:[%s246 + $0x228] sm:$0xff] %v2788
        %3173 = vst [vmem:[%s246 + $0x230] sm:$0xff] %v2789
        %3174 = vst [vmem:[%s246 + $0x238] sm:$0xff] %v2790
        %3175 = vst [vmem:[%s246 + $0x240] sm:$0xff] %v2791
        %3176 = vst [vmem:[%s246 + $0x248] sm:$0xff] %v2792
        %3177 = vst [vmem:[%s246 + $0x250] sm:$0xff] %v2793
        %3178 = vst [vmem:[%s246 + $0x258] sm:$0xff] %v2794
        %3179 = vst [vmem:[%s246 + $0x260] sm:$0xff] %v2795
        %3180 = vst [vmem:[%s246 + $0x268] sm:$0xff] %v2796
        %3181 = vst [vmem:[%s246 + $0x270] sm:$0xff] %v2797
        %3182 = vst [vmem:[%s246 + $0x278] sm:$0xff] %v2798
        %3183 = vst [vmem:[%s246 + $0x280] sm:$0xff] %v2799
        %3184 = vst [vmem:[%s246 + $0x288] sm:$0xff] %v2800
        %3185 = vst [vmem:[%s246 + $0x290] sm:$0xff] %v2801
        %3186 = vst [vmem:[%s246 + $0x298] sm:$0xff] %v2802
        %3187 = vst [vmem:[%s246 + $0x2a0] sm:$0xff] %v2803
        %3188 = vst [vmem:[%s246 + $0x2a8] sm:$0xff] %v2804
        %3189 = vst [vmem:[%s246 + $0x2b0] sm:$0xff] %v2805
        %3190 = vst [vmem:[%s246 + $0x2b8] sm:$0xff] %v2806
        %3191 = vst [vmem:[%s246 + $0x2c0] sm:$0xff] %v2807
        %3192 = vst [vmem:[%s246 + $0x2c8] sm:$0xff] %v2808
        %3193 = vst [vmem:[%s246 + $0x2d0] sm:$0xff] %v2809
        %3194 = vst [vmem:[%s246 + $0x2d8] sm:$0xff] %v2810
        %3195 = vst [vmem:[%s246 + $0x2e0] sm:$0xff] %v2811
        %3196 = vst [vmem:[%s246 + $0x2e8] sm:$0xff] %v2812
        %3197 = vst [vmem:[%s246 + $0x2f0] sm:$0xff] %v2813
        %3198 = vst [vmem:[%s246 + $0x2f8] sm:$0xff] %v2814
        %3199 = vst [vmem:[%s246 + $0x300] sm:$0xff] %v2815
        %3200 = vst [vmem:[%s246 + $0x308] sm:$0xff] %v2816
        %3201 = vst [vmem:[%s246 + $0x310] sm:$0xff] %v2817
        %3202 = vst [vmem:[%s246 + $0x318] sm:$0xff] %v2818
        %3203 = vst [vmem:[%s246 + $0x320] sm:$0xff] %v2819
        %3204 = vst [vmem:[%s246 + $0x328] sm:$0xff] %v2820
        %3205 = vst [vmem:[%s246 + $0x330] sm:$0xff] %v2821
        %3206 = vst [vmem:[%s246 + $0x338] sm:$0xff] %v2822
        %3207 = vst [vmem:[%s246 + $0x340] sm:$0xff] %v2823
        %3208 = vst [vmem:[%s246 + $0x348] sm:$0xff] %v2824
        %3209 = vst [vmem:[%s246 + $0x350] sm:$0xff] %v2825
        %3210 = vst [vmem:[%s246 + $0x358] sm:$0xff] %v2826
        %3211 = vst [vmem:[%s246 + $0x360] sm:$0xff] %v2827
        %3212 = vst [vmem:[%s246 + $0x368] sm:$0xff] %v2828
        %3213 = vst [vmem:[%s246 + $0x370] sm:$0xff] %v2829
        %3214 = vst [vmem:[%s246 + $0x378] sm:$0xff] %v2830
        %3215 = vst [vmem:[%s246 + $0x380] sm:$0xff] %v2831
        %3216 = vst [vmem:[%s246 + $0x388] sm:$0xff] %v2832
        %3217 = vst [vmem:[%s246 + $0x390] sm:$0xff] %v2833
        %3218 = vst [vmem:[%s246 + $0x398] sm:$0xff] %v2834
        %3219 = vst [vmem:[%s246 + $0x3a0] sm:$0xff] %v2835
        %3220 = vst [vmem:[%s246 + $0x3a8] sm:$0xff] %v2836
        %3221 = vst [vmem:[%s246 + $0x3b0] sm:$0xff] %v2837
        %3222 = vst [vmem:[%s246 + $0x3b8] sm:$0xff] %v2838
        %3223 = vst [vmem:[%s246 + $0x3c0] sm:$0xff] %v2839
        %3224 = vst [vmem:[%s246 + $0x3c8] sm:$0xff] %v2840
        %3225 = vst [vmem:[%s246 + $0x3d0] sm:$0xff] %v2841
        %3226 = vst [vmem:[%s246 + $0x3d8] sm:$0xff] %v2842
        %3227 = vst [vmem:[%s246 + $0x3e0] sm:$0xff] %v2843
        %3228 = vst [vmem:[%s246 + $0x3e8] sm:$0xff] %v2844
        %3229 = vst [vmem:[%s246 + $0x3f0] sm:$0xff] %v2845
        %3230 = vst [vmem:[%s246 + $0x3f8] sm:$0xff] %v2846
        %3231 = vst [vmem:[%s246 + $0x400] sm:$0xff] %v2847
        %3232 = vst [vmem:[%s246 + $0x408] sm:$0xff] %v2848
        %3233 = vst [vmem:[%s246 + $0x410] sm:$0xff] %v2849
        %3234 = vst [vmem:[%s246 + $0x418] sm:$0xff] %v2850
        %3235 = vst [vmem:[%s246 + $0x420] sm:$0xff] %v2851
        %3236 = vst [vmem:[%s246 + $0x428] sm:$0xff] %v2852
        %3237 = vst [vmem:[%s246 + $0x430] sm:$0xff] %v2853
        %3238 = vst [vmem:[%s246 + $0x438] sm:$0xff] %v2854
        %3239 = vst [vmem:[%s246 + $0x440] sm:$0xff] %v2855
        %3240 = vst [vmem:[%s246 + $0x448] sm:$0xff] %v2856
        %3241 = vst [vmem:[%s246 + $0x450] sm:$0xff] %v2857
        %3242 = vst [vmem:[%s246 + $0x458] sm:$0xff] %v2858
        %3243 = vst [vmem:[%s246 + $0x460] sm:$0xff] %v2859
        %3244 = vst [vmem:[%s246 + $0x468] sm:$0xff] %v2860
        %3245 = vst [vmem:[%s246 + $0x470] sm:$0xff] %v2861
        %3246 = vst [vmem:[%s246 + $0x478] sm:$0xff] %v2862
        %3247 = vst [vmem:[%s246 + $0x480] sm:$0xff] %v2863
        %3248 = vst [vmem:[%s246 + $0x488] sm:$0xff] %v2864
        %3249 = vst [vmem:[%s246 + $0x490] sm:$0xff] %v2865
        %3250 = vst [vmem:[%s246 + $0x498] sm:$0xff] %v2866
        %3251 = vst [vmem:[%s246 + $0x4a0] sm:$0xff] %v2867
        %3252 = vst [vmem:[%s246 + $0x4a8] sm:$0xff] %v2868
        %3253 = vst [vmem:[%s246 + $0x4b0] sm:$0xff] %v2869
        %3254 = vst [vmem:[%s246 + $0x4b8] sm:$0xff] %v2870
        %3255 = vst [vmem:[%s246 + $0x4c0] sm:$0xff] %v2871
        %3256 = vst [vmem:[%s246 + $0x4c8] sm:$0xff] %v2872
        %3257 = vst [vmem:[%s246 + $0x4d0] sm:$0xff] %v2873
        %3258 = vst [vmem:[%s246 + $0x4d8] sm:$0xff] %v2874
        %3259 = vst [vmem:[%s246 + $0x4e0] sm:$0xff] %v2875
        %3260 = vst [vmem:[%s246 + $0x4e8] sm:$0xff] %v2876
        %3261 = vst [vmem:[%s246 + $0x4f0] sm:$0xff] %v2877
        %3262 = vst [vmem:[%s246 + $0x4f8] sm:$0xff] %v2878
        %3263 = vst [vmem:[%s246 + $0x500] sm:$0xff] %v2879
        %3264 = vst [vmem:[%s246 + $0x508] sm:$0xff] %v2880
        %3265 = vst [vmem:[%s246 + $0x510] sm:$0xff] %v2881
        %3266 = vst [vmem:[%s246 + $0x518] sm:$0xff] %v2882
        %3267 = vst [vmem:[%s246 + $0x520] sm:$0xff] %v2883
        %3268 = vst [vmem:[%s246 + $0x528] sm:$0xff] %v2884
        %3269 = vst [vmem:[%s246 + $0x530] sm:$0xff] %v2885
        %3270 = vst [vmem:[%s246 + $0x538] sm:$0xff] %v2886
        %3271 = vst [vmem:[%s246 + $0x540] sm:$0xff] %v2887
        %3272 = vst [vmem:[%s246 + $0x548] sm:$0xff] %v2888
        %3273 = vst [vmem:[%s246 + $0x550] sm:$0xff] %v2889
        %3274 = vst [vmem:[%s246 + $0x558] sm:$0xff] %v2890
        %3275 = vst [vmem:[%s246 + $0x560] sm:$0xff] %v2891
        %3276 = vst [vmem:[%s246 + $0x568] sm:$0xff] %v2892
        %3277 = vst [vmem:[%s246 + $0x570] sm:$0xff] %v2893
        %3278 = vst [vmem:[%s246 + $0x578] sm:$0xff] %v2894
        %3279 = vst [vmem:[%s246 + $0x580] sm:$0xff] %v2895
        %3280 = vst [vmem:[%s246 + $0x588] sm:$0xff] %v2896
        %3281 = vst [vmem:[%s246 + $0x590] sm:$0xff] %v2897
        %3282 = vst [vmem:[%s246 + $0x598] sm:$0xff] %v2898
        %3283 = vst [vmem:[%s246 + $0x5a0] sm:$0xff] %v2899
        %3284 = vst [vmem:[%s246 + $0x5a8] sm:$0xff] %v2900
        %3285 = vst [vmem:[%s246 + $0x5b0] sm:$0xff] %v2901
        %3286 = vst [vmem:[%s246 + $0x5b8] sm:$0xff] %v2902
        %3287 = vst [vmem:[%s246 + $0x5c0] sm:$0xff] %v2903
        %3288 = vst [vmem:[%s246 + $0x5c8] sm:$0xff] %v2904
        %3289 = vst [vmem:[%s246 + $0x5d0] sm:$0xff] %v2905
        %3290 = vst [vmem:[%s246 + $0x5d8] sm:$0xff] %v2906
        %3291 = vst [vmem:[%s246 + $0x5e0] sm:$0xff] %v2907
        %3292 = vst [vmem:[%s246 + $0x5e8] sm:$0xff] %v2908
        %3293 = vst [vmem:[%s246 + $0x5f0] sm:$0xff] %v2909
        %3294 = vst [vmem:[%s246 + $0x5f8] sm:$0xff] %v2910
        %s3295 = sand.u32 %s121, 1
        %s3296 = scalar_lea.sflag [#allocation4], %s3295
        %s3297 = sand.u32 %s121, 1
        %s3298 = smul.addr %s3297, 1536
        %s3299 = scalar_lea.vmem [#allocation8], %s3298
        // Predicated region
        $region45: #{tpu_custom_call.1} parent=31 // pred_check
          %p3300 = pneg %p131
        $region46: #{tpu_custom_call.1} parent=31 // pred_check_branch
          %3302 = sbr.rel (%p3300) target = $region48
        $region47: #{tpu_custom_call.1} parent=31 // pred_region
          %s3303 = smul.u32 64, %s25
          %s3304 = smul.u32 6, %s26
          %s3306 = ssub.s32 24576, 24576
          %3307 = vsyncadd %s3296, %s3306
          %s3308 = smul.addr %s3303, 6
          %s3309 = sadd.s32 %s3304, %s3308
          %s3310 = smul.addr %s3309, 64
          %s3311 = scalar_lea.hbm %s3, %s3310
          %s3312 = sshll.u32 %s3299, 4
          %s3313 = int_to_ptr.vmem [resolvable:$true] %s3312
          %3318 = dma.vmem_to_hbm [thread:$0]  %s3313, 24576, %s3311, %s3296, 384, 384, 24
        $region48: #{tpu_custom_call.1} parent=31 // pred_fallthru
          _
      $region32: #{tpu_custom_call.1} parent=5 // pred_fallthru
        _
      %p3319 = scmp.le.s32.totalorder 2, %s16
      // Predicated region
      $region49: #{tpu_custom_call.1} parent=5 // pred_check
        %p3320 = pneg %p3319
      $region50: #{tpu_custom_call.1} parent=5 // pred_check_branch
        %3322 = sbr.rel (%p3320) target = $region52
      $region51: #{tpu_custom_call.1} parent=5 // pred_region
        %s3323 = ssub.s32 %s16, 2
        // Predicated region
        $region53: #{tpu_custom_call.1} parent=51 // pred_check
          %p3324 = pneg %p137
        $region54: #{tpu_custom_call.1} parent=51 // pred_check_branch
          %3326 = sbr.rel (%p3324) target = $region56
        $region55: #{tpu_custom_call.1} parent=51 // pred_region
          %s3327 = sand.u32 %s122, 1
          %s3328 = scalar_lea.sflag [#allocation4], %s3327
          %s3329 = sand.u32 %s122, 1
          %s3330 = smul.addr %s3329, 1536
          %s3331 = scalar_lea.vmem [#allocation8], %s3330
          %3332 = dma.done %s3328, 24576
        $region56: #{tpu_custom_call.1} parent=51 // pred_fallthru
          _
      $region52: #{tpu_custom_call.1} parent=5 // pred_fallthru
        _
    $region6: #{tpu_custom_call.1} parent=1 // loop_footer
      %s20 = sadd.s32 1, %s16
    $region7: #{tpu_custom_call.1} parent=1 // loop_footer_branch
      %15 = sbr.rel target = $region3
    $region8: #{tpu_custom_call.1} parent=1 // loop_exit
      _
    %3333 = vsyncpa [#allocation3], 1
    %s3334 = scalar_lea.sflag [#allocation3], 1
    %3335 = vsyncpa %s3334, 1
    %3336 = vsyncpa [#allocation6], 1
    %3337 = vsyncpa [#allocation4], 1
    %s3338 = scalar_lea.sflag [#allocation4], 1
    %3339 = vsyncpa %s3338, 1

</llo_original>
